<compile_context>
chip_gen: v6e
topology: v6e:2x2x1
jax: 0.10.0
libtpu: 0.0.40
codegen_flags: <defaults>
</compile_context>

<pallas_src>
import functools
import math

import jax
import jax.numpy as jnp
from jax.experimental import pallas as pl
from jax.experimental.pallas import tpu as pltpu


# -----------------------------------------------------------------------------
# Model hyper-parameters (small, but a legal instantiation of the torch module):
#   CPCNet(input_channels=3, z_dim=32, enc_blocks=5, kernel_sizes=[8,4,2,1,1],
#          strides=[4,2,1,1,1], agg_blocks=4, pred_steps=3, n_negatives=3, offset=4)
# -----------------------------------------------------------------------------
INPUT_CHANNELS = 3
Z_DIM = 32
ENC_BLOCKS = 5
ENC_KERNELS = [8, 4, 2, 1, 1]
ENC_STRIDES = [4, 2, 1, 1, 1]
ENC_FILTERS = [32, 64, 128, 256, Z_DIM]   # same hard-coded progression as Encoder
AGG_BLOCKS = 4
AGG_KERNELS = [2, 3, 4, 5, 6, 7]          # num_filters != 512 branch
PRED_STEPS = 3
N_NEGATIVES = 3
OFFSET = 4
RESIDUAL_SCALE = math.sqrt(0.5)
GN_EPS = 1e-5
MXU_DTYPE = jnp.bfloat16                  # MXU operand dtype; accumulation is f32


# -----------------------------------------------------------------------------
# Pallas kernels
# -----------------------------------------------------------------------------
def _fused_forward_kernel(*refs, enc_cfg, agg_ks, res_scale, eps):
    """Encoder + aggregator + predictor for one batch element, fully in VMEM."""
    n_enc = len(enc_cfg)
    n_agg = len(agg_ks)
    x_ref = refs[0]                                   # (L, Cin) f32 (batch dim squeezed)
    enc_refs = refs[1:1 + 2 * n_enc]
    agg_refs = refs[1 + 2 * n_enc:1 + 2 * n_enc + 4 * n_agg]
    wp_ref = refs[1 + 2 * n_enc + 4 * n_agg]
    bp_ref = refs[2 + 2 * n_enc + 4 * n_agg]
    out_ref = refs[-2]                                # (T, C + S*C) lane-dense slab
    h_scr = refs[-1]                                  # VMEM scratch for the stride-2 layer

    # ---- Encoder: ONE (lout, k*Cin) x (k*Cin, Cout) MXU matmul per layer ----
    # Polyphase: only the lout needed rows are ever produced (strided pl.ds taps).
    h = None
    for li, (k, stride, lout) in enumerate(enc_cfg):
        w_ref = enc_refs[2 * li]                      # (k*Cin, Cout) bf16
        b_ref = enc_refs[2 * li + 1]                  # (1, Cout) f32
        if li == 0:
            # strided taps straight from the input ref (stride folded into the load)
            taps = [x_ref[pl.ds(j, lout, stride=stride), :] for j in range(k)]
        elif stride > 1:
            # intermediate activation: stage in VMEM scratch, then strided loads
            h_scr[...] = h
            taps = [h_scr[pl.ds(j, lout, stride=stride), :] for j in range(k)]
        else:
            taps = [h[j:j + lout, :] for j in range(k)]
        patch = taps[0] if k == 1 else jnp.concatenate(taps, axis=1)  # (lout, k*Cin)
        acc = jnp.dot(patch.astype(MXU_DTYPE), w_ref[...],
                      preferred_element_type=jnp.float32)
        h = jnp.maximum(acc + b_ref[...], 0.0)
        # TODO(synk): F.dropout(p=0.2, training=True) is stochastic; identity here.

    t_len, c = h.shape
    z_enc = h                                         # encoder features (T, Z), f32

    # ---- Aggregator: LeftZeroPad1d + causal conv + GroupNorm + ReLU + residual ----
    zz = h
    for bi, k in enumerate(agg_ks):
        w_ref = agg_refs[4 * bi]                      # (k*C, C) bf16
        b_ref = agg_refs[4 * bi + 1]                  # (1, C)
        g_ref = agg_refs[4 * bi + 2]                  # (1, C) gamma
        be_ref = agg_refs[4 * bi + 3]                 # (1, C) beta
        residual = zz
        if k == 1:
            patch = zz
        else:
            # LeftZeroPad1d(k-1): plain sublane concat == F.pad(x, [k-1, 0], 'constant', 0)
            zpad = jnp.concatenate(
                [jnp.zeros((k - 1, c), jnp.float32), zz], axis=0)     # (T+k-1, C)
            # Fused causal conv: lane-concat of the k shifted views, one matmul.
            patch = jnp.concatenate([zpad[j:j + t_len, :] for j in range(k)],
                                    axis=1)                           # (T, k*C)
        conv = jnp.dot(patch.astype(MXU_DTYPE), w_ref[...],
                       preferred_element_type=jnp.float32) + b_ref[...]
        # GroupNorm(num_groups=1): stats over all (T, C) elements, biased variance.
        mean = jnp.mean(conv, keepdims=True)
        var = jnp.mean((conv - mean) ** 2, keepdims=True)
        zn = (conv - mean) * jax.lax.rsqrt(var + eps)
        zn = zn * g_ref[...] + be_ref[...]
        zn = jnp.maximum(zn, 0.0)
        zz = (zn + residual) * res_scale

    # ---- Predictor: ConvTranspose2d(z, z, (1, S)) as one matmul ----
    zp = jnp.dot(zz.astype(MXU_DTYPE), wp_ref[...],
                 preferred_element_type=jnp.float32) + bp_ref[...]    # (T, S*C)

    # Lane-dense 128-wide slab: cols [0:C) = encoder features, [C:C+S*C) = predictor.
    out_ref[...] = jnp.concatenate([z_enc, zp], axis=1).astype(out_ref.dtype)


def _score_kernel(zp_ref, tg_ref, o_ref, *, offset, steps):
    """All CPC scoring steps: scores[i,n,b,t] = sum_c zp[b,t,i,c] * tg[n,b,t+i+off,c]."""
    o_ref[...] = jnp.zeros(o_ref.shape, o_ref.dtype)  # zero once; valid regions overwrite
    zp = zp_ref[...]                                  # (B, T, S, C) f32
    tg = tg_ref[...]                                  # (copies, B, T, C) f32
    t_len = tg.shape[2]
    for i in range(steps):
        off = i + offset
        tv = t_len - off
        zp_i = zp[:, :tv, i, :]                       # (B, tv, C)
        tg_i = tg[:, :, off:, :]                      # (copies, B, tv, C)
        s = jnp.sum(zp_i[None] * tg_i, axis=-1)       # lane-axis contraction
        o_ref[i, :, :, :tv] = s                       # write only the valid region


def _replicated_spec(shape):
    zeros = (0,) * len(shape)
    return pl.BlockSpec(shape, lambda b: zeros)


# -----------------------------------------------------------------------------
# Parameters (deterministic init, mirroring the torch __init__ shapes)
# -----------------------------------------------------------------------------
def kaiming_normal(key, shape):
    fan_in = shape[1] * math.prod(shape[2:])     # torch kaiming_normal_ default
    std = math.sqrt(2.0 / fan_in)
    return std * jax.random.normal(key, shape, dtype=jnp.float32)


def init_params(key):
    params = {"enc": [], "agg": [], "pred": None}
    in_ch = INPUT_CHANNELS
    for i in range(ENC_BLOCKS):
        key, sub = jax.random.split(key)
        w = kaiming_normal(sub, (ENC_FILTERS[i], in_ch, ENC_KERNELS[i]))
        b = jnp.zeros((ENC_FILTERS[i],), jnp.float32)
        params["enc"].append((w, b))
        in_ch = ENC_FILTERS[i]
    for i in range(AGG_BLOCKS):
        key, sub = jax.random.split(key)
        w = kaiming_normal(sub, (Z_DIM, Z_DIM, AGG_KERNELS[i]))
        b = jnp.zeros((Z_DIM,), jnp.float32)
        gamma = jnp.ones((Z_DIM,), jnp.float32)
        beta = jnp.zeros((Z_DIM,), jnp.float32)
        params["agg"].append((w, b, gamma, beta))
    key, sub = jax.random.split(key)
    wp = kaiming_normal(sub, (Z_DIM, Z_DIM, 1, PRED_STEPS))   # ConvTranspose2d weight
    bp = jnp.zeros((Z_DIM,), jnp.float32)
    params["pred"] = (wp, bp)
    return params


# -----------------------------------------------------------------------------
# Negative sampling (random cross-batch gather: stays as cheap XLA glue)
# -----------------------------------------------------------------------------
def sample_negatives(key, z_btc, n_negatives):
    bsz, tsz, fsz = z_btc.shape
    cross_high = tsz * bsz
    y = z_btc.reshape(bsz * tsz, fsz)                       # flat index = b*tsz + t
    tszs = jnp.repeat(jnp.arange(tsz), n_negatives)
    idxs = jax.random.randint(key, (bsz, n_negatives * tsz), 0, cross_high - 1)
    # skip-the-positive bump: positive's flat index is t + b*tsz
    pos = tszs[None, :] + jnp.arange(bsz)[:, None] * tsz
    idxs = idxs + (idxs >= pos).astype(idxs.dtype)
    negs = y[idxs.reshape(-1)]                              # (bsz*tsz*n_neg, fsz)
    negs = negs.reshape(bsz, tsz, n_negatives, fsz)
    return jnp.transpose(negs, (2, 0, 1, 3))                # (n_neg, B, T, C)


# -----------------------------------------------------------------------------
# CPCNet forward: 2 pallas_calls total
# -----------------------------------------------------------------------------
def cpc_forward(params, x, neg_key):
    B, cin, L = x.shape
    enc_cfg = []
    lin = L
    for k, s in zip(ENC_KERNELS, ENC_STRIDES):
        lout = (lin - k) // s + 1
        enc_cfg.append((k, s, lout))
        lin = lout
    T = lin
    C = Z_DIM
    S = PRED_STEPS
    agg_ks = tuple(AGG_KERNELS[:AGG_BLOCKS])

    # Exactly one intermediate (non-input) strided layer in this config -> one scratch.
    scr_layers = [i for i in range(1, len(enc_cfg)) if enc_cfg[i][1] > 1]
    assert len(scr_layers) == 1, "kernel assumes exactly one intermediate strided layer"
    sli = scr_layers[0]
    scr_shape = (enc_cfg[sli - 1][2], ENC_FILTERS[sli - 1])

    # One-time operand packing: time-major input, (k*Cin, Cout) bf16 fused-tap weights,
    # f32 biases / affine params.
    inputs = [jnp.transpose(x, (0, 2, 1)).astype(jnp.float32)]        # (B, L, Cin)
    in_specs = [pl.BlockSpec((None, L, cin), lambda b: (b, 0, 0))]

    def add_replicated(arr):
        inputs.append(arr)
        in_specs.append(_replicated_spec(arr.shape))

    for w, bvec in params["enc"]:
        cout, cin_w, k = w.shape
        # (Cout, Cin, k) -> (k, Cin, Cout) -> (k*Cin, Cout); row j*Cin+ci matches the
        # in-kernel lane-concat patch column ordering.
        add_replicated(jnp.transpose(w, (2, 1, 0))
                       .reshape(k * cin_w, cout).astype(MXU_DTYPE))
        add_replicated(bvec.reshape(1, -1).astype(jnp.float32))
    for w, bvec, gamma, beta in params["agg"]:
        cout, cin_w, k = w.shape
        add_replicated(jnp.transpose(w, (2, 1, 0))
                       .reshape(k * cin_w, cout).astype(MXU_DTYPE))
        add_replicated(bvec.reshape(1, -1).astype(jnp.float32))
        add_replicated(gamma.reshape(1, -1).astype(jnp.float32))
        add_replicated(beta.reshape(1, -1).astype(jnp.float32))
    wp, bp = params["pred"]
    # Predictor weight packed so output column = s*C + co -> step slices are contiguous.
    add_replicated(jnp.transpose(wp[:, :, 0, :], (0, 2, 1))
                   .reshape(C, S * C).astype(MXU_DTYPE))
    add_replicated(jnp.tile(bp, S).reshape(1, S * C).astype(jnp.float32))

    # Single lane-dense output slab (C + S*C = 128 lanes -> unmasked stores).
    slab = pl.pallas_call(
        functools.partial(_fused_forward_kernel, enc_cfg=tuple(enc_cfg),
                          agg_ks=agg_ks, res_scale=RESIDUAL_SCALE, eps=GN_EPS),
        out_shape=jax.ShapeDtypeStruct((B, T, C + S * C), jnp.float32),
        grid=(B,),
        in_specs=in_specs,
        out_specs=pl.BlockSpec((None, T, C + S * C), lambda b: (b, 0, 0)),
        scratch_shapes=[pltpu.VMEM(scr_shape, jnp.float32)],
        compiler_params=pltpu.CompilerParams(
            dimension_semantics=("parallel",)),     # batch shards across v7x's 2 TCs
    )(*inputs)

    z_enc = slab[:, :, :C]                                            # (B, T, C)
    z_pred = slab[:, :, C:]                                           # (B, T, S*C)

    # ---- Targets: positive + sampled negatives ----
    negs = sample_negatives(neg_key, z_enc, N_NEGATIVES)              # (n_neg, B, T, C)
    targets = jnp.concatenate([z_enc[None], negs], axis=0)            # (copies, B, T, C)
    copies = targets.shape[0]
    steps = min(S, T - OFFSET)

    # ---- CPC scoring: all steps in a single kernel ----
    zp4 = z_pred.reshape(B, T, S, C)                                  # col s*C+c -> (s, c)
    scores = pl.pallas_call(
        functools.partial(_score_kernel, offset=OFFSET, steps=steps),
        out_shape=jax.ShapeDtypeStruct((steps, copies, B, T), jnp.float32),
        grid=(1,),
        in_specs=[_replicated_spec(zp4.shape), _replicated_spec(targets.shape)],
        out_specs=_replicated_spec((steps, copies, B, T)),
        compiler_params=pltpu.CompilerParams(dimension_semantics=("arbitrary",)),
    )(zp4, targets)

    # ragged reassembly (tiny glue), same row order as the torch reference: (step, t, b)
    pieces = []
    for i in range(steps):
        tv = T - (i + OFFSET)
        pieces.append(jnp.transpose(scores[i, :, :, :tv], (2, 1, 0)).reshape(-1, copies))
    predictions = jnp.concatenate(pieces, axis=0)                     # temp = 1
    labels = jnp.zeros((predictions.shape[0],), dtype=jnp.int32)
    return predictions, labels


# -----------------------------------------------------------------------------
if __name__ == "__main__":
    key = jax.random.PRNGKey(0)
    pkey, xkey, nkey = jax.random.split(key, 3)
    params = init_params(pkey)

    B, L = 2, 128
    x = jax.random.normal(xkey, (B, INPUT_CHANNELS, L), dtype=jnp.float32)

    fwd = jax.jit(cpc_forward)
    predictions, labels = fwd(params, x, nkey)
    predictions = jax.block_until_ready(predictions)
    labels = jax.block_until_ready(labels)

    # shape sanity checks implied by the torch forward
    lin = L
    for k, s in zip(ENC_KERNELS, ENC_STRIDES):
        lin = (lin - k) // s + 1
    T = lin                                              # 13 for L=128
    copies = 1 + N_NEGATIVES
    steps = min(PRED_STEPS, T - OFFSET)
    expected_rows = B * sum(T - OFFSET - i for i in range(steps))
    assert predictions.shape == (expected_rows, copies), predictions.shape
    assert labels.shape == (expected_rows,), labels.shape
    assert bool(jnp.all(jnp.isfinite(predictions)))

    print("KERNEL_OK")
</pallas_src>

<mosaic_0001>
module attributes {stable_mosaic.version = 11 : i64} {
  func.func @_fused_forward_kernel(%arg0: i32, %arg1: memref<1x128x3xf32, #tpu.memory_space<vmem>>, %arg2: memref<24x32xbf16, #tpu.memory_space<vmem>>, %arg3: memref<1x32xf32, #tpu.memory_space<vmem>>, %arg4: memref<128x64xbf16, #tpu.memory_space<vmem>>, %arg5: memref<1x64xf32, #tpu.memory_space<vmem>>, %arg6: memref<128x128xbf16, #tpu.memory_space<vmem>>, %arg7: memref<1x128xf32, #tpu.memory_space<vmem>>, %arg8: memref<128x256xbf16, #tpu.memory_space<vmem>>, %arg9: memref<1x256xf32, #tpu.memory_space<vmem>>, %arg10: memref<256x32xbf16, #tpu.memory_space<vmem>>, %arg11: memref<1x32xf32, #tpu.memory_space<vmem>>, %arg12: memref<64x32xbf16, #tpu.memory_space<vmem>>, %arg13: memref<1x32xf32, #tpu.memory_space<vmem>>, %arg14: memref<1x32xf32, #tpu.memory_space<vmem>>, %arg15: memref<1x32xf32, #tpu.memory_space<vmem>>, %arg16: memref<96x32xbf16, #tpu.memory_space<vmem>>, %arg17: memref<1x32xf32, #tpu.memory_space<vmem>>, %arg18: memref<1x32xf32, #tpu.memory_space<vmem>>, %arg19: memref<1x32xf32, #tpu.memory_space<vmem>>, %arg20: memref<128x32xbf16, #tpu.memory_space<vmem>>, %arg21: memref<1x32xf32, #tpu.memory_space<vmem>>, %arg22: memref<1x32xf32, #tpu.memory_space<vmem>>, %arg23: memref<1x32xf32, #tpu.memory_space<vmem>>, %arg24: memref<160x32xbf16, #tpu.memory_space<vmem>>, %arg25: memref<1x32xf32, #tpu.memory_space<vmem>>, %arg26: memref<1x32xf32, #tpu.memory_space<vmem>>, %arg27: memref<1x32xf32, #tpu.memory_space<vmem>>, %arg28: memref<32x96xbf16, #tpu.memory_space<vmem>>, %arg29: memref<1x96xf32, #tpu.memory_space<vmem>>, %arg30: memref<1x13x128xf32, #tpu.memory_space<vmem>>, %arg31: memref<31x32xf32, #tpu.memory_space<vmem>>) attributes {dimension_semantics = [#tpu.dimension_semantics<parallel>], iteration_bounds = array<i64: 2>, scalar_prefetch = 0 : i64, scratch_operands = 1 : i64, tpu.core_type = #tpu.core_type<tc>, window_params = [{transform_indices = @transform_0, window_bounds = array<i64: 1, 128, 3>}, {pipeline_mode = #tpu.pipeline_mode<synchronous>, transform_indices = @transform_1, window_bounds = array<i64: 24, 32>}, {pipeline_mode = #tpu.pipeline_mode<synchronous>, transform_indices = @transform_2, window_bounds = array<i64: 1, 32>}, {pipeline_mode = #tpu.pipeline_mode<synchronous>, transform_indices = @transform_3, window_bounds = array<i64: 128, 64>}, {pipeline_mode = #tpu.pipeline_mode<synchronous>, transform_indices = @transform_4, window_bounds = array<i64: 1, 64>}, {pipeline_mode = #tpu.pipeline_mode<synchronous>, transform_indices = @transform_5, window_bounds = array<i64: 128, 128>}, {pipeline_mode = #tpu.pipeline_mode<synchronous>, transform_indices = @transform_6, window_bounds = array<i64: 1, 128>}, {pipeline_mode = #tpu.pipeline_mode<synchronous>, transform_indices = @transform_7, window_bounds = array<i64: 128, 256>}, {pipeline_mode = #tpu.pipeline_mode<synchronous>, transform_indices = @transform_8, window_bounds = array<i64: 1, 256>}, {pipeline_mode = #tpu.pipeline_mode<synchronous>, transform_indices = @transform_9, window_bounds = array<i64: 256, 32>}, {pipeline_mode = #tpu.pipeline_mode<synchronous>, transform_indices = @transform_10, window_bounds = array<i64: 1, 32>}, {pipeline_mode = #tpu.pipeline_mode<synchronous>, transform_indices = @transform_11, window_bounds = array<i64: 64, 32>}, {pipeline_mode = #tpu.pipeline_mode<synchronous>, transform_indices = @transform_12, window_bounds = array<i64: 1, 32>}, {pipeline_mode = #tpu.pipeline_mode<synchronous>, transform_indices = @transform_13, window_bounds = array<i64: 1, 32>}, {pipeline_mode = #tpu.pipeline_mode<synchronous>, transform_indices = @transform_14, window_bounds = array<i64: 1, 32>}, {pipeline_mode = #tpu.pipeline_mode<synchronous>, transform_indices = @transform_15, window_bounds = array<i64: 96, 32>}, {pipeline_mode = #tpu.pipeline_mode<synchronous>, transform_indices = @transform_16, window_bounds = array<i64: 1, 32>}, {pipeline_mode = #tpu.pipeline_mode<synchronous>, transform_indices = @transform_17, window_bounds = array<i64: 1, 32>}, {pipeline_mode = #tpu.pipeline_mode<synchronous>, transform_indices = @transform_18, window_bounds = array<i64: 1, 32>}, {pipeline_mode = #tpu.pipeline_mode<synchronous>, transform_indices = @transform_19, window_bounds = array<i64: 128, 32>}, {pipeline_mode = #tpu.pipeline_mode<synchronous>, transform_indices = @transform_20, window_bounds = array<i64: 1, 32>}, {pipeline_mode = #tpu.pipeline_mode<synchronous>, transform_indices = @transform_21, window_bounds = array<i64: 1, 32>}, {pipeline_mode = #tpu.pipeline_mode<synchronous>, transform_indices = @transform_22, window_bounds = array<i64: 1, 32>}, {pipeline_mode = #tpu.pipeline_mode<synchronous>, transform_indices = @transform_23, window_bounds = array<i64: 160, 32>}, {pipeline_mode = #tpu.pipeline_mode<synchronous>, transform_indices = @transform_24, window_bounds = array<i64: 1, 32>}, {pipeline_mode = #tpu.pipeline_mode<synchronous>, transform_indices = @transform_25, window_bounds = array<i64: 1, 32>}, {pipeline_mode = #tpu.pipeline_mode<synchronous>, transform_indices = @transform_26, window_bounds = array<i64: 1, 32>}, {pipeline_mode = #tpu.pipeline_mode<synchronous>, transform_indices = @transform_27, window_bounds = array<i64: 32, 96>}, {pipeline_mode = #tpu.pipeline_mode<synchronous>, transform_indices = @transform_28, window_bounds = array<i64: 1, 96>}, {transform_indices = @transform_29, window_bounds = array<i64: 1, 13, 128>}]} {
    %c0 = arith.constant 0 : index
    %c0_0 = arith.constant 0 : index
    %c0_1 = arith.constant 0 : index
    %0 = tpu.strided_load %arg1[%c0, %c0_0, %c0_1] {strides = array<i32: 1, 4, 1>} : memref<1x128x3xf32, #tpu.memory_space<vmem>>, vector<1x31x3xf32>
    %1 = vector.shape_cast %0 : vector<1x31x3xf32> to vector<31x3xf32>
    %c0_2 = arith.constant 0 : index
    %c1 = arith.constant 1 : index
    %c0_3 = arith.constant 0 : index
    %2 = tpu.strided_load %arg1[%c0_2, %c1, %c0_3] {strides = array<i32: 1, 4, 1>} : memref<1x128x3xf32, #tpu.memory_space<vmem>>, vector<1x31x3xf32>
    %3 = vector.shape_cast %2 : vector<1x31x3xf32> to vector<31x3xf32>
    %c0_4 = arith.constant 0 : index
    %c2 = arith.constant 2 : index
    %c0_5 = arith.constant 0 : index
    %4 = tpu.strided_load %arg1[%c0_4, %c2, %c0_5] {strides = array<i32: 1, 4, 1>} : memref<1x128x3xf32, #tpu.memory_space<vmem>>, vector<1x31x3xf32>
    %5 = vector.shape_cast %4 : vector<1x31x3xf32> to vector<31x3xf32>
    %c0_6 = arith.constant 0 : index
    %c3 = arith.constant 3 : index
    %c0_7 = arith.constant 0 : index
    %6 = tpu.strided_load %arg1[%c0_6, %c3, %c0_7] {strides = array<i32: 1, 4, 1>} : memref<1x128x3xf32, #tpu.memory_space<vmem>>, vector<1x31x3xf32>
    %7 = vector.shape_cast %6 : vector<1x31x3xf32> to vector<31x3xf32>
    %c0_8 = arith.constant 0 : index
    %c4 = arith.constant 4 : index
    %c0_9 = arith.constant 0 : index
    %8 = tpu.strided_load %arg1[%c0_8, %c4, %c0_9] {strides = array<i32: 1, 4, 1>} : memref<1x128x3xf32, #tpu.memory_space<vmem>>, vector<1x31x3xf32>
    %9 = vector.shape_cast %8 : vector<1x31x3xf32> to vector<31x3xf32>
    %c0_10 = arith.constant 0 : index
    %c5 = arith.constant 5 : index
    %c0_11 = arith.constant 0 : index
    %10 = tpu.strided_load %arg1[%c0_10, %c5, %c0_11] {strides = array<i32: 1, 4, 1>} : memref<1x128x3xf32, #tpu.memory_space<vmem>>, vector<1x31x3xf32>
    %11 = vector.shape_cast %10 : vector<1x31x3xf32> to vector<31x3xf32>
    %c0_12 = arith.constant 0 : index
    %c6 = arith.constant 6 : index
    %c0_13 = arith.constant 0 : index
    %12 = tpu.strided_load %arg1[%c0_12, %c6, %c0_13] {strides = array<i32: 1, 4, 1>} : memref<1x128x3xf32, #tpu.memory_space<vmem>>, vector<1x31x3xf32>
    %13 = vector.shape_cast %12 : vector<1x31x3xf32> to vector<31x3xf32>
    %c0_14 = arith.constant 0 : index
    %c7 = arith.constant 7 : index
    %c0_15 = arith.constant 0 : index
    %14 = tpu.strided_load %arg1[%c0_14, %c7, %c0_15] {strides = array<i32: 1, 4, 1>} : memref<1x128x3xf32, #tpu.memory_space<vmem>>, vector<1x31x3xf32>
    %15 = vector.shape_cast %14 : vector<1x31x3xf32> to vector<31x3xf32>
    %16 = tpu.concatenate %1, %3, %5, %7, %9, %11, %13, %15 in 1 : vector<31x3xf32>, vector<31x3xf32>, vector<31x3xf32>, vector<31x3xf32>, vector<31x3xf32>, vector<31x3xf32>, vector<31x3xf32>, vector<31x3xf32> -> vector<31x24xf32>
    %17 = arith.truncf %16 : vector<31x24xf32> to vector<31x24xbf16>
    %c0_16 = arith.constant 0 : index
    %c0_17 = arith.constant 0 : index
    %18 = vector.load %arg2[%c0_16, %c0_17] : memref<24x32xbf16, #tpu.memory_space<vmem>>, vector<24x32xbf16>
    %cst = arith.constant dense<0.000000e+00> : vector<31x32xf32>
    %19 = tpu.matmul %17, %18, %cst {dimension_numbers = #tpu.dot_dimension_numbers<[1], [0], [0], [1], [0, 0, 1, 1], [], []>} : vector<31x24xbf16>, vector<24x32xbf16>, vector<31x32xf32> -> vector<31x32xf32>
    %c0_18 = arith.constant 0 : index
    %c0_19 = arith.constant 0 : index
    %20 = vector.load %arg3[%c0_18, %c0_19] : memref<1x32xf32, #tpu.memory_space<vmem>>, vector<1x32xf32>
    %21 = vector.broadcast %20 : vector<1x32xf32> to vector<31x32xf32>
    %22 = arith.addf %19, %21 : vector<31x32xf32>
    %cst_20 = arith.constant 0.000000e+00 : f32
    %23 = vector.broadcast %cst_20 : f32 to vector<31x32xf32>
    %24 = arith.maximumf %22, %23 : vector<31x32xf32>
    %c0_21 = arith.constant 0 : index
    %c0_22 = arith.constant 0 : index
    %25 = vector.load %arg31[%c0_21, %c0_22] : memref<31x32xf32, #tpu.memory_space<vmem>>, vector<31x32xf32>
    tpu.vector_store %arg31[%c0_21, %c0_22], %24 {strides = array<i32>} : memref<31x32xf32, #tpu.memory_space<vmem>>, vector<31x32xf32>,
    %c0_23 = arith.constant 0 : index
    %c0_24 = arith.constant 0 : index
    %26 = tpu.strided_load %arg31[%c0_23, %c0_24] {strides = array<i32: 2, 1>} : memref<31x32xf32, #tpu.memory_space<vmem>>, vector<14x32xf32>
    %c1_25 = arith.constant 1 : index
    %c0_26 = arith.constant 0 : index
    %27 = tpu.strided_load %arg31[%c1_25, %c0_26] {strides = array<i32: 2, 1>} : memref<31x32xf32, #tpu.memory_space<vmem>>, vector<14x32xf32>
    %c2_27 = arith.constant 2 : index
    %c0_28 = arith.constant 0 : index
    %28 = tpu.strided_load %arg31[%c2_27, %c0_28] {strides = array<i32: 2, 1>} : memref<31x32xf32, #tpu.memory_space<vmem>>, vector<14x32xf32>
    %c3_29 = arith.constant 3 : index
    %c0_30 = arith.constant 0 : index
    %29 = tpu.strided_load %arg31[%c3_29, %c0_30] {strides = array<i32: 2, 1>} : memref<31x32xf32, #tpu.memory_space<vmem>>, vector<14x32xf32>
    %30 = tpu.concatenate %26, %27, %28, %29 in 1 : vector<14x32xf32>, vector<14x32xf32>, vector<14x32xf32>, vector<14x32xf32> -> vector<14x128xf32>
    %31 = arith.truncf %30 : vector<14x128xf32> to vector<14x128xbf16>
    %c0_31 = arith.constant 0 : index
    %c0_32 = arith.constant 0 : index
    %32 = vector.load %arg4[%c0_31, %c0_32] : memref<128x64xbf16, #tpu.memory_space<vmem>>, vector<128x64xbf16>
    %cst_33 = arith.constant dense<0.000000e+00> : vector<14x64xf32>
    %33 = tpu.matmul %31, %32, %cst_33 {dimension_numbers = #tpu.dot_dimension_numbers<[1], [0], [0], [1], [0, 0, 1, 1], [], []>} : vector<14x128xbf16>, vector<128x64xbf16>, vector<14x64xf32> -> vector<14x64xf32>
    %c0_34 = arith.constant 0 : index
    %c0_35 = arith.constant 0 : index
    %34 = vector.load %arg5[%c0_34, %c0_35] : memref<1x64xf32, #tpu.memory_space<vmem>>, vector<1x64xf32>
    %35 = vector.broadcast %34 : vector<1x64xf32> to vector<14x64xf32>
    %36 = arith.addf %33, %35 : vector<14x64xf32>
    %cst_36 = arith.constant 0.000000e+00 : f32
    %37 = vector.broadcast %cst_36 : f32 to vector<14x64xf32>
    %38 = arith.maximumf %36, %37 : vector<14x64xf32>
    %39 = vector.extract_strided_slice %38 {offsets = [0, 0], sizes = [13, 64], strides = [1, 1]} : vector<14x64xf32> to vector<13x64xf32>
    %40 = vector.extract_strided_slice %38 {offsets = [1, 0], sizes = [13, 64], strides = [1, 1]} : vector<14x64xf32> to vector<13x64xf32>
    %41 = tpu.concatenate %39, %40 in 1 : vector<13x64xf32>, vector<13x64xf32> -> vector<13x128xf32>
    %42 = arith.truncf %41 : vector<13x128xf32> to vector<13x128xbf16>
    %c0_37 = arith.constant 0 : index
    %c0_38 = arith.constant 0 : index
    %43 = vector.load %arg6[%c0_37, %c0_38] : memref<128x128xbf16, #tpu.memory_space<vmem>>, vector<128x128xbf16>
    %cst_39 = arith.constant dense<0.000000e+00> : vector<13x128xf32>
    %44 = tpu.matmul %42, %43, %cst_39 {dimension_numbers = #tpu.dot_dimension_numbers<[1], [0], [0], [1], [0, 0, 1, 1], [], []>} : vector<13x128xbf16>, vector<128x128xbf16>, vector<13x128xf32> -> vector<13x128xf32>
    %c0_40 = arith.constant 0 : index
    %c0_41 = arith.constant 0 : index
    %45 = vector.load %arg7[%c0_40, %c0_41] : memref<1x128xf32, #tpu.memory_space<vmem>>, vector<1x128xf32>
    %46 = vector.broadcast %45 : vector<1x128xf32> to vector<13x128xf32>
    %47 = arith.addf %44, %46 : vector<13x128xf32>
    %cst_42 = arith.constant 0.000000e+00 : f32
    %48 = vector.broadcast %cst_42 : f32 to vector<13x128xf32>
    %49 = arith.maximumf %47, %48 : vector<13x128xf32>
    %50 = arith.truncf %49 : vector<13x128xf32> to vector<13x128xbf16>
    %c0_43 = arith.constant 0 : index
    %c0_44 = arith.constant 0 : index
    %51 = vector.load %arg8[%c0_43, %c0_44] : memref<128x256xbf16, #tpu.memory_space<vmem>>, vector<128x256xbf16>
    %cst_45 = arith.constant dense<0.000000e+00> : vector<13x256xf32>
    %52 = tpu.matmul %50, %51, %cst_45 {dimension_numbers = #tpu.dot_dimension_numbers<[1], [0], [0], [1], [0, 0, 1, 1], [], []>} : vector<13x128xbf16>, vector<128x256xbf16>, vector<13x256xf32> -> vector<13x256xf32>
    %c0_46 = arith.constant 0 : index
    %c0_47 = arith.constant 0 : index
    %53 = vector.load %arg9[%c0_46, %c0_47] : memref<1x256xf32, #tpu.memory_space<vmem>>, vector<1x256xf32>
    %54 = vector.broadcast %53 : vector<1x256xf32> to vector<13x256xf32>
    %55 = arith.addf %52, %54 : vector<13x256xf32>
    %cst_48 = arith.constant 0.000000e+00 : f32
    %56 = vector.broadcast %cst_48 : f32 to vector<13x256xf32>
    %57 = arith.maximumf %55, %56 : vector<13x256xf32>
    %58 = arith.truncf %57 : vector<13x256xf32> to vector<13x256xbf16>
    %c0_49 = arith.constant 0 : index
    %c0_50 = arith.constant 0 : index
    %59 = vector.load %arg10[%c0_49, %c0_50] : memref<256x32xbf16, #tpu.memory_space<vmem>>, vector<256x32xbf16>
    %cst_51 = arith.constant dense<0.000000e+00> : vector<13x32xf32>
    %60 = tpu.matmul %58, %59, %cst_51 {dimension_numbers = #tpu.dot_dimension_numbers<[1], [0], [0], [1], [0, 0, 1, 1], [], []>} : vector<13x256xbf16>, vector<256x32xbf16>, vector<13x32xf32> -> vector<13x32xf32>
    %c0_52 = arith.constant 0 : index
    %c0_53 = arith.constant 0 : index
    %61 = vector.load %arg11[%c0_52, %c0_53] : memref<1x32xf32, #tpu.memory_space<vmem>>, vector<1x32xf32>
    %62 = vector.broadcast %61 : vector<1x32xf32> to vector<13x32xf32>
    %63 = arith.addf %60, %62 : vector<13x32xf32>
    %cst_54 = arith.constant 0.000000e+00 : f32
    %64 = vector.broadcast %cst_54 : f32 to vector<13x32xf32>
    %65 = arith.maximumf %63, %64 : vector<13x32xf32>
    %cst_55 = arith.constant 0.000000e+00 : f32
    %66 = vector.broadcast %cst_55 : f32 to vector<1x32xf32>
    %67 = tpu.concatenate %66, %65 in 0 : vector<1x32xf32>, vector<13x32xf32> -> vector<14x32xf32>
    %68 = vector.extract_strided_slice %67 {offsets = [0, 0], sizes = [13, 32], strides = [1, 1]} : vector<14x32xf32> to vector<13x32xf32>
    %69 = vector.extract_strided_slice %67 {offsets = [1, 0], sizes = [13, 32], strides = [1, 1]} : vector<14x32xf32> to vector<13x32xf32>
    %70 = tpu.concatenate %68, %69 in 1 : vector<13x32xf32>, vector<13x32xf32> -> vector<13x64xf32>
    %71 = arith.truncf %70 : vector<13x64xf32> to vector<13x64xbf16>
    %c0_56 = arith.constant 0 : index
    %c0_57 = arith.constant 0 : index
    %72 = vector.load %arg12[%c0_56, %c0_57] : memref<64x32xbf16, #tpu.memory_space<vmem>>, vector<64x32xbf16>
    %cst_58 = arith.constant dense<0.000000e+00> : vector<13x32xf32>
    %73 = tpu.matmul %71, %72, %cst_58 {dimension_numbers = #tpu.dot_dimension_numbers<[1], [0], [0], [1], [0, 0, 1, 1], [], []>} : vector<13x64xbf16>, vector<64x32xbf16>, vector<13x32xf32> -> vector<13x32xf32>
    %c0_59 = arith.constant 0 : index
    %c0_60 = arith.constant 0 : index
    %74 = vector.load %arg13[%c0_59, %c0_60] : memref<1x32xf32, #tpu.memory_space<vmem>>, vector<1x32xf32>
    %75 = vector.broadcast %74 : vector<1x32xf32> to vector<13x32xf32>
    %76 = arith.addf %73, %75 : vector<13x32xf32>
    %77 = vector.shape_cast %76 : vector<13x32xf32> to vector<1x13x32xf32>
    %cst_61 = arith.constant dense<0.000000e+00> : vector<1xf32>
    %78 = vector.multi_reduction <add>, %77, %cst_61 [1, 2] : vector<1x13x32xf32> to vector<1xf32>
    %79 = vector.shape_cast %78 : vector<1xf32> to vector<1x1x1xf32>
    %80 = vector.extract %79[0, 0, 0] : f32 from vector<1x1x1xf32>
    %81 = vector.broadcast %80 : f32 to vector<1x1xf32>
    %cst_62 = arith.constant 4.160000e+02 : f32
    %82 = vector.broadcast %cst_62 : f32 to vector<1x1xf32>
    %83 = arith.divf %81, %82 : vector<1x1xf32>
    %84 = vector.broadcast %83 : vector<1x1xf32> to vector<13x32xf32>
    %85 = arith.subf %76, %84 : vector<13x32xf32>
    %86 = arith.mulf %85, %85 : vector<13x32xf32>
    %87 = vector.shape_cast %86 : vector<13x32xf32> to vector<1x13x32xf32>
    %cst_63 = arith.constant dense<0.000000e+00> : vector<1xf32>
    %88 = vector.multi_reduction <add>, %87, %cst_63 [1, 2] : vector<1x13x32xf32> to vector<1xf32>
    %89 = vector.shape_cast %88 : vector<1xf32> to vector<1x1x1xf32>
    %90 = vector.extract %89[0, 0, 0] : f32 from vector<1x1x1xf32>
    %91 = vector.broadcast %90 : f32 to vector<1x1xf32>
    %cst_64 = arith.constant 4.160000e+02 : f32
    %92 = vector.broadcast %cst_64 : f32 to vector<1x1xf32>
    %93 = arith.divf %91, %92 : vector<1x1xf32>
    %94 = vector.broadcast %83 : vector<1x1xf32> to vector<13x32xf32>
    %95 = arith.subf %76, %94 : vector<13x32xf32>
    %cst_65 = arith.constant 9.99999974E-6 : f32
    %96 = vector.broadcast %cst_65 : f32 to vector<1x1xf32>
    %97 = arith.addf %93, %96 : vector<1x1xf32>
    %98 = math.rsqrt %97 : vector<1x1xf32>
    %99 = vector.broadcast %98 : vector<1x1xf32> to vector<13x32xf32>
    %100 = arith.mulf %95, %99 : vector<13x32xf32>
    %c0_66 = arith.constant 0 : index
    %c0_67 = arith.constant 0 : index
    %101 = vector.load %arg14[%c0_66, %c0_67] : memref<1x32xf32, #tpu.memory_space<vmem>>, vector<1x32xf32>
    %102 = vector.broadcast %101 : vector<1x32xf32> to vector<13x32xf32>
    %103 = arith.mulf %100, %102 : vector<13x32xf32>
    %c0_68 = arith.constant 0 : index
    %c0_69 = arith.constant 0 : index
    %104 = vector.load %arg15[%c0_68, %c0_69] : memref<1x32xf32, #tpu.memory_space<vmem>>, vector<1x32xf32>
    %105 = vector.broadcast %104 : vector<1x32xf32> to vector<13x32xf32>
    %106 = arith.addf %103, %105 : vector<13x32xf32>
    %cst_70 = arith.constant 0.000000e+00 : f32
    %107 = vector.broadcast %cst_70 : f32 to vector<13x32xf32>
    %108 = arith.maximumf %106, %107 : vector<13x32xf32>
    %109 = arith.addf %108, %65 : vector<13x32xf32>
    %cst_71 = arith.constant 0.707106769 : f32
    %110 = vector.broadcast %cst_71 : f32 to vector<13x32xf32>
    %111 = arith.mulf %109, %110 : vector<13x32xf32>
    %cst_72 = arith.constant 0.000000e+00 : f32
    %112 = vector.broadcast %cst_72 : f32 to vector<2x32xf32>
    %113 = tpu.concatenate %112, %111 in 0 : vector<2x32xf32>, vector<13x32xf32> -> vector<15x32xf32>
    %114 = vector.extract_strided_slice %113 {offsets = [0, 0], sizes = [13, 32], strides = [1, 1]} : vector<15x32xf32> to vector<13x32xf32>
    %115 = vector.extract_strided_slice %113 {offsets = [1, 0], sizes = [13, 32], strides = [1, 1]} : vector<15x32xf32> to vector<13x32xf32>
    %116 = vector.extract_strided_slice %113 {offsets = [2, 0], sizes = [13, 32], strides = [1, 1]} : vector<15x32xf32> to vector<13x32xf32>
    %117 = tpu.concatenate %114, %115, %116 in 1 : vector<13x32xf32>, vector<13x32xf32>, vector<13x32xf32> -> vector<13x96xf32>
    %118 = arith.truncf %117 : vector<13x96xf32> to vector<13x96xbf16>
    %c0_73 = arith.constant 0 : index
    %c0_74 = arith.constant 0 : index
    %119 = vector.load %arg16[%c0_73, %c0_74] : memref<96x32xbf16, #tpu.memory_space<vmem>>, vector<96x32xbf16>
    %cst_75 = arith.constant dense<0.000000e+00> : vector<13x32xf32>
    %120 = tpu.matmul %118, %119, %cst_75 {dimension_numbers = #tpu.dot_dimension_numbers<[1], [0], [0], [1], [0, 0, 1, 1], [], []>} : vector<13x96xbf16>, vector<96x32xbf16>, vector<13x32xf32> -> vector<13x32xf32>
    %c0_76 = arith.constant 0 : index
    %c0_77 = arith.constant 0 : index
    %121 = vector.load %arg17[%c0_76, %c0_77] : memref<1x32xf32, #tpu.memory_space<vmem>>, vector<1x32xf32>
    %122 = vector.broadcast %121 : vector<1x32xf32> to vector<13x32xf32>
    %123 = arith.addf %120, %122 : vector<13x32xf32>
    %124 = vector.shape_cast %123 : vector<13x32xf32> to vector<1x13x32xf32>
    %cst_78 = arith.constant dense<0.000000e+00> : vector<1xf32>
    %125 = vector.multi_reduction <add>, %124, %cst_78 [1, 2] : vector<1x13x32xf32> to vector<1xf32>
    %126 = vector.shape_cast %125 : vector<1xf32> to vector<1x1x1xf32>
    %127 = vector.extract %126[0, 0, 0] : f32 from vector<1x1x1xf32>
    %128 = vector.broadcast %127 : f32 to vector<1x1xf32>
    %cst_79 = arith.constant 4.160000e+02 : f32
    %129 = vector.broadcast %cst_79 : f32 to vector<1x1xf32>
    %130 = arith.divf %128, %129 : vector<1x1xf32>
    %131 = vector.broadcast %130 : vector<1x1xf32> to vector<13x32xf32>
    %132 = arith.subf %123, %131 : vector<13x32xf32>
    %133 = arith.mulf %132, %132 : vector<13x32xf32>
    %134 = vector.shape_cast %133 : vector<13x32xf32> to vector<1x13x32xf32>
    %cst_80 = arith.constant dense<0.000000e+00> : vector<1xf32>
    %135 = vector.multi_reduction <add>, %134, %cst_80 [1, 2] : vector<1x13x32xf32> to vector<1xf32>
    %136 = vector.shape_cast %135 : vector<1xf32> to vector<1x1x1xf32>
    %137 = vector.extract %136[0, 0, 0] : f32 from vector<1x1x1xf32>
    %138 = vector.broadcast %137 : f32 to vector<1x1xf32>
    %cst_81 = arith.constant 4.160000e+02 : f32
    %139 = vector.broadcast %cst_81 : f32 to vector<1x1xf32>
    %140 = arith.divf %138, %139 : vector<1x1xf32>
    %141 = vector.broadcast %130 : vector<1x1xf32> to vector<13x32xf32>
    %142 = arith.subf %123, %141 : vector<13x32xf32>
    %cst_82 = arith.constant 9.99999974E-6 : f32
    %143 = vector.broadcast %cst_82 : f32 to vector<1x1xf32>
    %144 = arith.addf %140, %143 : vector<1x1xf32>
    %145 = math.rsqrt %144 : vector<1x1xf32>
    %146 = vector.broadcast %145 : vector<1x1xf32> to vector<13x32xf32>
    %147 = arith.mulf %142, %146 : vector<13x32xf32>
    %c0_83 = arith.constant 0 : index
    %c0_84 = arith.constant 0 : index
    %148 = vector.load %arg18[%c0_83, %c0_84] : memref<1x32xf32, #tpu.memory_space<vmem>>, vector<1x32xf32>
    %149 = vector.broadcast %148 : vector<1x32xf32> to vector<13x32xf32>
    %150 = arith.mulf %147, %149 : vector<13x32xf32>
    %c0_85 = arith.constant 0 : index
    %c0_86 = arith.constant 0 : index
    %151 = vector.load %arg19[%c0_85, %c0_86] : memref<1x32xf32, #tpu.memory_space<vmem>>, vector<1x32xf32>
    %152 = vector.broadcast %151 : vector<1x32xf32> to vector<13x32xf32>
    %153 = arith.addf %150, %152 : vector<13x32xf32>
    %cst_87 = arith.constant 0.000000e+00 : f32
    %154 = vector.broadcast %cst_87 : f32 to vector<13x32xf32>
    %155 = arith.maximumf %153, %154 : vector<13x32xf32>
    %156 = arith.addf %155, %111 : vector<13x32xf32>
    %cst_88 = arith.constant 0.707106769 : f32
    %157 = vector.broadcast %cst_88 : f32 to vector<13x32xf32>
    %158 = arith.mulf %156, %157 : vector<13x32xf32>
    %cst_89 = arith.constant 0.000000e+00 : f32
    %159 = vector.broadcast %cst_89 : f32 to vector<3x32xf32>
    %160 = tpu.concatenate %159, %158 in 0 : vector<3x32xf32>, vector<13x32xf32> -> vector<16x32xf32>
    %161 = vector.extract_strided_slice %160 {offsets = [0, 0], sizes = [13, 32], strides = [1, 1]} : vector<16x32xf32> to vector<13x32xf32>
    %162 = vector.extract_strided_slice %160 {offsets = [1, 0], sizes = [13, 32], strides = [1, 1]} : vector<16x32xf32> to vector<13x32xf32>
    %163 = vector.extract_strided_slice %160 {offsets = [2, 0], sizes = [13, 32], strides = [1, 1]} : vector<16x32xf32> to vector<13x32xf32>
    %164 = vector.extract_strided_slice %160 {offsets = [3, 0], sizes = [13, 32], strides = [1, 1]} : vector<16x32xf32> to vector<13x32xf32>
    %165 = tpu.concatenate %161, %162, %163, %164 in 1 : vector<13x32xf32>, vector<13x32xf32>, vector<13x32xf32>, vector<13x32xf32> -> vector<13x128xf32>
    %166 = arith.truncf %165 : vector<13x128xf32> to vector<13x128xbf16>
    %c0_90 = arith.constant 0 : index
    %c0_91 = arith.constant 0 : index
    %167 = vector.load %arg20[%c0_90, %c0_91] : memref<128x32xbf16, #tpu.memory_space<vmem>>, vector<128x32xbf16>
    %cst_92 = arith.constant dense<0.000000e+00> : vector<13x32xf32>
    %168 = tpu.matmul %166, %167, %cst_92 {dimension_numbers = #tpu.dot_dimension_numbers<[1], [0], [0], [1], [0, 0, 1, 1], [], []>} : vector<13x128xbf16>, vector<128x32xbf16>, vector<13x32xf32> -> vector<13x32xf32>
    %c0_93 = arith.constant 0 : index
    %c0_94 = arith.constant 0 : index
    %169 = vector.load %arg21[%c0_93, %c0_94] : memref<1x32xf32, #tpu.memory_space<vmem>>, vector<1x32xf32>
    %170 = vector.broadcast %169 : vector<1x32xf32> to vector<13x32xf32>
    %171 = arith.addf %168, %170 : vector<13x32xf32>
    %172 = vector.shape_cast %171 : vector<13x32xf32> to vector<1x13x32xf32>
    %cst_95 = arith.constant dense<0.000000e+00> : vector<1xf32>
    %173 = vector.multi_reduction <add>, %172, %cst_95 [1, 2] : vector<1x13x32xf32> to vector<1xf32>
    %174 = vector.shape_cast %173 : vector<1xf32> to vector<1x1x1xf32>
    %175 = vector.extract %174[0, 0, 0] : f32 from vector<1x1x1xf32>
    %176 = vector.broadcast %175 : f32 to vector<1x1xf32>
    %cst_96 = arith.constant 4.160000e+02 : f32
    %177 = vector.broadcast %cst_96 : f32 to vector<1x1xf32>
    %178 = arith.divf %176, %177 : vector<1x1xf32>
    %179 = vector.broadcast %178 : vector<1x1xf32> to vector<13x32xf32>
    %180 = arith.subf %171, %179 : vector<13x32xf32>
    %181 = arith.mulf %180, %180 : vector<13x32xf32>
    %182 = vector.shape_cast %181 : vector<13x32xf32> to vector<1x13x32xf32>
    %cst_97 = arith.constant dense<0.000000e+00> : vector<1xf32>
    %183 = vector.multi_reduction <add>, %182, %cst_97 [1, 2] : vector<1x13x32xf32> to vector<1xf32>
    %184 = vector.shape_cast %183 : vector<1xf32> to vector<1x1x1xf32>
    %185 = vector.extract %184[0, 0, 0] : f32 from vector<1x1x1xf32>
    %186 = vector.broadcast %185 : f32 to vector<1x1xf32>
    %cst_98 = arith.constant 4.160000e+02 : f32
    %187 = vector.broadcast %cst_98 : f32 to vector<1x1xf32>
    %188 = arith.divf %186, %187 : vector<1x1xf32>
    %189 = vector.broadcast %178 : vector<1x1xf32> to vector<13x32xf32>
    %190 = arith.subf %171, %189 : vector<13x32xf32>
    %cst_99 = arith.constant 9.99999974E-6 : f32
    %191 = vector.broadcast %cst_99 : f32 to vector<1x1xf32>
    %192 = arith.addf %188, %191 : vector<1x1xf32>
    %193 = math.rsqrt %192 : vector<1x1xf32>
    %194 = vector.broadcast %193 : vector<1x1xf32> to vector<13x32xf32>
    %195 = arith.mulf %190, %194 : vector<13x32xf32>
    %c0_100 = arith.constant 0 : index
    %c0_101 = arith.constant 0 : index
    %196 = vector.load %arg22[%c0_100, %c0_101] : memref<1x32xf32, #tpu.memory_space<vmem>>, vector<1x32xf32>
    %197 = vector.broadcast %196 : vector<1x32xf32> to vector<13x32xf32>
    %198 = arith.mulf %195, %197 : vector<13x32xf32>
    %c0_102 = arith.constant 0 : index
    %c0_103 = arith.constant 0 : index
    %199 = vector.load %arg23[%c0_102, %c0_103] : memref<1x32xf32, #tpu.memory_space<vmem>>, vector<1x32xf32>
    %200 = vector.broadcast %199 : vector<1x32xf32> to vector<13x32xf32>
    %201 = arith.addf %198, %200 : vector<13x32xf32>
    %cst_104 = arith.constant 0.000000e+00 : f32
    %202 = vector.broadcast %cst_104 : f32 to vector<13x32xf32>
    %203 = arith.maximumf %201, %202 : vector<13x32xf32>
    %204 = arith.addf %203, %158 : vector<13x32xf32>
    %cst_105 = arith.constant 0.707106769 : f32
    %205 = vector.broadcast %cst_105 : f32 to vector<13x32xf32>
    %206 = arith.mulf %204, %205 : vector<13x32xf32>
    %cst_106 = arith.constant 0.000000e+00 : f32
    %207 = vector.broadcast %cst_106 : f32 to vector<4x32xf32>
    %208 = tpu.concatenate %207, %206 in 0 : vector<4x32xf32>, vector<13x32xf32> -> vector<17x32xf32>
    %209 = vector.extract_strided_slice %208 {offsets = [0, 0], sizes = [13, 32], strides = [1, 1]} : vector<17x32xf32> to vector<13x32xf32>
    %210 = vector.extract_strided_slice %208 {offsets = [1, 0], sizes = [13, 32], strides = [1, 1]} : vector<17x32xf32> to vector<13x32xf32>
    %211 = vector.extract_strided_slice %208 {offsets = [2, 0], sizes = [13, 32], strides = [1, 1]} : vector<17x32xf32> to vector<13x32xf32>
    %212 = vector.extract_strided_slice %208 {offsets = [3, 0], sizes = [13, 32], strides = [1, 1]} : vector<17x32xf32> to vector<13x32xf32>
    %213 = vector.extract_strided_slice %208 {offsets = [4, 0], sizes = [13, 32], strides = [1, 1]} : vector<17x32xf32> to vector<13x32xf32>
    %214 = tpu.concatenate %209, %210, %211, %212, %213 in 1 : vector<13x32xf32>, vector<13x32xf32>, vector<13x32xf32>, vector<13x32xf32>, vector<13x32xf32> -> vector<13x160xf32>
    %215 = arith.truncf %214 : vector<13x160xf32> to vector<13x160xbf16>
    %c0_107 = arith.constant 0 : index
    %c0_108 = arith.constant 0 : index
    %216 = vector.load %arg24[%c0_107, %c0_108] : memref<160x32xbf16, #tpu.memory_space<vmem>>, vector<160x32xbf16>
    %cst_109 = arith.constant dense<0.000000e+00> : vector<13x32xf32>
    %217 = tpu.matmul %215, %216, %cst_109 {dimension_numbers = #tpu.dot_dimension_numbers<[1], [0], [0], [1], [0, 0, 1, 1], [], []>} : vector<13x160xbf16>, vector<160x32xbf16>, vector<13x32xf32> -> vector<13x32xf32>
    %c0_110 = arith.constant 0 : index
    %c0_111 = arith.constant 0 : index
    %218 = vector.load %arg25[%c0_110, %c0_111] : memref<1x32xf32, #tpu.memory_space<vmem>>, vector<1x32xf32>
    %219 = vector.broadcast %218 : vector<1x32xf32> to vector<13x32xf32>
    %220 = arith.addf %217, %219 : vector<13x32xf32>
    %221 = vector.shape_cast %220 : vector<13x32xf32> to vector<1x13x32xf32>
    %cst_112 = arith.constant dense<0.000000e+00> : vector<1xf32>
    %222 = vector.multi_reduction <add>, %221, %cst_112 [1, 2] : vector<1x13x32xf32> to vector<1xf32>
    %223 = vector.shape_cast %222 : vector<1xf32> to vector<1x1x1xf32>
    %224 = vector.extract %223[0, 0, 0] : f32 from vector<1x1x1xf32>
    %225 = vector.broadcast %224 : f32 to vector<1x1xf32>
    %cst_113 = arith.constant 4.160000e+02 : f32
    %226 = vector.broadcast %cst_113 : f32 to vector<1x1xf32>
    %227 = arith.divf %225, %226 : vector<1x1xf32>
    %228 = vector.broadcast %227 : vector<1x1xf32> to vector<13x32xf32>
    %229 = arith.subf %220, %228 : vector<13x32xf32>
    %230 = arith.mulf %229, %229 : vector<13x32xf32>
    %231 = vector.shape_cast %230 : vector<13x32xf32> to vector<1x13x32xf32>
    %cst_114 = arith.constant dense<0.000000e+00> : vector<1xf32>
    %232 = vector.multi_reduction <add>, %231, %cst_114 [1, 2] : vector<1x13x32xf32> to vector<1xf32>
    %233 = vector.shape_cast %232 : vector<1xf32> to vector<1x1x1xf32>
    %234 = vector.extract %233[0, 0, 0] : f32 from vector<1x1x1xf32>
    %235 = vector.broadcast %234 : f32 to vector<1x1xf32>
    %cst_115 = arith.constant 4.160000e+02 : f32
    %236 = vector.broadcast %cst_115 : f32 to vector<1x1xf32>
    %237 = arith.divf %235, %236 : vector<1x1xf32>
    %238 = vector.broadcast %227 : vector<1x1xf32> to vector<13x32xf32>
    %239 = arith.subf %220, %238 : vector<13x32xf32>
    %cst_116 = arith.constant 9.99999974E-6 : f32
    %240 = vector.broadcast %cst_116 : f32 to vector<1x1xf32>
    %241 = arith.addf %237, %240 : vector<1x1xf32>
    %242 = math.rsqrt %241 : vector<1x1xf32>
    %243 = vector.broadcast %242 : vector<1x1xf32> to vector<13x32xf32>
    %244 = arith.mulf %239, %243 : vector<13x32xf32>
    %c0_117 = arith.constant 0 : index
    %c0_118 = arith.constant 0 : index
    %245 = vector.load %arg26[%c0_117, %c0_118] : memref<1x32xf32, #tpu.memory_space<vmem>>, vector<1x32xf32>
    %246 = vector.broadcast %245 : vector<1x32xf32> to vector<13x32xf32>
    %247 = arith.mulf %244, %246 : vector<13x32xf32>
    %c0_119 = arith.constant 0 : index
    %c0_120 = arith.constant 0 : index
    %248 = vector.load %arg27[%c0_119, %c0_120] : memref<1x32xf32, #tpu.memory_space<vmem>>, vector<1x32xf32>
    %249 = vector.broadcast %248 : vector<1x32xf32> to vector<13x32xf32>
    %250 = arith.addf %247, %249 : vector<13x32xf32>
    %cst_121 = arith.constant 0.000000e+00 : f32
    %251 = vector.broadcast %cst_121 : f32 to vector<13x32xf32>
    %252 = arith.maximumf %250, %251 : vector<13x32xf32>
    %253 = arith.addf %252, %206 : vector<13x32xf32>
    %cst_122 = arith.constant 0.707106769 : f32
    %254 = vector.broadcast %cst_122 : f32 to vector<13x32xf32>
    %255 = arith.mulf %253, %254 : vector<13x32xf32>
    %256 = arith.truncf %255 : vector<13x32xf32> to vector<13x32xbf16>
    %c0_123 = arith.constant 0 : index
    %c0_124 = arith.constant 0 : index
    %257 = vector.load %arg28[%c0_123, %c0_124] : memref<32x96xbf16, #tpu.memory_space<vmem>>, vector<32x96xbf16>
    %cst_125 = arith.constant dense<0.000000e+00> : vector<13x96xf32>
    %258 = tpu.matmul %256, %257, %cst_125 {dimension_numbers = #tpu.dot_dimension_numbers<[1], [0], [0], [1], [0, 0, 1, 1], [], []>} : vector<13x32xbf16>, vector<32x96xbf16>, vector<13x96xf32> -> vector<13x96xf32>
    %c0_126 = arith.constant 0 : index
    %c0_127 = arith.constant 0 : index
    %259 = vector.load %arg29[%c0_126, %c0_127] : memref<1x96xf32, #tpu.memory_space<vmem>>, vector<1x96xf32>
    %260 = vector.broadcast %259 : vector<1x96xf32> to vector<13x96xf32>
    %261 = arith.addf %258, %260 : vector<13x96xf32>
    %262 = tpu.concatenate %65, %261 in 1 : vector<13x32xf32>, vector<13x96xf32> -> vector<13x128xf32>
    %c0_128 = arith.constant 0 : index
    %c0_129 = arith.constant 0 : index
    %c0_130 = arith.constant 0 : index
    %263 = vector.load %arg30[%c0_128, %c0_129, %c0_130] : memref<1x13x128xf32, #tpu.memory_space<vmem>>, vector<1x13x128xf32>
    %264 = vector.shape_cast %263 : vector<1x13x128xf32> to vector<13x128xf32>
    %265 = vector.shape_cast %262 : vector<13x128xf32> to vector<1x13x128xf32>
    tpu.vector_store %arg30[%c0_128, %c0_129, %c0_130], %265 {strides = array<i32>} : memref<1x13x128xf32, #tpu.memory_space<vmem>>, vector<1x13x128xf32>,
    return
  }
  func.func @transform_0(%arg0: i32) -> (i32, i32, i32) {
    %c0_i32 = arith.constant 0 : i32
    %c0_i32_0 = arith.constant 0 : i32
    %c0_i32_1 = arith.constant 0 : i32
    return %arg0, %c0_i32, %c0_i32_0 : i32, i32, i32
  }
  func.func @transform_1(%arg0: i32) -> (i32, i32) {
    %c0_i32 = arith.constant 0 : i32
    %c0_i32_0 = arith.constant 0 : i32
    %c0_i32_1 = arith.constant 0 : i32
    return %c0_i32, %c0_i32_0 : i32, i32
  }
  func.func @transform_2(%arg0: i32) -> (i32, i32) {
    %c0_i32 = arith.constant 0 : i32
    %c0_i32_0 = arith.constant 0 : i32
    %c0_i32_1 = arith.constant 0 : i32
    return %c0_i32, %c0_i32_0 : i32, i32
  }
  func.func @transform_3(%arg0: i32) -> (i32, i32) {
    %c0_i32 = arith.constant 0 : i32
    %c0_i32_0 = arith.constant 0 : i32
    %c0_i32_1 = arith.constant 0 : i32
    return %c0_i32, %c0_i32_0 : i32, i32
  }
  func.func @transform_4(%arg0: i32) -> (i32, i32) {
    %c0_i32 = arith.constant 0 : i32
    %c0_i32_0 = arith.constant 0 : i32
    %c0_i32_1 = arith.constant 0 : i32
    return %c0_i32, %c0_i32_0 : i32, i32
  }
  func.func @transform_5(%arg0: i32) -> (i32, i32) {
    %c0_i32 = arith.constant 0 : i32
    %c0_i32_0 = arith.constant 0 : i32
    %c0_i32_1 = arith.constant 0 : i32
    return %c0_i32, %c0_i32_0 : i32, i32
  }
  func.func @transform_6(%arg0: i32) -> (i32, i32) {
    %c0_i32 = arith.constant 0 : i32
    %c0_i32_0 = arith.constant 0 : i32
    %c0_i32_1 = arith.constant 0 : i32
    return %c0_i32, %c0_i32_0 : i32, i32
  }
  func.func @transform_7(%arg0: i32) -> (i32, i32) {
    %c0_i32 = arith.constant 0 : i32
    %c0_i32_0 = arith.constant 0 : i32
    %c0_i32_1 = arith.constant 0 : i32
    return %c0_i32, %c0_i32_0 : i32, i32
  }
  func.func @transform_8(%arg0: i32) -> (i32, i32) {
    %c0_i32 = arith.constant 0 : i32
    %c0_i32_0 = arith.constant 0 : i32
    %c0_i32_1 = arith.constant 0 : i32
    return %c0_i32, %c0_i32_0 : i32, i32
  }
  func.func @transform_9(%arg0: i32) -> (i32, i32) {
    %c0_i32 = arith.constant 0 : i32
    %c0_i32_0 = arith.constant 0 : i32
    %c0_i32_1 = arith.constant 0 : i32
    return %c0_i32, %c0_i32_0 : i32, i32
  }
  func.func @transform_10(%arg0: i32) -> (i32, i32) {
    %c0_i32 = arith.constant 0 : i32
    %c0_i32_0 = arith.constant 0 : i32
    %c0_i32_1 = arith.constant 0 : i32
    return %c0_i32, %c0_i32_0 : i32, i32
  }
  func.func @transform_11(%arg0: i32) -> (i32, i32) {
    %c0_i32 = arith.constant 0 : i32
    %c0_i32_0 = arith.constant 0 : i32
    %c0_i32_1 = arith.constant 0 : i32
    return %c0_i32, %c0_i32_0 : i32, i32
  }
  func.func @transform_12(%arg0: i32) -> (i32, i32) {
    %c0_i32 = arith.constant 0 : i32
    %c0_i32_0 = arith.constant 0 : i32
    %c0_i32_1 = arith.constant 0 : i32
    return %c0_i32, %c0_i32_0 : i32, i32
  }
  func.func @transform_13(%arg0: i32) -> (i32, i32) {
    %c0_i32 = arith.constant 0 : i32
    %c0_i32_0 = arith.constant 0 : i32
    %c0_i32_1 = arith.constant 0 : i32
    return %c0_i32, %c0_i32_0 : i32, i32
  }
  func.func @transform_14(%arg0: i32) -> (i32, i32) {
    %c0_i32 = arith.constant 0 : i32
    %c0_i32_0 = arith.constant 0 : i32
    %c0_i32_1 = arith.constant 0 : i32
    return %c0_i32, %c0_i32_0 : i32, i32
  }
  func.func @transform_15(%arg0: i32) -> (i32, i32) {
    %c0_i32 = arith.constant 0 : i32
    %c0_i32_0 = arith.constant 0 : i32
    %c0_i32_1 = arith.constant 0 : i32
    return %c0_i32, %c0_i32_0 : i32, i32
  }
  func.func @transform_16(%arg0: i32) -> (i32, i32) {
    %c0_i32 = arith.constant 0 : i32
    %c0_i32_0 = arith.constant 0 : i32
    %c0_i32_1 = arith.constant 0 : i32
    return %c0_i32, %c0_i32_0 : i32, i32
  }
  func.func @transform_17(%arg0: i32) -> (i32, i32) {
    %c0_i32 = arith.constant 0 : i32
    %c0_i32_0 = arith.constant 0 : i32
    %c0_i32_1 = arith.constant 0 : i32
    return %c0_i32, %c0_i32_0 : i32, i32
  }
  func.func @transform_18(%arg0: i32) -> (i32, i32) {
    %c0_i32 = arith.constant 0 : i32
    %c0_i32_0 = arith.constant 0 : i32
    %c0_i32_1 = arith.constant 0 : i32
    return %c0_i32, %c0_i32_0 : i32, i32
  }
  func.func @transform_19(%arg0: i32) -> (i32, i32) {
    %c0_i32 = arith.constant 0 : i32
    %c0_i32_0 = arith.constant 0 : i32
    %c0_i32_1 = arith.constant 0 : i32
    return %c0_i32, %c0_i32_0 : i32, i32
  }
  func.func @transform_20(%arg0: i32) -> (i32, i32) {
    %c0_i32 = arith.constant 0 : i32
    %c0_i32_0 = arith.constant 0 : i32
    %c0_i32_1 = arith.constant 0 : i32
    return %c0_i32, %c0_i32_0 : i32, i32
  }
  func.func @transform_21(%arg0: i32) -> (i32, i32) {
    %c0_i32 = arith.constant 0 : i32
    %c0_i32_0 = arith.constant 0 : i32
    %c0_i32_1 = arith.constant 0 : i32
    return %c0_i32, %c0_i32_0 : i32, i32
  }
  func.func @transform_22(%arg0: i32) -> (i32, i32) {
    %c0_i32 = arith.constant 0 : i32
    %c0_i32_0 = arith.constant 0 : i32
    %c0_i32_1 = arith.constant 0 : i32
    return %c0_i32, %c0_i32_0 : i32, i32
  }
  func.func @transform_23(%arg0: i32) -> (i32, i32) {
    %c0_i32 = arith.constant 0 : i32
    %c0_i32_0 = arith.constant 0 : i32
    %c0_i32_1 = arith.constant 0 : i32
    return %c0_i32, %c0_i32_0 : i32, i32
  }
  func.func @transform_24(%arg0: i32) -> (i32, i32) {
    %c0_i32 = arith.constant 0 : i32
    %c0_i32_0 = arith.constant 0 : i32
    %c0_i32_1 = arith.constant 0 : i32
    return %c0_i32, %c0_i32_0 : i32, i32
  }
  func.func @transform_25(%arg0: i32) -> (i32, i32) {
    %c0_i32 = arith.constant 0 : i32
    %c0_i32_0 = arith.constant 0 : i32
    %c0_i32_1 = arith.constant 0 : i32
    return %c0_i32, %c0_i32_0 : i32, i32
  }
  func.func @transform_26(%arg0: i32) -> (i32, i32) {
    %c0_i32 = arith.constant 0 : i32
    %c0_i32_0 = arith.constant 0 : i32
    %c0_i32_1 = arith.constant 0 : i32
    return %c0_i32, %c0_i32_0 : i32, i32
  }
  func.func @transform_27(%arg0: i32) -> (i32, i32) {
    %c0_i32 = arith.constant 0 : i32
    %c0_i32_0 = arith.constant 0 : i32
    %c0_i32_1 = arith.constant 0 : i32
    return %c0_i32, %c0_i32_0 : i32, i32
  }
  func.func @transform_28(%arg0: i32) -> (i32, i32) {
    %c0_i32 = arith.constant 0 : i32
    %c0_i32_0 = arith.constant 0 : i32
    %c0_i32_1 = arith.constant 0 : i32
    return %c0_i32, %c0_i32_0 : i32, i32
  }
  func.func @transform_29(%arg0: i32) -> (i32, i32, i32) {
    %c0_i32 = arith.constant 0 : i32
    %c0_i32_0 = arith.constant 0 : i32
    %c0_i32_1 = arith.constant 0 : i32
    return %arg0, %c0_i32, %c0_i32_0 : i32, i32, i32
  }
}

module attributes {stable_mosaic.version = 11 : i64} {
  func.func @_score_kernel(%arg0: i32, %arg1: memref<2x13x3x32xf32, #tpu.memory_space<vmem>>, %arg2: memref<4x2x13x32xf32, #tpu.memory_space<vmem>>, %arg3: memref<3x4x2x13xf32, #tpu.memory_space<vmem>>) attributes {dimension_semantics = [#tpu.dimension_semantics<arbitrary>], iteration_bounds = array<i64: 1>, scalar_prefetch = 0 : i64, scratch_operands = 0 : i64, tpu.core_type = #tpu.core_type<tc>, window_params = [{pipeline_mode = #tpu.pipeline_mode<synchronous>, transform_indices = @transform_0, window_bounds = array<i64: 2, 13, 3, 32>}, {pipeline_mode = #tpu.pipeline_mode<synchronous>, transform_indices = @transform_1, window_bounds = array<i64: 4, 2, 13, 32>}, {pipeline_mode = #tpu.pipeline_mode<synchronous>, transform_indices = @transform_2, window_bounds = array<i64: 3, 4, 2, 13>}]} {
    %cst = arith.constant 0.000000e+00 : f32
    %0 = vector.broadcast %cst : f32 to vector<3x4x2x13xf32>
    %c0 = arith.constant 0 : index
    %c0_0 = arith.constant 0 : index
    %c0_1 = arith.constant 0 : index
    %c0_2 = arith.constant 0 : index
    %1 = vector.load %arg3[%c0, %c0_0, %c0_1, %c0_2] : memref<3x4x2x13xf32, #tpu.memory_space<vmem>>, vector<3x4x2x13xf32>
    tpu.vector_store %arg3[%c0, %c0_0, %c0_1, %c0_2], %0 {strides = array<i32>} : memref<3x4x2x13xf32, #tpu.memory_space<vmem>>, vector<3x4x2x13xf32>,
    %c0_3 = arith.constant 0 : index
    %c0_4 = arith.constant 0 : index
    %c0_5 = arith.constant 0 : index
    %c0_6 = arith.constant 0 : index
    %2 = vector.load %arg1[%c0_3, %c0_4, %c0_5, %c0_6] : memref<2x13x3x32xf32, #tpu.memory_space<vmem>>, vector<2x13x3x32xf32>
    %c0_7 = arith.constant 0 : index
    %c0_8 = arith.constant 0 : index
    %c0_9 = arith.constant 0 : index
    %c0_10 = arith.constant 0 : index
    %3 = vector.load %arg2[%c0_7, %c0_8, %c0_9, %c0_10] : memref<4x2x13x32xf32, #tpu.memory_space<vmem>>, vector<4x2x13x32xf32>
    %4 = vector.extract_strided_slice %2 {offsets = [0, 0, 0, 0], sizes = [2, 9, 1, 32], strides = [1, 1, 1, 1]} : vector<2x13x3x32xf32> to vector<2x9x1x32xf32>
    %5 = vector.shape_cast %4 : vector<2x9x1x32xf32> to vector<2x9x32xf32>
    %6 = vector.extract_strided_slice %3 {offsets = [0, 0, 4, 0], sizes = [4, 2, 9, 32], strides = [1, 1, 1, 1]} : vector<4x2x13x32xf32> to vector<4x2x9x32xf32>
    %7 = vector.shape_cast %5 : vector<2x9x32xf32> to vector<1x2x9x32xf32>
    %8 = vector.broadcast %7 : vector<1x2x9x32xf32> to vector<4x2x9x32xf32>
    %9 = arith.mulf %8, %6 : vector<4x2x9x32xf32>
    %cst_11 = arith.constant dense<0.000000e+00> : vector<4x2x9xf32>
    %10 = vector.multi_reduction <add>, %9, %cst_11 [3] : vector<4x2x9x32xf32> to vector<4x2x9xf32>
    %c0_12 = arith.constant 0 : index
    %c0_13 = arith.constant 0 : index
    %c0_14 = arith.constant 0 : index
    %c0_15 = arith.constant 0 : index
    %11 = vector.load %arg3[%c0_12, %c0_13, %c0_14, %c0_15] : memref<3x4x2x13xf32, #tpu.memory_space<vmem>>, vector<1x4x2x9xf32>
    %12 = vector.shape_cast %11 : vector<1x4x2x9xf32> to vector<4x2x9xf32>
    %13 = vector.shape_cast %10 : vector<4x2x9xf32> to vector<1x4x2x9xf32>
    tpu.vector_store %arg3[%c0_12, %c0_13, %c0_14, %c0_15], %13 {strides = array<i32>} : memref<3x4x2x13xf32, #tpu.memory_space<vmem>>, vector<1x4x2x9xf32>,
    %14 = vector.extract_strided_slice %2 {offsets = [0, 0, 1, 0], sizes = [2, 8, 1, 32], strides = [1, 1, 1, 1]} : vector<2x13x3x32xf32> to vector<2x8x1x32xf32>
    %15 = vector.shape_cast %14 : vector<2x8x1x32xf32> to vector<2x8x32xf32>
    %16 = vector.extract_strided_slice %3 {offsets = [0, 0, 5, 0], sizes = [4, 2, 8, 32], strides = [1, 1, 1, 1]} : vector<4x2x13x32xf32> to vector<4x2x8x32xf32>
    %17 = vector.shape_cast %15 : vector<2x8x32xf32> to vector<1x2x8x32xf32>
    %18 = vector.broadcast %17 : vector<1x2x8x32xf32> to vector<4x2x8x32xf32>
    %19 = arith.mulf %18, %16 : vector<4x2x8x32xf32>
    %cst_16 = arith.constant dense<0.000000e+00> : vector<4x2x8xf32>
    %20 = vector.multi_reduction <add>, %19, %cst_16 [3] : vector<4x2x8x32xf32> to vector<4x2x8xf32>
    %c1 = arith.constant 1 : index
    %c0_17 = arith.constant 0 : index
    %c0_18 = arith.constant 0 : index
    %c0_19 = arith.constant 0 : index
    %21 = vector.load %arg3[%c1, %c0_17, %c0_18, %c0_19] : memref<3x4x2x13xf32, #tpu.memory_space<vmem>>, vector<1x4x2x8xf32>
    %22 = vector.shape_cast %21 : vector<1x4x2x8xf32> to vector<4x2x8xf32>
    %23 = vector.shape_cast %20 : vector<4x2x8xf32> to vector<1x4x2x8xf32>
    tpu.vector_store %arg3[%c1, %c0_17, %c0_18, %c0_19], %23 {strides = array<i32>} : memref<3x4x2x13xf32, #tpu.memory_space<vmem>>, vector<1x4x2x8xf32>,
    %24 = vector.extract_strided_slice %2 {offsets = [0, 0, 2, 0], sizes = [2, 7, 1, 32], strides = [1, 1, 1, 1]} : vector<2x13x3x32xf32> to vector<2x7x1x32xf32>
    %25 = vector.shape_cast %24 : vector<2x7x1x32xf32> to vector<2x7x32xf32>
    %26 = vector.extract_strided_slice %3 {offsets = [0, 0, 6, 0], sizes = [4, 2, 7, 32], strides = [1, 1, 1, 1]} : vector<4x2x13x32xf32> to vector<4x2x7x32xf32>
    %27 = vector.shape_cast %25 : vector<2x7x32xf32> to vector<1x2x7x32xf32>
    %28 = vector.broadcast %27 : vector<1x2x7x32xf32> to vector<4x2x7x32xf32>
    %29 = arith.mulf %28, %26 : vector<4x2x7x32xf32>
    %cst_20 = arith.constant dense<0.000000e+00> : vector<4x2x7xf32>
    %30 = vector.multi_reduction <add>, %29, %cst_20 [3] : vector<4x2x7x32xf32> to vector<4x2x7xf32>
    %c2 = arith.constant 2 : index
    %c0_21 = arith.constant 0 : index
    %c0_22 = arith.constant 0 : index
    %c0_23 = arith.constant 0 : index
    %31 = vector.load %arg3[%c2, %c0_21, %c0_22, %c0_23] : memref<3x4x2x13xf32, #tpu.memory_space<vmem>>, vector<1x4x2x7xf32>
    %32 = vector.shape_cast %31 : vector<1x4x2x7xf32> to vector<4x2x7xf32>
    %33 = vector.shape_cast %30 : vector<4x2x7xf32> to vector<1x4x2x7xf32>
    tpu.vector_store %arg3[%c2, %c0_21, %c0_22, %c0_23], %33 {strides = array<i32>} : memref<3x4x2x13xf32, #tpu.memory_space<vmem>>, vector<1x4x2x7xf32>,
    return
  }
  func.func @transform_0(%arg0: i32) -> (i32, i32, i32, i32) {
    %c0_i32 = arith.constant 0 : i32
    %c0_i32_0 = arith.constant 0 : i32
    %c0_i32_1 = arith.constant 0 : i32
    %c0_i32_2 = arith.constant 0 : i32
    %c0_i32_3 = arith.constant 0 : i32
    return %c0_i32, %c0_i32_0, %c0_i32_1, %c0_i32_2 : i32, i32, i32, i32
  }
  func.func @transform_1(%arg0: i32) -> (i32, i32, i32, i32) {
    %c0_i32 = arith.constant 0 : i32
    %c0_i32_0 = arith.constant 0 : i32
    %c0_i32_1 = arith.constant 0 : i32
    %c0_i32_2 = arith.constant 0 : i32
    %c0_i32_3 = arith.constant 0 : i32
    return %c0_i32, %c0_i32_0, %c0_i32_1, %c0_i32_2 : i32, i32, i32, i32
  }
  func.func @transform_2(%arg0: i32) -> (i32, i32, i32, i32) {
    %c0_i32 = arith.constant 0 : i32
    %c0_i32_0 = arith.constant 0 : i32
    %c0_i32_1 = arith.constant 0 : i32
    %c0_i32_2 = arith.constant 0 : i32
    %c0_i32_3 = arith.constant 0 : i32
    return %c0_i32, %c0_i32_0, %c0_i32_1, %c0_i32_2 : i32, i32, i32, i32
  }
}

</mosaic_0001>

<llo_original>
// kernel: tile.8
$region0: #{tile.8}
  #allocation0 [shape = 's32[1]{0}', space=sflag, size = 0x4, scoped, tag = 'scoped memory for tile.8']
  %s0 = inlined_call_operand.vmem [shape: f32[32], index: 0, kind: input, shape index: {}]
  %s1 = inlined_call_operand.vmem [shape: f32[3,32], index: 1, kind: output, shape index: {}]
  // Predicated region
  $region2: #{tile.8} parent=0 // pred_check
    _
  $region3: #{tile.8} parent=0 // pred_check_branch
    %3 = sbr.rel (0) target = $region5
  $region4: #{tile.8} parent=0 // pred_region
    _
  $region5: #{tile.8} parent=0 // pred_fallthru
    _
  %v4 = vld [vmem:[%s0] ss:$0 sm:$0xff]
  %5 = vst [vmem:[%s1] sm:$0xf] %v4

// kernel: tile.9
$region0: #{tile.9}
  %s0 = inlined_call_operand.vmem [shape: f32[3,32], index: 0, kind: input, shape index: {}]
  %s1 = inlined_call_operand.vmem [shape: f32[1,96], index: 1, kind: output, shape index: {}]
  $region1: #{tile.9} parent=0
    #allocation0 [shape = 'u8[4096]{0}', space=vmem, size = 0x1000, scoped, tag = 'scoped mem for output reshape']
    #allocation1 [shape = 'u8[4096]{0}', space=vmem, size = 0x1000, scoped, tag = 'scoped mem for input reshape']
    %s3 = sshll.u32 1, 4
    %s4 = ssub.s32 %s3, 1
    %v5 = vld [vmem:[%s0] sm:%s4]
    %6 = vst [vmem:[#allocation1] sm:%s4] %v5
    %v7 = vld [vmem:[#allocation1] sm:$0x1]
    %vm8 = vcmask 261120
    %9 = vst.msk [vmem:[#allocation0] sm:$0x1] %vm8, %v7
    %s10 = scalar_lea.vmem [#allocation1], 2
    %v11 = vld [vmem:[%s10] sm:$0x1]
    %12 = vrot.lane.b32.xlu0 %v11, 64
    %v13 = vpop.permute.xlu0 %12
    %vm14 = vcmask 785920
    %15 = vst.msk [vmem:[#allocation0] sm:$0x1] %vm14, %v13
    %s16 = scalar_lea.vmem [#allocation1], 1
    %v17 = vld [vmem:[%s16] sm:$0x1]
    %18 = vrot.lane.b32.xlu0 %v17, 32
    %v19 = vpop.permute.xlu0 %18
    %vm20 = vcmask 523520
    %21 = vst.msk [vmem:[#allocation0] sm:$0x1] %vm20, %v19
    %s23 = sshll.u32 1, 1
    %s24 = ssub.s32 %s23, 1
    %v26 = vld [vmem:[#allocation0] sm:%s24]
    %s27 = sshll.u32 1, 1
    %s28 = ssub.s32 %s27, 1
    %29 = vst [vmem:[%s1] sm:%s28] %v26

// kernel: cpc_forward.3
$region0: #{cpc_forward.3}
  #allocation0 [shape = 'u32[]', space=smem, size = 0x4, offset = 0x4, fixed_abs, tag = 'smem constant byte address 0x4 - core index']
  #allocation1 [shape = 'u32[144,128]{1,0:T(1,128)}', space=vmem, size = 0x12000, scoped, tag = 'internal scratch']
  %s0 = inlined_call_operand.vmem [shape: f32[2,13,3,32], index: 0, kind: input, shape index: {}]
  %s1 = inlined_call_operand.vmem [shape: f32[4,2,13,32], index: 1, kind: input, shape index: {}]
  %s2 = inlined_call_operand.vmem [shape: f32[3,4,2,13], index: 2, kind: output, shape index: {}]
  %s3 = sld [smem:[#allocation0]]
  $region18: #{cpc_forward.3} parent=0
    _
  %s5 = ssub.s32 1, %s3
  %s6 = scalar_select 0, %s5, %s3
  // Predicated region
  $region2: #{cpc_forward.3} parent=0 // pred_check
    _
  $region3: #{cpc_forward.3} parent=0 // pred_check_branch
    %8 = sbr.rel (0) target = $region5
  $region4: #{cpc_forward.3} parent=0 // pred_region
    _
  $region5: #{cpc_forward.3} parent=0 // pred_fallthru
    _
  // Predicated region
  $region6: #{cpc_forward.3} parent=0 // pred_check
    _
  $region7: #{cpc_forward.3} parent=0 // pred_check_branch
    %10 = sbr.rel (0) target = $region9
  $region8: #{cpc_forward.3} parent=0 // pred_region
    _
  $region9: #{cpc_forward.3} parent=0 // pred_fallthru
    _
  %vm11 = vcmask 99328
  %12 = vst.msk [vmem:[%s2] sm:$0x3] %vm11, 0.0
  %13 = vst.msk [vmem:[%s2 + $0x2] sm:$0x3] %vm11, 0.0
  %14 = vst.msk [vmem:[%s2 + $0x4] sm:$0x3] %vm11, 0.0
  %15 = vst.msk [vmem:[%s2 + $0x6] sm:$0x3] %vm11, 0.0
  %16 = vst.msk [vmem:[%s2 + $0x8] sm:$0x3] %vm11, 0.0
  %17 = vst.msk [vmem:[%s2 + $0xa] sm:$0x3] %vm11, 0.0
  %18 = vst.msk [vmem:[%s2 + $0xc] sm:$0x3] %vm11, 0.0
  %19 = vst.msk [vmem:[%s2 + $0xe] sm:$0x3] %vm11, 0.0
  %20 = vst.msk [vmem:[%s2 + $0x10] sm:$0x3] %vm11, 0.0
  %21 = vst.msk [vmem:[%s2 + $0x12] sm:$0x3] %vm11, 0.0
  %22 = vst.msk [vmem:[%s2 + $0x14] sm:$0x3] %vm11, 0.0
  %23 = vst.msk [vmem:[%s2 + $0x16] sm:$0x3] %vm11, 0.0
  %v24 = vld [vmem:[%s0] sm:$0x7]
  %v25 = vld [vmem:[%s0 + $0x4] sm:$0x7]
  %v26 = vld [vmem:[%s0 + $0x8] sm:$0x7]
  %v27 = vld [vmem:[%s0 + $0xc] sm:$0x7]
  %v28 = vld [vmem:[%s0 + $0x10] sm:$0x7]
  %v29 = vld [vmem:[%s0 + $0x14] sm:$0x7]
  %v30 = vld [vmem:[%s0 + $0x18] sm:$0x7]
  %v31 = vld [vmem:[%s0 + $0x1c] sm:$0x7]
  %v32 = vld [vmem:[%s0 + $0x20] sm:$0x7]
  %v33 = vld [vmem:[%s0 + $0x34] sm:$0x7]
  %v34 = vld [vmem:[%s0 + $0x38] sm:$0x7]
  %v35 = vld [vmem:[%s0 + $0x3c] sm:$0x7]
  %v36 = vld [vmem:[%s0 + $0x40] sm:$0x7]
  %v37 = vld [vmem:[%s0 + $0x44] sm:$0x7]
  %v38 = vld [vmem:[%s0 + $0x48] sm:$0x7]
  %v39 = vld [vmem:[%s0 + $0x4c] sm:$0x7]
  %v40 = vld [vmem:[%s0 + $0x50] sm:$0x7]
  %v41 = vld [vmem:[%s0 + $0x54] sm:$0x7]
  %v42 = vld [vmem:[%s1] sm:$0xff]
  %v43 = vld [vmem:[%s1 + $0x8] sm:$0x1f]
  %v44 = vld [vmem:[%s1 + $0x10] sm:$0xff]
  %v45 = vld [vmem:[%s1 + $0x18] sm:$0x1f]
  %v46 = vld [vmem:[%s1 + $0x20] sm:$0xff]
  %v47 = vld [vmem:[%s1 + $0x28] sm:$0x1f]
  %v48 = vld [vmem:[%s1 + $0x30] sm:$0xff]
  %v49 = vld [vmem:[%s1 + $0x38] sm:$0x1f]
  %v50 = vld [vmem:[%s1 + $0x40] sm:$0xff]
  %v51 = vld [vmem:[%s1 + $0x48] sm:$0x1f]
  %v52 = vld [vmem:[%s1 + $0x50] sm:$0xff]
  %v53 = vld [vmem:[%s1 + $0x58] sm:$0x1f]
  %v54 = vld [vmem:[%s1 + $0x60] sm:$0xff]
  %v55 = vld [vmem:[%s1 + $0x68] sm:$0x1f]
  %v56 = vld [vmem:[%s1 + $0x70] sm:$0xff]
  %v57 = vld [vmem:[%s1 + $0x78] sm:$0x1f]
  %v74 = vrot.slane %v42, 4
  %v75 = vrot.slane %v42, 5
  %v76 = vrot.slane %v42, 6
  %v77 = vrot.slane %v42, 7
  %v78 = vrot.slane %v43, 1
  %v79 = vrot.slane %v43, 2
  %v80 = vrot.slane %v43, 3
  %v81 = vrot.slane %v43, 4
  %v82 = vrot.slane %v44, 4
  %v83 = vrot.slane %v44, 5
  %v84 = vrot.slane %v44, 6
  %v85 = vrot.slane %v44, 7
  %v86 = vrot.slane %v45, 1
  %v87 = vrot.slane %v45, 2
  %v88 = vrot.slane %v45, 3
  %v89 = vrot.slane %v45, 4
  %v90 = vrot.slane %v46, 4
  %v91 = vrot.slane %v46, 5
  %v92 = vrot.slane %v46, 6
  %v93 = vrot.slane %v46, 7
  %v94 = vrot.slane %v47, 1
  %v95 = vrot.slane %v47, 2
  %v96 = vrot.slane %v47, 3
  %v97 = vrot.slane %v47, 4
  %v98 = vrot.slane %v48, 4
  %v99 = vrot.slane %v48, 5
  %v100 = vrot.slane %v48, 6
  %v101 = vrot.slane %v48, 7
  %v102 = vrot.slane %v49, 1
  %v103 = vrot.slane %v49, 2
  %v104 = vrot.slane %v49, 3
  %v105 = vrot.slane %v49, 4
  %v106 = vrot.slane %v50, 4
  %v107 = vrot.slane %v50, 5
  %v108 = vrot.slane %v50, 6
  %v109 = vrot.slane %v50, 7
  %v110 = vrot.slane %v51, 1
  %v111 = vrot.slane %v51, 2
  %v112 = vrot.slane %v51, 3
  %v113 = vrot.slane %v51, 4
  %v114 = vrot.slane %v52, 4
  %v115 = vrot.slane %v52, 5
  %v116 = vrot.slane %v52, 6
  %v117 = vrot.slane %v52, 7
  %v118 = vrot.slane %v53, 1
  %v119 = vrot.slane %v53, 2
  %v120 = vrot.slane %v53, 3
  %v121 = vrot.slane %v53, 4
  %v122 = vrot.slane %v54, 4
  %v123 = vrot.slane %v54, 5
  %v124 = vrot.slane %v54, 6
  %v125 = vrot.slane %v54, 7
  %v126 = vrot.slane %v55, 1
  %v127 = vrot.slane %v55, 2
  %v128 = vrot.slane %v55, 3
  %v129 = vrot.slane %v55, 4
  %v130 = vrot.slane %v56, 4
  %v131 = vrot.slane %v56, 5
  %v132 = vrot.slane %v56, 6
  %v133 = vrot.slane %v56, 7
  %v134 = vrot.slane %v57, 1
  %v135 = vrot.slane %v57, 2
  %v136 = vrot.slane %v57, 3
  %v137 = vrot.slane %v57, 4
  %v210 = vmul.f32 %v24, %v74
  %v211 = vmul.f32 %v25, %v75
  %v212 = vmul.f32 %v26, %v76
  %v213 = vmul.f32 %v27, %v77
  %v214 = vmul.f32 %v28, %v43
  %v215 = vmul.f32 %v29, %v78
  %v216 = vmul.f32 %v30, %v79
  %v217 = vmul.f32 %v31, %v80
  %v218 = vmul.f32 %v32, %v81
  %v219 = vmul.f32 %v33, %v82
  %v220 = vmul.f32 %v34, %v83
  %v221 = vmul.f32 %v35, %v84
  %v222 = vmul.f32 %v36, %v85
  %v223 = vmul.f32 %v37, %v45
  %v224 = vmul.f32 %v38, %v86
  %v225 = vmul.f32 %v39, %v87
  %v226 = vmul.f32 %v40, %v88
  %v227 = vmul.f32 %v41, %v89
  %v228 = vmul.f32 %v24, %v90
  %v229 = vmul.f32 %v25, %v91
  %v230 = vmul.f32 %v26, %v92
  %v231 = vmul.f32 %v27, %v93
  %v232 = vmul.f32 %v28, %v47
  %v233 = vmul.f32 %v29, %v94
  %v234 = vmul.f32 %v30, %v95
  %v235 = vmul.f32 %v31, %v96
  %v236 = vmul.f32 %v32, %v97
  %v237 = vmul.f32 %v33, %v98
  %v238 = vmul.f32 %v34, %v99
  %v239 = vmul.f32 %v35, %v100
  %v240 = vmul.f32 %v36, %v101
  %v241 = vmul.f32 %v37, %v49
  %v242 = vmul.f32 %v38, %v102
  %v243 = vmul.f32 %v39, %v103
  %v244 = vmul.f32 %v40, %v104
  %v245 = vmul.f32 %v41, %v105
  %v246 = vmul.f32 %v24, %v106
  %v247 = vmul.f32 %v25, %v107
  %v248 = vmul.f32 %v26, %v108
  %v249 = vmul.f32 %v27, %v109
  %v250 = vmul.f32 %v28, %v51
  %v251 = vmul.f32 %v29, %v110
  %v252 = vmul.f32 %v30, %v111
  %v253 = vmul.f32 %v31, %v112
  %v254 = vmul.f32 %v32, %v113
  %v255 = vmul.f32 %v33, %v114
  %v256 = vmul.f32 %v34, %v115
  %v257 = vmul.f32 %v35, %v116
  %v258 = vmul.f32 %v36, %v117
  %v259 = vmul.f32 %v37, %v53
  %v260 = vmul.f32 %v38, %v118
  %v261 = vmul.f32 %v39, %v119
  %v262 = vmul.f32 %v40, %v120
  %v263 = vmul.f32 %v41, %v121
  %v264 = vmul.f32 %v24, %v122
  %v265 = vmul.f32 %v25, %v123
  %v266 = vmul.f32 %v26, %v124
  %v267 = vmul.f32 %v27, %v125
  %v268 = vmul.f32 %v28, %v55
  %v269 = vmul.f32 %v29, %v126
  %v270 = vmul.f32 %v30, %v127
  %v271 = vmul.f32 %v31, %v128
  %v272 = vmul.f32 %v32, %v129
  %v273 = vmul.f32 %v33, %v130
  %v274 = vmul.f32 %v34, %v131
  %v275 = vmul.f32 %v35, %v132
  %v276 = vmul.f32 %v36, %v133
  %v277 = vmul.f32 %v37, %v57
  %v278 = vmul.f32 %v38, %v134
  %v279 = vmul.f32 %v39, %v135
  %v280 = vmul.f32 %v40, %v136
  %v281 = vmul.f32 %v41, %v137
  %v354 = vrot.slane %v211, 7
  %vm355 = vcmask 1041409
  %v356 = vsel %vm355, %v354, %v210
  %v357 = vrot.slane %v212, 6
  %vm358 = vcmask 1042434
  %v359 = vsel %vm358, %v357, %v356
  %v360 = vrot.slane %v213, 5
  %vm361 = vcmask 1043459
  %v362 = vsel %vm361, %v360, %v359
  %v363 = vrot.slane %v214, 4
  %vm364 = vcmask 1044484
  %v365 = vsel %vm364, %v363, %v362
  %v366 = vrot.slane %v215, 3
  %vm367 = vcmask 1045509
  %v368 = vsel %vm367, %v366, %v365
  %v369 = vrot.slane %v216, 2
  %vm370 = vcmask 1046534
  %v371 = vsel %vm370, %v369, %v368
  %v372 = vrot.slane %v217, 1
  %vm373 = vcmask 1047559
  %v374 = vsel %vm373, %v372, %v371
  %v375 = vrot.slane %v220, 7
  %v376 = vsel %vm355, %v375, %v219
  %v377 = vrot.slane %v221, 6
  %v378 = vsel %vm358, %v377, %v376
  %v379 = vrot.slane %v222, 5
  %v380 = vsel %vm361, %v379, %v378
  %v381 = vrot.slane %v223, 4
  %v382 = vsel %vm364, %v381, %v380
  %v383 = vrot.slane %v224, 3
  %v384 = vsel %vm367, %v383, %v382
  %v385 = vrot.slane %v225, 2
  %v386 = vsel %vm370, %v385, %v384
  %v387 = vrot.slane %v226, 1
  %v388 = vsel %vm373, %v387, %v386
  %v389 = vrot.slane %v229, 7
  %v390 = vsel %vm355, %v389, %v228
  %v391 = vrot.slane %v230, 6
  %v392 = vsel %vm358, %v391, %v390
  %v393 = vrot.slane %v231, 5
  %v394 = vsel %vm361, %v393, %v392
  %v395 = vrot.slane %v232, 4
  %v396 = vsel %vm364, %v395, %v394
  %v397 = vrot.slane %v233, 3
  %v398 = vsel %vm367, %v397, %v396
  %v399 = vrot.slane %v234, 2
  %v400 = vsel %vm370, %v399, %v398
  %v401 = vrot.slane %v235, 1
  %v402 = vsel %vm373, %v401, %v400
  %v403 = vrot.slane %v238, 7
  %v404 = vsel %vm355, %v403, %v237
  %v405 = vrot.slane %v239, 6
  %v406 = vsel %vm358, %v405, %v404
  %v407 = vrot.slane %v240, 5
  %v408 = vsel %vm361, %v407, %v406
  %v409 = vrot.slane %v241, 4
  %v410 = vsel %vm364, %v409, %v408
  %v411 = vrot.slane %v242, 3
  %v412 = vsel %vm367, %v411, %v410
  %v413 = vrot.slane %v243, 2
  %v414 = vsel %vm370, %v413, %v412
  %v415 = vrot.slane %v244, 1
  %v416 = vsel %vm373, %v415, %v414
  %v417 = vrot.slane %v247, 7
  %v418 = vsel %vm355, %v417, %v246
  %v419 = vrot.slane %v248, 6
  %v420 = vsel %vm358, %v419, %v418
  %v421 = vrot.slane %v249, 5
  %v422 = vsel %vm361, %v421, %v420
  %v423 = vrot.slane %v250, 4
  %v424 = vsel %vm364, %v423, %v422
  %v425 = vrot.slane %v251, 3
  %v426 = vsel %vm367, %v425, %v424
  %v427 = vrot.slane %v252, 2
  %v428 = vsel %vm370, %v427, %v426
  %v429 = vrot.slane %v253, 1
  %v430 = vsel %vm373, %v429, %v428
  %v431 = vrot.slane %v256, 7
  %v432 = vsel %vm355, %v431, %v255
  %v433 = vrot.slane %v257, 6
  %v434 = vsel %vm358, %v433, %v432
  %v435 = vrot.slane %v258, 5
  %v436 = vsel %vm361, %v435, %v434
  %v437 = vrot.slane %v259, 4
  %v438 = vsel %vm364, %v437, %v436
  %v439 = vrot.slane %v260, 3
  %v440 = vsel %vm367, %v439, %v438
  %v441 = vrot.slane %v261, 2
  %v442 = vsel %vm370, %v441, %v440
  %v443 = vrot.slane %v262, 1
  %v444 = vsel %vm373, %v443, %v442
  %v445 = vrot.slane %v265, 7
  %v446 = vsel %vm355, %v445, %v264
  %v447 = vrot.slane %v266, 6
  %v448 = vsel %vm358, %v447, %v446
  %v449 = vrot.slane %v267, 5
  %v450 = vsel %vm361, %v449, %v448
  %v451 = vrot.slane %v268, 4
  %v452 = vsel %vm364, %v451, %v450
  %v453 = vrot.slane %v269, 3
  %v454 = vsel %vm367, %v453, %v452
  %v455 = vrot.slane %v270, 2
  %v456 = vsel %vm370, %v455, %v454
  %v457 = vrot.slane %v271, 1
  %v458 = vsel %vm373, %v457, %v456
  %v459 = vrot.slane %v274, 7
  %v460 = vsel %vm355, %v459, %v273
  %v461 = vrot.slane %v275, 6
  %v462 = vsel %vm358, %v461, %v460
  %v463 = vrot.slane %v276, 5
  %v464 = vsel %vm361, %v463, %v462
  %v465 = vrot.slane %v277, 4
  %v466 = vsel %vm364, %v465, %v464
  %v467 = vrot.slane %v278, 3
  %v468 = vsel %vm367, %v467, %v466
  %v469 = vrot.slane %v279, 2
  %v470 = vsel %vm370, %v469, %v468
  %v471 = vrot.slane %v280, 1
  %v472 = vsel %vm373, %v471, %v470
  %vm489 = vcmask 261120
  %v490 = vsel %vm489, %v374, 0.0
  %491 = vadd.xlane.f32.xlu0 %v490
  %v492 = vpop.xlane.xlu0 %491
  %vm493 = vcmask 253952
  %v494 = vsel %vm493, %v218, 0.0
  %495 = vadd.xlane.f32.xlu0 %v494
  %v496 = vpop.xlane.xlu0 %495
  %v497 = vsel %vm489, %v388, 0.0
  %498 = vadd.xlane.f32.xlu0 %v497
  %v499 = vpop.xlane.xlu0 %498
  %v500 = vsel %vm493, %v227, 0.0
  %501 = vadd.xlane.f32.xlu0 %v500
  %v502 = vpop.xlane.xlu0 %501
  %v503 = vsel %vm489, %v402, 0.0
  %504 = vadd.xlane.f32.xlu0 %v503
  %v505 = vpop.xlane.xlu0 %504
  %v506 = vsel %vm493, %v236, 0.0
  %507 = vadd.xlane.f32.xlu0 %v506
  %v508 = vpop.xlane.xlu0 %507
  %v509 = vsel %vm489, %v416, 0.0
  %510 = vadd.xlane.f32.xlu0 %v509
  %v511 = vpop.xlane.xlu0 %510
  %v512 = vsel %vm493, %v245, 0.0
  %513 = vadd.xlane.f32.xlu0 %v512
  %v514 = vpop.xlane.xlu0 %513
  %v515 = vsel %vm489, %v430, 0.0
  %516 = vadd.xlane.f32.xlu0 %v515
  %v517 = vpop.xlane.xlu0 %516
  %v518 = vsel %vm493, %v254, 0.0
  %519 = vadd.xlane.f32.xlu0 %v518
  %v520 = vpop.xlane.xlu0 %519
  %v521 = vsel %vm489, %v444, 0.0
  %522 = vadd.xlane.f32.xlu0 %v521
  %v523 = vpop.xlane.xlu0 %522
  %v524 = vsel %vm493, %v263, 0.0
  %525 = vadd.xlane.f32.xlu0 %v524
  %v526 = vpop.xlane.xlu0 %525
  %v527 = vsel %vm489, %v458, 0.0
  %528 = vadd.xlane.f32.xlu0 %v527
  %v529 = vpop.xlane.xlu0 %528
  %v530 = vsel %vm493, %v272, 0.0
  %531 = vadd.xlane.f32.xlu0 %v530
  %v532 = vpop.xlane.xlu0 %531
  %v533 = vsel %vm489, %v472, 0.0
  %534 = vadd.xlane.f32.xlu0 %v533
  %v535 = vpop.xlane.xlu0 %534
  %v536 = vsel %vm493, %v281, 0.0
  %537 = vadd.xlane.f32.xlu0 %v536
  %v538 = vpop.xlane.xlu0 %537
  %v555 = vlaneseq
  %v556 = vand.u32 %v555, 127
  %v557 = vlaneseq
  %v558 = vshrl.u32 %v557, 7
  %v559 = vsub.s32 %v556, %v558
  %v560 = vrot.slane %v492, %v559
  %v561 = vadd.s32 %v556, 4294967288
  %v562 = vlaneseq
  %v563 = vshrl.u32 %v562, 7
  %v564 = vsub.s32 %v561, %v563
  %v565 = vrot.slane %v496, %v564
  %vm566 = vcmask 130112
  %v567 = vsel %vm566, %v565, %v560
  %v568 = vlaneseq
  %v569 = vshrl.u32 %v568, 7
  %v570 = vsub.s32 %v556, %v569
  %v571 = vrot.slane %v499, %v570
  %v572 = vlaneseq
  %v573 = vshrl.u32 %v572, 7
  %v574 = vsub.s32 %v561, %v573
  %v575 = vrot.slane %v502, %v574
  %v576 = vsel %vm566, %v575, %v571
  %v577 = vlaneseq
  %v578 = vshrl.u32 %v577, 7
  %v579 = vsub.s32 %v556, %v578
  %v580 = vrot.slane %v505, %v579
  %v581 = vlaneseq
  %v582 = vshrl.u32 %v581, 7
  %v583 = vsub.s32 %v561, %v582
  %v584 = vrot.slane %v508, %v583
  %v585 = vsel %vm566, %v584, %v580
  %v586 = vlaneseq
  %v587 = vshrl.u32 %v586, 7
  %v588 = vsub.s32 %v556, %v587
  %v589 = vrot.slane %v511, %v588
  %v590 = vlaneseq
  %v591 = vshrl.u32 %v590, 7
  %v592 = vsub.s32 %v561, %v591
  %v593 = vrot.slane %v514, %v592
  %v594 = vsel %vm566, %v593, %v589
  %v595 = vlaneseq
  %v596 = vshrl.u32 %v595, 7
  %v597 = vsub.s32 %v556, %v596
  %v598 = vrot.slane %v517, %v597
  %v599 = vlaneseq
  %v600 = vshrl.u32 %v599, 7
  %v601 = vsub.s32 %v561, %v600
  %v602 = vrot.slane %v520, %v601
  %v603 = vsel %vm566, %v602, %v598
  %v604 = vlaneseq
  %v605 = vshrl.u32 %v604, 7
  %v606 = vsub.s32 %v556, %v605
  %v607 = vrot.slane %v523, %v606
  %v608 = vlaneseq
  %v609 = vshrl.u32 %v608, 7
  %v610 = vsub.s32 %v561, %v609
  %v611 = vrot.slane %v526, %v610
  %v612 = vsel %vm566, %v611, %v607
  %v613 = vlaneseq
  %v614 = vshrl.u32 %v613, 7
  %v615 = vsub.s32 %v556, %v614
  %v616 = vrot.slane %v529, %v615
  %v617 = vlaneseq
  %v618 = vshrl.u32 %v617, 7
  %v619 = vsub.s32 %v561, %v618
  %v620 = vrot.slane %v532, %v619
  %v621 = vsel %vm566, %v620, %v616
  %v622 = vlaneseq
  %v623 = vshrl.u32 %v622, 7
  %v624 = vsub.s32 %v556, %v623
  %v625 = vrot.slane %v535, %v624
  %v626 = vlaneseq
  %v627 = vshrl.u32 %v626, 7
  %v628 = vsub.s32 %v561, %v627
  %v629 = vrot.slane %v538, %v628
  %v630 = vsel %vm566, %v629, %v625
  %v631 = vsel %vm355, %v576, %v567
  %v632 = vsel %vm355, %v594, %v585
  %v633 = vsel %vm355, %v612, %v603
  %v634 = vsel %vm355, %v630, %v621
  %vm639 = vcmask 66560
  %640 = vst.msk [vmem:[%s2] sm:$0x3] %vm639, %v631
  %641 = vst.msk [vmem:[%s2 + $0x2] sm:$0x3] %vm639, %v632
  %642 = vst.msk [vmem:[%s2 + $0x4] sm:$0x3] %vm639, %v633
  %643 = vst.msk [vmem:[%s2 + $0x6] sm:$0x3] %vm639, %v634
  %v644 = vrot.slane %v43, 7
  %v645 = vrot.slane %v45, 7
  %v646 = vrot.slane %v47, 7
  %v647 = vrot.slane %v49, 7
  %v648 = vrot.slane %v51, 7
  %v649 = vrot.slane %v53, 7
  %v650 = vrot.slane %v55, 7
  %v651 = vrot.slane %v57, 7
  %v660 = vmul.f32 %v27, %v644
  %v661 = vmul.f32 %v36, %v645
  %v662 = vmul.f32 %v27, %v646
  %v663 = vmul.f32 %v36, %v647
  %v664 = vmul.f32 %v27, %v648
  %v665 = vmul.f32 %v36, %v649
  %v666 = vmul.f32 %v27, %v650
  %v667 = vmul.f32 %v36, %v651
  %v676 = vsel %vm358, %v354, %v210
  %v677 = vsel %vm361, %v357, %v676
  %v678 = vrot.slane %v660, 5
  %v679 = vsel %vm364, %v678, %v677
  %v680 = vsel %vm367, %v363, %v679
  %v681 = vsel %vm370, %v366, %v680
  %v682 = vsel %vm373, %v369, %v681
  %v683 = vsel %vm358, %v375, %v219
  %v684 = vsel %vm361, %v377, %v683
  %v685 = vrot.slane %v661, 5
  %v686 = vsel %vm364, %v685, %v684
  %v687 = vsel %vm367, %v381, %v686
  %v688 = vsel %vm370, %v383, %v687
  %v689 = vsel %vm373, %v385, %v688
  %v690 = vsel %vm358, %v389, %v228
  %v691 = vsel %vm361, %v391, %v690
  %v692 = vrot.slane %v662, 5
  %v693 = vsel %vm364, %v692, %v691
  %v694 = vsel %vm367, %v395, %v693
  %v695 = vsel %vm370, %v397, %v694
  %v696 = vsel %vm373, %v399, %v695
  %v697 = vsel %vm358, %v403, %v237
  %v698 = vsel %vm361, %v405, %v697
  %v699 = vrot.slane %v663, 5
  %v700 = vsel %vm364, %v699, %v698
  %v701 = vsel %vm367, %v409, %v700
  %v702 = vsel %vm370, %v411, %v701
  %v703 = vsel %vm373, %v413, %v702
  %v704 = vsel %vm358, %v417, %v246
  %v705 = vsel %vm361, %v419, %v704
  %v706 = vrot.slane %v664, 5
  %v707 = vsel %vm364, %v706, %v705
  %v708 = vsel %vm367, %v423, %v707
  %v709 = vsel %vm370, %v425, %v708
  %v710 = vsel %vm373, %v427, %v709
  %v711 = vsel %vm358, %v431, %v255
  %v712 = vsel %vm361, %v433, %v711
  %v713 = vrot.slane %v665, 5
  %v714 = vsel %vm364, %v713, %v712
  %v715 = vsel %vm367, %v437, %v714
  %v716 = vsel %vm370, %v439, %v715
  %v717 = vsel %vm373, %v441, %v716
  %v718 = vsel %vm358, %v445, %v264
  %v719 = vsel %vm361, %v447, %v718
  %v720 = vrot.slane %v666, 5
  %v721 = vsel %vm364, %v720, %v719
  %v722 = vsel %vm367, %v451, %v721
  %v723 = vsel %vm370, %v453, %v722
  %v724 = vsel %vm373, %v455, %v723
  %v725 = vsel %vm358, %v459, %v273
  %v726 = vsel %vm361, %v461, %v725
  %v727 = vrot.slane %v667, 5
  %v728 = vsel %vm364, %v727, %v726
  %v729 = vsel %vm367, %v465, %v728
  %v730 = vsel %vm370, %v467, %v729
  %v731 = vsel %vm373, %v469, %v730
  %vm748 = vcmask 261121
  %v749 = vsel %vm748, %v682, 0.0
  %750 = vadd.xlane.f32.xlu0 %v749
  %v751 = vpop.xlane.xlu0 %750
  %v752 = vsel %vm493, %v372, 0.0
  %753 = vadd.xlane.f32.xlu0 %v752
  %v754 = vpop.xlane.xlu0 %753
  %v755 = vsel %vm748, %v689, 0.0
  %756 = vadd.xlane.f32.xlu0 %v755
  %v757 = vpop.xlane.xlu0 %756
  %v758 = vsel %vm493, %v387, 0.0
  %759 = vadd.xlane.f32.xlu0 %v758
  %v760 = vpop.xlane.xlu0 %759
  %v761 = vsel %vm748, %v696, 0.0
  %762 = vadd.xlane.f32.xlu0 %v761
  %v763 = vpop.xlane.xlu0 %762
  %v764 = vsel %vm493, %v401, 0.0
  %765 = vadd.xlane.f32.xlu0 %v764
  %v766 = vpop.xlane.xlu0 %765
  %v767 = vsel %vm748, %v703, 0.0
  %768 = vadd.xlane.f32.xlu0 %v767
  %v769 = vpop.xlane.xlu0 %768
  %v770 = vsel %vm493, %v415, 0.0
  %771 = vadd.xlane.f32.xlu0 %v770
  %v772 = vpop.xlane.xlu0 %771
  %v773 = vsel %vm748, %v710, 0.0
  %774 = vadd.xlane.f32.xlu0 %v773
  %v775 = vpop.xlane.xlu0 %774
  %v776 = vsel %vm493, %v429, 0.0
  %777 = vadd.xlane.f32.xlu0 %v776
  %v778 = vpop.xlane.xlu0 %777
  %v779 = vsel %vm748, %v717, 0.0
  %780 = vadd.xlane.f32.xlu0 %v779
  %v781 = vpop.xlane.xlu0 %780
  %v782 = vsel %vm493, %v443, 0.0
  %783 = vadd.xlane.f32.xlu0 %v782
  %v784 = vpop.xlane.xlu0 %783
  %v785 = vsel %vm748, %v724, 0.0
  %786 = vadd.xlane.f32.xlu0 %v785
  %v787 = vpop.xlane.xlu0 %786
  %v788 = vsel %vm493, %v457, 0.0
  %789 = vadd.xlane.f32.xlu0 %v788
  %v790 = vpop.xlane.xlu0 %789
  %v791 = vsel %vm748, %v731, 0.0
  %792 = vadd.xlane.f32.xlu0 %v791
  %v793 = vpop.xlane.xlu0 %792
  %v794 = vsel %vm493, %v471, 0.0
  %795 = vadd.xlane.f32.xlu0 %v794
  %v796 = vpop.xlane.xlu0 %795
  %v813 = vadd.s32 %v556, 1
  %v814 = vlaneseq
  %v815 = vshrl.u32 %v814, 7
  %v816 = vsub.s32 %v813, %v815
  %v817 = vrot.slane %v751, %v816
  %v818 = vadd.s32 %v556, 4294967289
  %v819 = vlaneseq
  %v820 = vshrl.u32 %v819, 7
  %v821 = vsub.s32 %v818, %v820
  %v822 = vrot.slane %v754, %v821
  %vm823 = vcmask 121912
  %v824 = vsel %vm823, %v822, %v817
  %v825 = vlaneseq
  %v826 = vshrl.u32 %v825, 7
  %v827 = vsub.s32 %v813, %v826
  %v828 = vrot.slane %v757, %v827
  %v829 = vlaneseq
  %v830 = vshrl.u32 %v829, 7
  %v831 = vsub.s32 %v818, %v830
  %v832 = vrot.slane %v760, %v831
  %v833 = vsel %vm823, %v832, %v828
  %v834 = vlaneseq
  %v835 = vshrl.u32 %v834, 7
  %v836 = vsub.s32 %v813, %v835
  %v837 = vrot.slane %v763, %v836
  %v838 = vlaneseq
  %v839 = vshrl.u32 %v838, 7
  %v840 = vsub.s32 %v818, %v839
  %v841 = vrot.slane %v766, %v840
  %v842 = vsel %vm823, %v841, %v837
  %v843 = vlaneseq
  %v844 = vshrl.u32 %v843, 7
  %v845 = vsub.s32 %v813, %v844
  %v846 = vrot.slane %v769, %v845
  %v847 = vlaneseq
  %v848 = vshrl.u32 %v847, 7
  %v849 = vsub.s32 %v818, %v848
  %v850 = vrot.slane %v772, %v849
  %v851 = vsel %vm823, %v850, %v846
  %v852 = vlaneseq
  %v853 = vshrl.u32 %v852, 7
  %v854 = vsub.s32 %v813, %v853
  %v855 = vrot.slane %v775, %v854
  %v856 = vlaneseq
  %v857 = vshrl.u32 %v856, 7
  %v858 = vsub.s32 %v818, %v857
  %v859 = vrot.slane %v778, %v858
  %v860 = vsel %vm823, %v859, %v855
  %v861 = vlaneseq
  %v862 = vshrl.u32 %v861, 7
  %v863 = vsub.s32 %v813, %v862
  %v864 = vrot.slane %v781, %v863
  %v865 = vlaneseq
  %v866 = vshrl.u32 %v865, 7
  %v867 = vsub.s32 %v818, %v866
  %v868 = vrot.slane %v784, %v867
  %v869 = vsel %vm823, %v868, %v864
  %v870 = vlaneseq
  %v871 = vshrl.u32 %v870, 7
  %v872 = vsub.s32 %v813, %v871
  %v873 = vrot.slane %v787, %v872
  %v874 = vlaneseq
  %v875 = vshrl.u32 %v874, 7
  %v876 = vsub.s32 %v818, %v875
  %v877 = vrot.slane %v790, %v876
  %v878 = vsel %vm823, %v877, %v873
  %v879 = vlaneseq
  %v880 = vshrl.u32 %v879, 7
  %v881 = vsub.s32 %v813, %v880
  %v882 = vrot.slane %v793, %v881
  %v883 = vlaneseq
  %v884 = vshrl.u32 %v883, 7
  %v885 = vsub.s32 %v818, %v884
  %v886 = vrot.slane %v796, %v885
  %v887 = vsel %vm823, %v886, %v882
  %v888 = vsel %vm358, %v833, %v824
  %v889 = vsel %vm358, %v851, %v842
  %v890 = vsel %vm358, %v869, %v860
  %v891 = vsel %vm358, %v887, %v878
  %s896 = scalar_lea.vmem %s2, 8
  %vm897 = vcmask 59393
  %898 = vst.msk [vmem:[%s896 - $0x1] sm:$0x6] %vm897, %v888
  %899 = vst.msk [vmem:[%s896 + $0x1] sm:$0x6] %vm897, %v889
  %900 = vst.msk [vmem:[%s896 + $0x3] sm:$0x6] %vm897, %v890
  %901 = vst.msk [vmem:[%s896 + $0x5] sm:$0x6] %vm897, %v891
  %v902 = vrot.slane %v43, 6
  %v903 = vrot.slane %v45, 6
  %v904 = vrot.slane %v47, 6
  %v905 = vrot.slane %v49, 6
  %v906 = vrot.slane %v51, 6
  %v907 = vrot.slane %v53, 6
  %v908 = vrot.slane %v55, 6
  %v909 = vrot.slane %v57, 6
  %v918 = vmul.f32 %v26, %v902
  %v919 = vmul.f32 %v35, %v903
  %v920 = vmul.f32 %v26, %v904
  %v921 = vmul.f32 %v35, %v905
  %v922 = vmul.f32 %v26, %v906
  %v923 = vmul.f32 %v35, %v907
  %v924 = vmul.f32 %v26, %v908
  %v925 = vmul.f32 %v35, %v909
  %v934 = vsel %vm361, %v354, %v210
  %v935 = vrot.slane %v918, 6
  %v936 = vsel %vm364, %v935, %v934
  %v937 = vsel %vm367, %v678, %v936
  %v938 = vsel %vm370, %v363, %v937
  %v939 = vsel %vm373, %v366, %v938
  %v940 = vsel %vm361, %v375, %v219
  %v941 = vrot.slane %v919, 6
  %v942 = vsel %vm364, %v941, %v940
  %v943 = vsel %vm367, %v685, %v942
  %v944 = vsel %vm370, %v381, %v943
  %v945 = vsel %vm373, %v383, %v944
  %v946 = vsel %vm361, %v389, %v228
  %v947 = vrot.slane %v920, 6
  %v948 = vsel %vm364, %v947, %v946
  %v949 = vsel %vm367, %v692, %v948
  %v950 = vsel %vm370, %v395, %v949
  %v951 = vsel %vm373, %v397, %v950
  %v952 = vsel %vm361, %v403, %v237
  %v953 = vrot.slane %v921, 6
  %v954 = vsel %vm364, %v953, %v952
  %v955 = vsel %vm367, %v699, %v954
  %v956 = vsel %vm370, %v409, %v955
  %v957 = vsel %vm373, %v411, %v956
  %v958 = vsel %vm361, %v417, %v246
  %v959 = vrot.slane %v922, 6
  %v960 = vsel %vm364, %v959, %v958
  %v961 = vsel %vm367, %v706, %v960
  %v962 = vsel %vm370, %v423, %v961
  %v963 = vsel %vm373, %v425, %v962
  %v964 = vsel %vm361, %v431, %v255
  %v965 = vrot.slane %v923, 6
  %v966 = vsel %vm364, %v965, %v964
  %v967 = vsel %vm367, %v713, %v966
  %v968 = vsel %vm370, %v437, %v967
  %v969 = vsel %vm373, %v439, %v968
  %v970 = vsel %vm361, %v445, %v264
  %v971 = vrot.slane %v924, 6
  %v972 = vsel %vm364, %v971, %v970
  %v973 = vsel %vm367, %v720, %v972
  %v974 = vsel %vm370, %v451, %v973
  %v975 = vsel %vm373, %v453, %v974
  %v976 = vsel %vm361, %v459, %v273
  %v977 = vrot.slane %v925, 6
  %v978 = vsel %vm364, %v977, %v976
  %v979 = vsel %vm367, %v727, %v978
  %v980 = vsel %vm370, %v465, %v979
  %v981 = vsel %vm373, %v467, %v980
  %vm998 = vcmask 261122
  %v999 = vsel %vm998, %v939, 0.0
  %1000 = vadd.xlane.f32.xlu0 %v999
  %v1001 = vpop.xlane.xlu0 %1000
  %v1002 = vsel %vm493, %v369, 0.0
  %1003 = vadd.xlane.f32.xlu0 %v1002
  %v1004 = vpop.xlane.xlu0 %1003
  %v1005 = vsel %vm998, %v945, 0.0
  %1006 = vadd.xlane.f32.xlu0 %v1005
  %v1007 = vpop.xlane.xlu0 %1006
  %v1008 = vsel %vm493, %v385, 0.0
  %1009 = vadd.xlane.f32.xlu0 %v1008
  %v1010 = vpop.xlane.xlu0 %1009
  %v1011 = vsel %vm998, %v951, 0.0
  %1012 = vadd.xlane.f32.xlu0 %v1011
  %v1013 = vpop.xlane.xlu0 %1012
  %v1014 = vsel %vm493, %v399, 0.0
  %1015 = vadd.xlane.f32.xlu0 %v1014
  %v1016 = vpop.xlane.xlu0 %1015
  %v1017 = vsel %vm998, %v957, 0.0
  %1018 = vadd.xlane.f32.xlu0 %v1017
  %v1019 = vpop.xlane.xlu0 %1018
  %v1020 = vsel %vm493, %v413, 0.0
  %1021 = vadd.xlane.f32.xlu0 %v1020
  %v1022 = vpop.xlane.xlu0 %1021
  %v1023 = vsel %vm998, %v963, 0.0
  %1024 = vadd.xlane.f32.xlu0 %v1023
  %v1025 = vpop.xlane.xlu0 %1024
  %v1026 = vsel %vm493, %v427, 0.0
  %1027 = vadd.xlane.f32.xlu0 %v1026
  %v1028 = vpop.xlane.xlu0 %1027
  %v1029 = vsel %vm998, %v969, 0.0
  %1030 = vadd.xlane.f32.xlu0 %v1029
  %v1031 = vpop.xlane.xlu0 %1030
  %v1032 = vsel %vm493, %v441, 0.0
  %1033 = vadd.xlane.f32.xlu0 %v1032
  %v1034 = vpop.xlane.xlu0 %1033
  %v1035 = vsel %vm998, %v975, 0.0
  %1036 = vadd.xlane.f32.xlu0 %v1035
  %v1037 = vpop.xlane.xlu0 %1036
  %v1038 = vsel %vm493, %v455, 0.0
  %1039 = vadd.xlane.f32.xlu0 %v1038
  %v1040 = vpop.xlane.xlu0 %1039
  %v1041 = vsel %vm998, %v981, 0.0
  %1042 = vadd.xlane.f32.xlu0 %v1041
  %v1043 = vpop.xlane.xlu0 %1042
  %v1044 = vsel %vm493, %v469, 0.0
  %1045 = vadd.xlane.f32.xlu0 %v1044
  %v1046 = vpop.xlane.xlu0 %1045
  %v1063 = vadd.s32 %v556, 2
  %v1064 = vlaneseq
  %v1065 = vshrl.u32 %v1064, 7
  %v1066 = vsub.s32 %v1063, %v1065
  %v1067 = vrot.slane %v1001, %v1066
  %v1068 = vadd.s32 %v556, 4294967290
  %v1069 = vlaneseq
  %v1070 = vshrl.u32 %v1069, 7
  %v1071 = vsub.s32 %v1068, %v1070
  %v1072 = vrot.slane %v1004, %v1071
  %vm1073 = vcmask 113712
  %v1074 = vsel %vm1073, %v1072, %v1067
  %v1075 = vlaneseq
  %v1076 = vshrl.u32 %v1075, 7
  %v1077 = vsub.s32 %v1063, %v1076
  %v1078 = vrot.slane %v1007, %v1077
  %v1079 = vlaneseq
  %v1080 = vshrl.u32 %v1079, 7
  %v1081 = vsub.s32 %v1068, %v1080
  %v1082 = vrot.slane %v1010, %v1081
  %v1083 = vsel %vm1073, %v1082, %v1078
  %v1084 = vlaneseq
  %v1085 = vshrl.u32 %v1084, 7
  %v1086 = vsub.s32 %v1063, %v1085
  %v1087 = vrot.slane %v1013, %v1086
  %v1088 = vlaneseq
  %v1089 = vshrl.u32 %v1088, 7
  %v1090 = vsub.s32 %v1068, %v1089
  %v1091 = vrot.slane %v1016, %v1090
  %v1092 = vsel %vm1073, %v1091, %v1087
  %v1093 = vlaneseq
  %v1094 = vshrl.u32 %v1093, 7
  %v1095 = vsub.s32 %v1063, %v1094
  %v1096 = vrot.slane %v1019, %v1095
  %v1097 = vlaneseq
  %v1098 = vshrl.u32 %v1097, 7
  %v1099 = vsub.s32 %v1068, %v1098
  %v1100 = vrot.slane %v1022, %v1099
  %v1101 = vsel %vm1073, %v1100, %v1096
  %v1102 = vlaneseq
  %v1103 = vshrl.u32 %v1102, 7
  %v1104 = vsub.s32 %v1063, %v1103
  %v1105 = vrot.slane %v1025, %v1104
  %v1106 = vlaneseq
  %v1107 = vshrl.u32 %v1106, 7
  %v1108 = vsub.s32 %v1068, %v1107
  %v1109 = vrot.slane %v1028, %v1108
  %v1110 = vsel %vm1073, %v1109, %v1105
  %v1111 = vlaneseq
  %v1112 = vshrl.u32 %v1111, 7
  %v1113 = vsub.s32 %v1063, %v1112
  %v1114 = vrot.slane %v1031, %v1113
  %v1115 = vlaneseq
  %v1116 = vshrl.u32 %v1115, 7
  %v1117 = vsub.s32 %v1068, %v1116
  %v1118 = vrot.slane %v1034, %v1117
  %v1119 = vsel %vm1073, %v1118, %v1114
  %v1120 = vlaneseq
  %v1121 = vshrl.u32 %v1120, 7
  %v1122 = vsub.s32 %v1063, %v1121
  %v1123 = vrot.slane %v1037, %v1122
  %v1124 = vlaneseq
  %v1125 = vshrl.u32 %v1124, 7
  %v1126 = vsub.s32 %v1068, %v1125
  %v1127 = vrot.slane %v1040, %v1126
  %v1128 = vsel %vm1073, %v1127, %v1123
  %v1129 = vlaneseq
  %v1130 = vshrl.u32 %v1129, 7
  %v1131 = vsub.s32 %v1063, %v1130
  %v1132 = vrot.slane %v1043, %v1131
  %v1133 = vlaneseq
  %v1134 = vshrl.u32 %v1133, 7
  %v1135 = vsub.s32 %v1068, %v1134
  %v1136 = vrot.slane %v1046, %v1135
  %v1137 = vsel %vm1073, %v1136, %v1132
  %v1138 = vsel %vm361, %v1083, %v1074
  %v1139 = vsel %vm361, %v1101, %v1092
  %v1140 = vsel %vm361, %v1119, %v1110
  %v1141 = vsel %vm361, %v1137, %v1128
  %s1146 = scalar_lea.vmem %s2, 16
  %vm1147 = vcmask 52226
  %1148 = vst.msk [vmem:[%s1146 - $0x2] sm:$0xc] %vm1147, %v1138
  %1149 = vst.msk [vmem:[%s1146] sm:$0xc] %vm1147, %v1139
  %1150 = vst.msk [vmem:[%s1146 + $0x2] sm:$0xc] %vm1147, %v1140
  %1151 = vst.msk [vmem:[%s1146 + $0x4] sm:$0xc] %vm1147, %v1141
  // Predicated region
  $region10: #{cpc_forward.3} parent=0 // pred_check
    _
  $region11: #{cpc_forward.3} parent=0 // pred_check_branch
    %1153 = sbr.rel (0) target = $region13
  $region12: #{cpc_forward.3} parent=0 // pred_region
    _
  $region13: #{cpc_forward.3} parent=0 // pred_fallthru
    _
  // Predicated region
  $region14: #{cpc_forward.3} parent=0 // pred_check
    _
  $region15: #{cpc_forward.3} parent=0 // pred_check_branch
    %1155 = sbr.rel (0) target = $region17
  $region16: #{cpc_forward.3} parent=0 // pred_region
    _
  $region17: #{cpc_forward.3} parent=0 // pred_fallthru
    _

// kernel: cpc_forward.2
$region0: #{cpc_forward.2}
  #allocation0 [shape = 'u32[]', space=smem, size = 0x4, offset = 0x4, fixed_abs, tag = 'smem constant byte address 0x4 - core index']
  #allocation1 [shape = 'u32[144,128]{1,0:T(1,128)}', space=vmem, size = 0x12000, scoped, tag = 'internal scratch']
  #allocation2 [shape = 'f32[31,32]{1,0:T(8,128)}', space=vmem, size = 0x4000, scoped, tag = 'scratch operand']
  %s0 = inlined_call_operand.smem [shape: u32[30], index: -1, kind: input, shape index: {}]
  %s1 = sld [smem:[%s0]]
  %s2 = scalar_lea.smem %s0, 1
  %s3 = sld [smem:[%s2]]
  %s4 = scalar_lea.smem %s0, 2
  %s5 = sld [smem:[%s4]]
  %s6 = scalar_lea.smem %s0, 3
  %s7 = sld [smem:[%s6]]
  %s8 = scalar_lea.smem %s0, 4
  %s9 = sld [smem:[%s8]]
  %s10 = scalar_lea.smem %s0, 5
  %s11 = sld [smem:[%s10]]
  %s12 = scalar_lea.smem %s0, 6
  %s13 = sld [smem:[%s12]]
  %s14 = scalar_lea.smem %s0, 7
  %s15 = sld [smem:[%s14]]
  %s16 = scalar_lea.smem %s0, 8
  %s17 = sld [smem:[%s16]]
  %s18 = scalar_lea.smem %s0, 9
  %s19 = sld [smem:[%s18]]
  %s20 = scalar_lea.smem %s0, 10
  %s21 = sld [smem:[%s20]]
  %s22 = scalar_lea.smem %s0, 11
  %s23 = sld [smem:[%s22]]
  %s24 = scalar_lea.smem %s0, 12
  %s25 = sld [smem:[%s24]]
  %s26 = scalar_lea.smem %s0, 13
  %s27 = sld [smem:[%s26]]
  %s28 = scalar_lea.smem %s0, 14
  %s29 = sld [smem:[%s28]]
  %s30 = scalar_lea.smem %s0, 15
  %s31 = sld [smem:[%s30]]
  %s32 = scalar_lea.smem %s0, 16
  %s33 = sld [smem:[%s32]]
  %s34 = scalar_lea.smem %s0, 17
  %s35 = sld [smem:[%s34]]
  %s36 = scalar_lea.smem %s0, 18
  %s37 = sld [smem:[%s36]]
  %s38 = scalar_lea.smem %s0, 19
  %s39 = sld [smem:[%s38]]
  %s40 = scalar_lea.smem %s0, 20
  %s41 = sld [smem:[%s40]]
  %s42 = scalar_lea.smem %s0, 21
  %s43 = sld [smem:[%s42]]
  %s44 = scalar_lea.smem %s0, 22
  %s45 = sld [smem:[%s44]]
  %s46 = scalar_lea.smem %s0, 23
  %s47 = sld [smem:[%s46]]
  %s48 = scalar_lea.smem %s0, 24
  %s49 = sld [smem:[%s48]]
  %s50 = scalar_lea.smem %s0, 25
  %s51 = sld [smem:[%s50]]
  %s52 = scalar_lea.smem %s0, 26
  %s53 = sld [smem:[%s52]]
  %s54 = scalar_lea.smem %s0, 27
  %s55 = sld [smem:[%s54]]
  %s56 = scalar_lea.smem %s0, 28
  %s57 = sld [smem:[%s56]]
  %s58 = scalar_lea.smem %s0, 29
  %s59 = sld [smem:[%s58]]
  %s60 = sld [smem:[#allocation0]]
  $region149: #{cpc_forward.2} parent=0
    _
  %s62 = ssub.s32 1, %s60
  %s63 = scalar_select 0, %s62, %s60
  loop: start=0, step=1, limit=4
  $region2: #{cpc_forward.2} parent=0 // loop_pre_header
    _
  $region3: #{cpc_forward.2} parent=0 // loop_header
    %s65 = sphi 0, %s69
    %p66 = scmp.ge.s32.totalorder %s65, 4
    %s75 = sphi 0, %s77
    %s78 = sphi 0, %s75
    %s79 = sphi 0, %s78
    %s95 = sphi 0, %s79
    %s99 = sphi 0, %s99
    %s101 = sphi 0, %s99
    %s102 = sphi 0, %s101
    %s116 = sphi 0, %s102
    %s120 = sphi 0, %s120
    %s122 = sphi 0, %s120
    %s123 = sphi 0, %s122
    %s137 = sphi 0, %s123
    %s141 = sphi 0, %s141
    %s143 = sphi 0, %s141
    %s144 = sphi 0, %s143
    %s158 = sphi 0, %s144
    %s162 = sphi 0, %s162
    %s164 = sphi 0, %s162
    %s165 = sphi 0, %s164
    %s179 = sphi 0, %s165
    %s183 = sphi 0, %s183
    %s185 = sphi 0, %s183
    %s186 = sphi 0, %s185
    %s200 = sphi 0, %s186
    %s204 = sphi 0, %s204
    %s206 = sphi 0, %s204
    %s207 = sphi 0, %s206
    %s221 = sphi 0, %s207
    %s225 = sphi 0, %s225
    %s227 = sphi 0, %s225
    %s228 = sphi 0, %s227
    %s242 = sphi 0, %s228
    %s246 = sphi 0, %s246
    %s248 = sphi 0, %s246
    %s249 = sphi 0, %s248
    %s263 = sphi 0, %s249
    %s267 = sphi 0, %s267
    %s269 = sphi 0, %s267
    %s270 = sphi 0, %s269
    %s284 = sphi 0, %s270
    %s288 = sphi 0, %s288
    %s290 = sphi 0, %s288
    %s291 = sphi 0, %s290
    %s305 = sphi 0, %s291
    %s309 = sphi 0, %s309
    %s311 = sphi 0, %s309
    %s312 = sphi 0, %s311
    %s326 = sphi 0, %s312
    %s330 = sphi 0, %s330
    %s332 = sphi 0, %s330
    %s333 = sphi 0, %s332
    %s347 = sphi 0, %s333
    %s351 = sphi 0, %s351
    %s353 = sphi 0, %s351
    %s354 = sphi 0, %s353
    %s368 = sphi 0, %s354
    %s372 = sphi 0, %s372
    %s374 = sphi 0, %s372
    %s375 = sphi 0, %s374
    %s389 = sphi 0, %s375
    %s393 = sphi 0, %s393
    %s395 = sphi 0, %s393
    %s396 = sphi 0, %s395
    %s410 = sphi 0, %s396
    %s414 = sphi 0, %s414
    %s416 = sphi 0, %s414
    %s417 = sphi 0, %s416
    %s431 = sphi 0, %s417
    %s435 = sphi 0, %s435
    %s437 = sphi 0, %s435
    %s438 = sphi 0, %s437
    %s452 = sphi 0, %s438
    %s456 = sphi 0, %s456
    %s458 = sphi 0, %s456
    %s459 = sphi 0, %s458
    %s473 = sphi 0, %s459
    %s477 = sphi 0, %s477
    %s479 = sphi 0, %s477
    %s480 = sphi 0, %s479
    %s494 = sphi 0, %s480
    %s498 = sphi 0, %s498
    %s500 = sphi 0, %s498
    %s501 = sphi 0, %s500
    %s515 = sphi 0, %s501
    %s519 = sphi 0, %s519
    %s521 = sphi 0, %s519
    %s522 = sphi 0, %s521
    %s536 = sphi 0, %s522
    %s540 = sphi 0, %s540
    %s542 = sphi 0, %s540
    %s543 = sphi 0, %s542
    %s557 = sphi 0, %s543
    %s561 = sphi 0, %s561
    %s563 = sphi 0, %s561
    %s564 = sphi 0, %s563
    %s578 = sphi 0, %s564
    %s582 = sphi 0, %s582
    %s584 = sphi 0, %s582
    %s585 = sphi 0, %s584
    %s599 = sphi 0, %s585
    %s603 = sphi 0, %s603
    %s605 = sphi 0, %s603
    %s606 = sphi 0, %s605
    %s620 = sphi 0, %s606
    %s624 = sphi 0, %s624
    %s626 = sphi 0, %s624
    %s627 = sphi 0, %s626
    %s641 = sphi 0, %s627
    %s645 = sphi 0, %s645
    %s647 = sphi 0, %s645
    %s648 = sphi 0, %s647
    %s662 = sphi 0, %s648
    %s666 = sphi 0, %s666
    %s668 = sphi 0, %s666
    %s669 = sphi 0, %s668
    %s683 = sphi 0, %s669
    %s689 = sphi 0, %s691
    %s692 = sphi 0, %s689
    %s693 = sphi 0, %s692
    %s709 = sphi 0, %s693
  $region4: #{cpc_forward.2} parent=0 // loop_header_branch
    %68 = sbr.rel (%p66) target = $region8
  $region5: #{cpc_forward.2} parent=0 // loop_body
    %s70 = ssub.s32 %s65, 1
    %s71 = ssub.s32 %s65, 2
    %s72 = sadd.s32 %s65, 1
    %s73 = ssub.s32 %s65, %s72
    %p74 = scmp.eq.s32.totalorder %s73, 0
    %s76 = sadd.s32 %s75, 1
    %s77 = scalar_select %p74, %s75, %s76
    %p80 = pneg %p74
    %p81 = scmp.eq.s32.totalorder %s65, 1
    %p82 = por %p80, %p81
    %p83 = scmp.ne.s32.totalorder %s75, %s78
    %p84 = scmp.eq.s32.totalorder %s65, 0
    %p85 = por %p83, %p84
    %p86 = scmp.ne.s32.totalorder %s75, %s78
    %p87 = scmp.eq.s32.totalorder %s70, 1
    %p88 = por %p86, %p87
    %p89 = scmp.ne.s32.totalorder %s78, %s79
    %p90 = scmp.eq.s32.totalorder %s70, 0
    %p91 = por %p89, %p90
    %p92 = scmp.ne.s32.totalorder %s78, %s79
    %p93 = scmp.eq.s32.totalorder %s71, 1
    %p94 = por %p92, %p93
    %p96 = scmp.ne.s32.totalorder %s79, %s95
    %p97 = scmp.eq.s32.totalorder %s71, 0
    %p98 = por %p96, %p97
    %s100 = sadd.s32 %s99, 1
    %p103 = scmp.eq.s32.totalorder %s65, 1
    %p104 = scmp.ne.s32.totalorder %s99, %s101
    %p105 = scmp.eq.s32.totalorder %s65, 0
    %p106 = por %p104, %p105
    %p107 = scmp.ne.s32.totalorder %s99, %s101
    %p108 = scmp.eq.s32.totalorder %s70, 1
    %p109 = por %p107, %p108
    %p110 = scmp.ne.s32.totalorder %s101, %s102
    %p111 = scmp.eq.s32.totalorder %s70, 0
    %p112 = por %p110, %p111
    %p113 = scmp.ne.s32.totalorder %s101, %s102
    %p114 = scmp.eq.s32.totalorder %s71, 1
    %p115 = por %p113, %p114
    %p117 = scmp.ne.s32.totalorder %s102, %s116
    %p118 = scmp.eq.s32.totalorder %s71, 0
    %p119 = por %p117, %p118
    %s121 = sadd.s32 %s120, 1
    %p124 = scmp.eq.s32.totalorder %s65, 1
    %p125 = scmp.ne.s32.totalorder %s120, %s122
    %p126 = scmp.eq.s32.totalorder %s65, 0
    %p127 = por %p125, %p126
    %p128 = scmp.ne.s32.totalorder %s120, %s122
    %p129 = scmp.eq.s32.totalorder %s70, 1
    %p130 = por %p128, %p129
    %p131 = scmp.ne.s32.totalorder %s122, %s123
    %p132 = scmp.eq.s32.totalorder %s70, 0
    %p133 = por %p131, %p132
    %p134 = scmp.ne.s32.totalorder %s122, %s123
    %p135 = scmp.eq.s32.totalorder %s71, 1
    %p136 = por %p134, %p135
    %p138 = scmp.ne.s32.totalorder %s123, %s137
    %p139 = scmp.eq.s32.totalorder %s71, 0
    %p140 = por %p138, %p139
    %s142 = sadd.s32 %s141, 1
    %p145 = scmp.eq.s32.totalorder %s65, 1
    %p146 = scmp.ne.s32.totalorder %s141, %s143
    %p147 = scmp.eq.s32.totalorder %s65, 0
    %p148 = por %p146, %p147
    %p149 = scmp.ne.s32.totalorder %s141, %s143
    %p150 = scmp.eq.s32.totalorder %s70, 1
    %p151 = por %p149, %p150
    %p152 = scmp.ne.s32.totalorder %s143, %s144
    %p153 = scmp.eq.s32.totalorder %s70, 0
    %p154 = por %p152, %p153
    %p155 = scmp.ne.s32.totalorder %s143, %s144
    %p156 = scmp.eq.s32.totalorder %s71, 1
    %p157 = por %p155, %p156
    %p159 = scmp.ne.s32.totalorder %s144, %s158
    %p160 = scmp.eq.s32.totalorder %s71, 0
    %p161 = por %p159, %p160
    %s163 = sadd.s32 %s162, 1
    %p166 = scmp.eq.s32.totalorder %s65, 1
    %p167 = scmp.ne.s32.totalorder %s162, %s164
    %p168 = scmp.eq.s32.totalorder %s65, 0
    %p169 = por %p167, %p168
    %p170 = scmp.ne.s32.totalorder %s162, %s164
    %p171 = scmp.eq.s32.totalorder %s70, 1
    %p172 = por %p170, %p171
    %p173 = scmp.ne.s32.totalorder %s164, %s165
    %p174 = scmp.eq.s32.totalorder %s70, 0
    %p175 = por %p173, %p174
    %p176 = scmp.ne.s32.totalorder %s164, %s165
    %p177 = scmp.eq.s32.totalorder %s71, 1
    %p178 = por %p176, %p177
    %p180 = scmp.ne.s32.totalorder %s165, %s179
    %p181 = scmp.eq.s32.totalorder %s71, 0
    %p182 = por %p180, %p181
    %s184 = sadd.s32 %s183, 1
    %p187 = scmp.eq.s32.totalorder %s65, 1
    %p188 = scmp.ne.s32.totalorder %s183, %s185
    %p189 = scmp.eq.s32.totalorder %s65, 0
    %p190 = por %p188, %p189
    %p191 = scmp.ne.s32.totalorder %s183, %s185
    %p192 = scmp.eq.s32.totalorder %s70, 1
    %p193 = por %p191, %p192
    %p194 = scmp.ne.s32.totalorder %s185, %s186
    %p195 = scmp.eq.s32.totalorder %s70, 0
    %p196 = por %p194, %p195
    %p197 = scmp.ne.s32.totalorder %s185, %s186
    %p198 = scmp.eq.s32.totalorder %s71, 1
    %p199 = por %p197, %p198
    %p201 = scmp.ne.s32.totalorder %s186, %s200
    %p202 = scmp.eq.s32.totalorder %s71, 0
    %p203 = por %p201, %p202
    %s205 = sadd.s32 %s204, 1
    %p208 = scmp.eq.s32.totalorder %s65, 1
    %p209 = scmp.ne.s32.totalorder %s204, %s206
    %p210 = scmp.eq.s32.totalorder %s65, 0
    %p211 = por %p209, %p210
    %p212 = scmp.ne.s32.totalorder %s204, %s206
    %p213 = scmp.eq.s32.totalorder %s70, 1
    %p214 = por %p212, %p213
    %p215 = scmp.ne.s32.totalorder %s206, %s207
    %p216 = scmp.eq.s32.totalorder %s70, 0
    %p217 = por %p215, %p216
    %p218 = scmp.ne.s32.totalorder %s206, %s207
    %p219 = scmp.eq.s32.totalorder %s71, 1
    %p220 = por %p218, %p219
    %p222 = scmp.ne.s32.totalorder %s207, %s221
    %p223 = scmp.eq.s32.totalorder %s71, 0
    %p224 = por %p222, %p223
    %s226 = sadd.s32 %s225, 1
    %p229 = scmp.eq.s32.totalorder %s65, 1
    %p230 = scmp.ne.s32.totalorder %s225, %s227
    %p231 = scmp.eq.s32.totalorder %s65, 0
    %p232 = por %p230, %p231
    %p233 = scmp.ne.s32.totalorder %s225, %s227
    %p234 = scmp.eq.s32.totalorder %s70, 1
    %p235 = por %p233, %p234
    %p236 = scmp.ne.s32.totalorder %s227, %s228
    %p237 = scmp.eq.s32.totalorder %s70, 0
    %p238 = por %p236, %p237
    %p239 = scmp.ne.s32.totalorder %s227, %s228
    %p240 = scmp.eq.s32.totalorder %s71, 1
    %p241 = por %p239, %p240
    %p243 = scmp.ne.s32.totalorder %s228, %s242
    %p244 = scmp.eq.s32.totalorder %s71, 0
    %p245 = por %p243, %p244
    %s247 = sadd.s32 %s246, 1
    %p250 = scmp.eq.s32.totalorder %s65, 1
    %p251 = scmp.ne.s32.totalorder %s246, %s248
    %p252 = scmp.eq.s32.totalorder %s65, 0
    %p253 = por %p251, %p252
    %p254 = scmp.ne.s32.totalorder %s246, %s248
    %p255 = scmp.eq.s32.totalorder %s70, 1
    %p256 = por %p254, %p255
    %p257 = scmp.ne.s32.totalorder %s248, %s249
    %p258 = scmp.eq.s32.totalorder %s70, 0
    %p259 = por %p257, %p258
    %p260 = scmp.ne.s32.totalorder %s248, %s249
    %p261 = scmp.eq.s32.totalorder %s71, 1
    %p262 = por %p260, %p261
    %p264 = scmp.ne.s32.totalorder %s249, %s263
    %p265 = scmp.eq.s32.totalorder %s71, 0
    %p266 = por %p264, %p265
    %s268 = sadd.s32 %s267, 1
    %p271 = scmp.eq.s32.totalorder %s65, 1
    %p272 = scmp.ne.s32.totalorder %s267, %s269
    %p273 = scmp.eq.s32.totalorder %s65, 0
    %p274 = por %p272, %p273
    %p275 = scmp.ne.s32.totalorder %s267, %s269
    %p276 = scmp.eq.s32.totalorder %s70, 1
    %p277 = por %p275, %p276
    %p278 = scmp.ne.s32.totalorder %s269, %s270
    %p279 = scmp.eq.s32.totalorder %s70, 0
    %p280 = por %p278, %p279
    %p281 = scmp.ne.s32.totalorder %s269, %s270
    %p282 = scmp.eq.s32.totalorder %s71, 1
    %p283 = por %p281, %p282
    %p285 = scmp.ne.s32.totalorder %s270, %s284
    %p286 = scmp.eq.s32.totalorder %s71, 0
    %p287 = por %p285, %p286
    %s289 = sadd.s32 %s288, 1
    %p292 = scmp.eq.s32.totalorder %s65, 1
    %p293 = scmp.ne.s32.totalorder %s288, %s290
    %p294 = scmp.eq.s32.totalorder %s65, 0
    %p295 = por %p293, %p294
    %p296 = scmp.ne.s32.totalorder %s288, %s290
    %p297 = scmp.eq.s32.totalorder %s70, 1
    %p298 = por %p296, %p297
    %p299 = scmp.ne.s32.totalorder %s290, %s291
    %p300 = scmp.eq.s32.totalorder %s70, 0
    %p301 = por %p299, %p300
    %p302 = scmp.ne.s32.totalorder %s290, %s291
    %p303 = scmp.eq.s32.totalorder %s71, 1
    %p304 = por %p302, %p303
    %p306 = scmp.ne.s32.totalorder %s291, %s305
    %p307 = scmp.eq.s32.totalorder %s71, 0
    %p308 = por %p306, %p307
    %s310 = sadd.s32 %s309, 1
    %p313 = scmp.eq.s32.totalorder %s65, 1
    %p314 = scmp.ne.s32.totalorder %s309, %s311
    %p315 = scmp.eq.s32.totalorder %s65, 0
    %p316 = por %p314, %p315
    %p317 = scmp.ne.s32.totalorder %s309, %s311
    %p318 = scmp.eq.s32.totalorder %s70, 1
    %p319 = por %p317, %p318
    %p320 = scmp.ne.s32.totalorder %s311, %s312
    %p321 = scmp.eq.s32.totalorder %s70, 0
    %p322 = por %p320, %p321
    %p323 = scmp.ne.s32.totalorder %s311, %s312
    %p324 = scmp.eq.s32.totalorder %s71, 1
    %p325 = por %p323, %p324
    %p327 = scmp.ne.s32.totalorder %s312, %s326
    %p328 = scmp.eq.s32.totalorder %s71, 0
    %p329 = por %p327, %p328
    %s331 = sadd.s32 %s330, 1
    %p334 = scmp.eq.s32.totalorder %s65, 1
    %p335 = scmp.ne.s32.totalorder %s330, %s332
    %p336 = scmp.eq.s32.totalorder %s65, 0
    %p337 = por %p335, %p336
    %p338 = scmp.ne.s32.totalorder %s330, %s332
    %p339 = scmp.eq.s32.totalorder %s70, 1
    %p340 = por %p338, %p339
    %p341 = scmp.ne.s32.totalorder %s332, %s333
    %p342 = scmp.eq.s32.totalorder %s70, 0
    %p343 = por %p341, %p342
    %p344 = scmp.ne.s32.totalorder %s332, %s333
    %p345 = scmp.eq.s32.totalorder %s71, 1
    %p346 = por %p344, %p345
    %p348 = scmp.ne.s32.totalorder %s333, %s347
    %p349 = scmp.eq.s32.totalorder %s71, 0
    %p350 = por %p348, %p349
    %s352 = sadd.s32 %s351, 1
    %p355 = scmp.eq.s32.totalorder %s65, 1
    %p356 = scmp.ne.s32.totalorder %s351, %s353
    %p357 = scmp.eq.s32.totalorder %s65, 0
    %p358 = por %p356, %p357
    %p359 = scmp.ne.s32.totalorder %s351, %s353
    %p360 = scmp.eq.s32.totalorder %s70, 1
    %p361 = por %p359, %p360
    %p362 = scmp.ne.s32.totalorder %s353, %s354
    %p363 = scmp.eq.s32.totalorder %s70, 0
    %p364 = por %p362, %p363
    %p365 = scmp.ne.s32.totalorder %s353, %s354
    %p366 = scmp.eq.s32.totalorder %s71, 1
    %p367 = por %p365, %p366
    %p369 = scmp.ne.s32.totalorder %s354, %s368
    %p370 = scmp.eq.s32.totalorder %s71, 0
    %p371 = por %p369, %p370
    %s373 = sadd.s32 %s372, 1
    %p376 = scmp.eq.s32.totalorder %s65, 1
    %p377 = scmp.ne.s32.totalorder %s372, %s374
    %p378 = scmp.eq.s32.totalorder %s65, 0
    %p379 = por %p377, %p378
    %p380 = scmp.ne.s32.totalorder %s372, %s374
    %p381 = scmp.eq.s32.totalorder %s70, 1
    %p382 = por %p380, %p381
    %p383 = scmp.ne.s32.totalorder %s374, %s375
    %p384 = scmp.eq.s32.totalorder %s70, 0
    %p385 = por %p383, %p384
    %p386 = scmp.ne.s32.totalorder %s374, %s375
    %p387 = scmp.eq.s32.totalorder %s71, 1
    %p388 = por %p386, %p387
    %p390 = scmp.ne.s32.totalorder %s375, %s389
    %p391 = scmp.eq.s32.totalorder %s71, 0
    %p392 = por %p390, %p391
    %s394 = sadd.s32 %s393, 1
    %p397 = scmp.eq.s32.totalorder %s65, 1
    %p398 = scmp.ne.s32.totalorder %s393, %s395
    %p399 = scmp.eq.s32.totalorder %s65, 0
    %p400 = por %p398, %p399
    %p401 = scmp.ne.s32.totalorder %s393, %s395
    %p402 = scmp.eq.s32.totalorder %s70, 1
    %p403 = por %p401, %p402
    %p404 = scmp.ne.s32.totalorder %s395, %s396
    %p405 = scmp.eq.s32.totalorder %s70, 0
    %p406 = por %p404, %p405
    %p407 = scmp.ne.s32.totalorder %s395, %s396
    %p408 = scmp.eq.s32.totalorder %s71, 1
    %p409 = por %p407, %p408
    %p411 = scmp.ne.s32.totalorder %s396, %s410
    %p412 = scmp.eq.s32.totalorder %s71, 0
    %p413 = por %p411, %p412
    %s415 = sadd.s32 %s414, 1
    %p418 = scmp.eq.s32.totalorder %s65, 1
    %p419 = scmp.ne.s32.totalorder %s414, %s416
    %p420 = scmp.eq.s32.totalorder %s65, 0
    %p421 = por %p419, %p420
    %p422 = scmp.ne.s32.totalorder %s414, %s416
    %p423 = scmp.eq.s32.totalorder %s70, 1
    %p424 = por %p422, %p423
    %p425 = scmp.ne.s32.totalorder %s416, %s417
    %p426 = scmp.eq.s32.totalorder %s70, 0
    %p427 = por %p425, %p426
    %p428 = scmp.ne.s32.totalorder %s416, %s417
    %p429 = scmp.eq.s32.totalorder %s71, 1
    %p430 = por %p428, %p429
    %p432 = scmp.ne.s32.totalorder %s417, %s431
    %p433 = scmp.eq.s32.totalorder %s71, 0
    %p434 = por %p432, %p433
    %s436 = sadd.s32 %s435, 1
    %p439 = scmp.eq.s32.totalorder %s65, 1
    %p440 = scmp.ne.s32.totalorder %s435, %s437
    %p441 = scmp.eq.s32.totalorder %s65, 0
    %p442 = por %p440, %p441
    %p443 = scmp.ne.s32.totalorder %s435, %s437
    %p444 = scmp.eq.s32.totalorder %s70, 1
    %p445 = por %p443, %p444
    %p446 = scmp.ne.s32.totalorder %s437, %s438
    %p447 = scmp.eq.s32.totalorder %s70, 0
    %p448 = por %p446, %p447
    %p449 = scmp.ne.s32.totalorder %s437, %s438
    %p450 = scmp.eq.s32.totalorder %s71, 1
    %p451 = por %p449, %p450
    %p453 = scmp.ne.s32.totalorder %s438, %s452
    %p454 = scmp.eq.s32.totalorder %s71, 0
    %p455 = por %p453, %p454
    %s457 = sadd.s32 %s456, 1
    %p460 = scmp.eq.s32.totalorder %s65, 1
    %p461 = scmp.ne.s32.totalorder %s456, %s458
    %p462 = scmp.eq.s32.totalorder %s65, 0
    %p463 = por %p461, %p462
    %p464 = scmp.ne.s32.totalorder %s456, %s458
    %p465 = scmp.eq.s32.totalorder %s70, 1
    %p466 = por %p464, %p465
    %p467 = scmp.ne.s32.totalorder %s458, %s459
    %p468 = scmp.eq.s32.totalorder %s70, 0
    %p469 = por %p467, %p468
    %p470 = scmp.ne.s32.totalorder %s458, %s459
    %p471 = scmp.eq.s32.totalorder %s71, 1
    %p472 = por %p470, %p471
    %p474 = scmp.ne.s32.totalorder %s459, %s473
    %p475 = scmp.eq.s32.totalorder %s71, 0
    %p476 = por %p474, %p475
    %s478 = sadd.s32 %s477, 1
    %p481 = scmp.eq.s32.totalorder %s65, 1
    %p482 = scmp.ne.s32.totalorder %s477, %s479
    %p483 = scmp.eq.s32.totalorder %s65, 0
    %p484 = por %p482, %p483
    %p485 = scmp.ne.s32.totalorder %s477, %s479
    %p486 = scmp.eq.s32.totalorder %s70, 1
    %p487 = por %p485, %p486
    %p488 = scmp.ne.s32.totalorder %s479, %s480
    %p489 = scmp.eq.s32.totalorder %s70, 0
    %p490 = por %p488, %p489
    %p491 = scmp.ne.s32.totalorder %s479, %s480
    %p492 = scmp.eq.s32.totalorder %s71, 1
    %p493 = por %p491, %p492
    %p495 = scmp.ne.s32.totalorder %s480, %s494
    %p496 = scmp.eq.s32.totalorder %s71, 0
    %p497 = por %p495, %p496
    %s499 = sadd.s32 %s498, 1
    %p502 = scmp.eq.s32.totalorder %s65, 1
    %p503 = scmp.ne.s32.totalorder %s498, %s500
    %p504 = scmp.eq.s32.totalorder %s65, 0
    %p505 = por %p503, %p504
    %p506 = scmp.ne.s32.totalorder %s498, %s500
    %p507 = scmp.eq.s32.totalorder %s70, 1
    %p508 = por %p506, %p507
    %p509 = scmp.ne.s32.totalorder %s500, %s501
    %p510 = scmp.eq.s32.totalorder %s70, 0
    %p511 = por %p509, %p510
    %p512 = scmp.ne.s32.totalorder %s500, %s501
    %p513 = scmp.eq.s32.totalorder %s71, 1
    %p514 = por %p512, %p513
    %p516 = scmp.ne.s32.totalorder %s501, %s515
    %p517 = scmp.eq.s32.totalorder %s71, 0
    %p518 = por %p516, %p517
    %s520 = sadd.s32 %s519, 1
    %p523 = scmp.eq.s32.totalorder %s65, 1
    %p524 = scmp.ne.s32.totalorder %s519, %s521
    %p525 = scmp.eq.s32.totalorder %s65, 0
    %p526 = por %p524, %p525
    %p527 = scmp.ne.s32.totalorder %s519, %s521
    %p528 = scmp.eq.s32.totalorder %s70, 1
    %p529 = por %p527, %p528
    %p530 = scmp.ne.s32.totalorder %s521, %s522
    %p531 = scmp.eq.s32.totalorder %s70, 0
    %p532 = por %p530, %p531
    %p533 = scmp.ne.s32.totalorder %s521, %s522
    %p534 = scmp.eq.s32.totalorder %s71, 1
    %p535 = por %p533, %p534
    %p537 = scmp.ne.s32.totalorder %s522, %s536
    %p538 = scmp.eq.s32.totalorder %s71, 0
    %p539 = por %p537, %p538
    %s541 = sadd.s32 %s540, 1
    %p544 = scmp.eq.s32.totalorder %s65, 1
    %p545 = scmp.ne.s32.totalorder %s540, %s542
    %p546 = scmp.eq.s32.totalorder %s65, 0
    %p547 = por %p545, %p546
    %p548 = scmp.ne.s32.totalorder %s540, %s542
    %p549 = scmp.eq.s32.totalorder %s70, 1
    %p550 = por %p548, %p549
    %p551 = scmp.ne.s32.totalorder %s542, %s543
    %p552 = scmp.eq.s32.totalorder %s70, 0
    %p553 = por %p551, %p552
    %p554 = scmp.ne.s32.totalorder %s542, %s543
    %p555 = scmp.eq.s32.totalorder %s71, 1
    %p556 = por %p554, %p555
    %p558 = scmp.ne.s32.totalorder %s543, %s557
    %p559 = scmp.eq.s32.totalorder %s71, 0
    %p560 = por %p558, %p559
    %s562 = sadd.s32 %s561, 1
    %p565 = scmp.eq.s32.totalorder %s65, 1
    %p566 = scmp.ne.s32.totalorder %s561, %s563
    %p567 = scmp.eq.s32.totalorder %s65, 0
    %p568 = por %p566, %p567
    %p569 = scmp.ne.s32.totalorder %s561, %s563
    %p570 = scmp.eq.s32.totalorder %s70, 1
    %p571 = por %p569, %p570
    %p572 = scmp.ne.s32.totalorder %s563, %s564
    %p573 = scmp.eq.s32.totalorder %s70, 0
    %p574 = por %p572, %p573
    %p575 = scmp.ne.s32.totalorder %s563, %s564
    %p576 = scmp.eq.s32.totalorder %s71, 1
    %p577 = por %p575, %p576
    %p579 = scmp.ne.s32.totalorder %s564, %s578
    %p580 = scmp.eq.s32.totalorder %s71, 0
    %p581 = por %p579, %p580
    %s583 = sadd.s32 %s582, 1
    %p586 = scmp.eq.s32.totalorder %s65, 1
    %p587 = scmp.ne.s32.totalorder %s582, %s584
    %p588 = scmp.eq.s32.totalorder %s65, 0
    %p589 = por %p587, %p588
    %p590 = scmp.ne.s32.totalorder %s582, %s584
    %p591 = scmp.eq.s32.totalorder %s70, 1
    %p592 = por %p590, %p591
    %p593 = scmp.ne.s32.totalorder %s584, %s585
    %p594 = scmp.eq.s32.totalorder %s70, 0
    %p595 = por %p593, %p594
    %p596 = scmp.ne.s32.totalorder %s584, %s585
    %p597 = scmp.eq.s32.totalorder %s71, 1
    %p598 = por %p596, %p597
    %p600 = scmp.ne.s32.totalorder %s585, %s599
    %p601 = scmp.eq.s32.totalorder %s71, 0
    %p602 = por %p600, %p601
    %s604 = sadd.s32 %s603, 1
    %p607 = scmp.eq.s32.totalorder %s65, 1
    %p608 = scmp.ne.s32.totalorder %s603, %s605
    %p609 = scmp.eq.s32.totalorder %s65, 0
    %p610 = por %p608, %p609
    %p611 = scmp.ne.s32.totalorder %s603, %s605
    %p612 = scmp.eq.s32.totalorder %s70, 1
    %p613 = por %p611, %p612
    %p614 = scmp.ne.s32.totalorder %s605, %s606
    %p615 = scmp.eq.s32.totalorder %s70, 0
    %p616 = por %p614, %p615
    %p617 = scmp.ne.s32.totalorder %s605, %s606
    %p618 = scmp.eq.s32.totalorder %s71, 1
    %p619 = por %p617, %p618
    %p621 = scmp.ne.s32.totalorder %s606, %s620
    %p622 = scmp.eq.s32.totalorder %s71, 0
    %p623 = por %p621, %p622
    %s625 = sadd.s32 %s624, 1
    %p628 = scmp.eq.s32.totalorder %s65, 1
    %p629 = scmp.ne.s32.totalorder %s624, %s626
    %p630 = scmp.eq.s32.totalorder %s65, 0
    %p631 = por %p629, %p630
    %p632 = scmp.ne.s32.totalorder %s624, %s626
    %p633 = scmp.eq.s32.totalorder %s70, 1
    %p634 = por %p632, %p633
    %p635 = scmp.ne.s32.totalorder %s626, %s627
    %p636 = scmp.eq.s32.totalorder %s70, 0
    %p637 = por %p635, %p636
    %p638 = scmp.ne.s32.totalorder %s626, %s627
    %p639 = scmp.eq.s32.totalorder %s71, 1
    %p640 = por %p638, %p639
    %p642 = scmp.ne.s32.totalorder %s627, %s641
    %p643 = scmp.eq.s32.totalorder %s71, 0
    %p644 = por %p642, %p643
    %s646 = sadd.s32 %s645, 1
    %p649 = scmp.eq.s32.totalorder %s65, 1
    %p650 = scmp.ne.s32.totalorder %s645, %s647
    %p651 = scmp.eq.s32.totalorder %s65, 0
    %p652 = por %p650, %p651
    %p653 = scmp.ne.s32.totalorder %s645, %s647
    %p654 = scmp.eq.s32.totalorder %s70, 1
    %p655 = por %p653, %p654
    %p656 = scmp.ne.s32.totalorder %s647, %s648
    %p657 = scmp.eq.s32.totalorder %s70, 0
    %p658 = por %p656, %p657
    %p659 = scmp.ne.s32.totalorder %s647, %s648
    %p660 = scmp.eq.s32.totalorder %s71, 1
    %p661 = por %p659, %p660
    %p663 = scmp.ne.s32.totalorder %s648, %s662
    %p664 = scmp.eq.s32.totalorder %s71, 0
    %p665 = por %p663, %p664
    %s667 = sadd.s32 %s666, 1
    %p670 = scmp.eq.s32.totalorder %s65, 1
    %p671 = scmp.ne.s32.totalorder %s666, %s668
    %p672 = scmp.eq.s32.totalorder %s65, 0
    %p673 = por %p671, %p672
    %p674 = scmp.ne.s32.totalorder %s666, %s668
    %p675 = scmp.eq.s32.totalorder %s70, 1
    %p676 = por %p674, %p675
    %p677 = scmp.ne.s32.totalorder %s668, %s669
    %p678 = scmp.eq.s32.totalorder %s70, 0
    %p679 = por %p677, %p678
    %p680 = scmp.ne.s32.totalorder %s668, %s669
    %p681 = scmp.eq.s32.totalorder %s71, 1
    %p682 = por %p680, %p681
    %p684 = scmp.ne.s32.totalorder %s669, %s683
    %p685 = scmp.eq.s32.totalorder %s71, 0
    %p686 = por %p684, %p685
    %s687 = ssub.s32 %s65, %s72
    %p688 = scmp.eq.s32.totalorder %s687, 0
    %s690 = sadd.s32 %s689, 1
    %s691 = scalar_select %p688, %s689, %s690
    %p694 = pneg %p688
    %p695 = scmp.eq.s32.totalorder %s65, 1
    %p696 = por %p694, %p695
    %p697 = scmp.ne.s32.totalorder %s689, %s692
    %p698 = scmp.eq.s32.totalorder %s65, 0
    %p699 = por %p697, %p698
    %p700 = scmp.ne.s32.totalorder %s689, %s692
    %p701 = scmp.eq.s32.totalorder %s70, 1
    %p702 = por %p700, %p701
    %p703 = scmp.ne.s32.totalorder %s692, %s693
    %p704 = scmp.eq.s32.totalorder %s70, 0
    %p705 = por %p703, %p704
    %p706 = scmp.ne.s32.totalorder %s692, %s693
    %p707 = scmp.eq.s32.totalorder %s71, 1
    %p708 = por %p706, %p707
    %p710 = scmp.ne.s32.totalorder %s693, %s709
    %p711 = scmp.eq.s32.totalorder %s71, 0
    %p712 = por %p710, %p711
    %p713 = scmp.le.s32.totalorder 1, %s65
    %p714 = scmp.lt.s32.totalorder %s65, 3
    %p715 = pnand %p713, %p714
    %p716 = pneg %p715
    // Predicated region
    $region9: #{cpc_forward.2} parent=5 // pred_check
      _
    $region10: #{cpc_forward.2} parent=5 // pred_check_branch
      %718 = sbr.rel (%p715) target = $region12
    $region11: #{cpc_forward.2} parent=5 // pred_region
      %s719 = ssub.s32 %s65, 1
      // Predicated region
      $region13: #{cpc_forward.2} parent=11 // pred_check
        %p720 = pneg %p112
      $region14: #{cpc_forward.2} parent=11 // pred_check_branch
        %722 = sbr.rel (%p720) target = $region16
      $region15: #{cpc_forward.2} parent=11 // pred_region
        _
      $region16: #{cpc_forward.2} parent=11 // pred_fallthru
        _
      // Predicated region
      $region17: #{cpc_forward.2} parent=11 // pred_check
        %p723 = pneg %p133
      $region18: #{cpc_forward.2} parent=11 // pred_check_branch
        %725 = sbr.rel (%p723) target = $region20
      $region19: #{cpc_forward.2} parent=11 // pred_region
        _
      $region20: #{cpc_forward.2} parent=11 // pred_fallthru
        _
      // Predicated region
      $region21: #{cpc_forward.2} parent=11 // pred_check
        %p726 = pneg %p154
      $region22: #{cpc_forward.2} parent=11 // pred_check_branch
        %728 = sbr.rel (%p726) target = $region24
      $region23: #{cpc_forward.2} parent=11 // pred_region
        _
      $region24: #{cpc_forward.2} parent=11 // pred_fallthru
        _
      // Predicated region
      $region25: #{cpc_forward.2} parent=11 // pred_check
        %p729 = pneg %p175
      $region26: #{cpc_forward.2} parent=11 // pred_check_branch
        %731 = sbr.rel (%p729) target = $region28
      $region27: #{cpc_forward.2} parent=11 // pred_region
        _
      $region28: #{cpc_forward.2} parent=11 // pred_fallthru
        _
      // Predicated region
      $region29: #{cpc_forward.2} parent=11 // pred_check
        %p732 = pneg %p196
      $region30: #{cpc_forward.2} parent=11 // pred_check_branch
        %734 = sbr.rel (%p732) target = $region32
      $region31: #{cpc_forward.2} parent=11 // pred_region
        _
      $region32: #{cpc_forward.2} parent=11 // pred_fallthru
        _
      // Predicated region
      $region33: #{cpc_forward.2} parent=11 // pred_check
        %p735 = pneg %p217
      $region34: #{cpc_forward.2} parent=11 // pred_check_branch
        %737 = sbr.rel (%p735) target = $region36
      $region35: #{cpc_forward.2} parent=11 // pred_region
        _
      $region36: #{cpc_forward.2} parent=11 // pred_fallthru
        _
      // Predicated region
      $region37: #{cpc_forward.2} parent=11 // pred_check
        %p738 = pneg %p238
      $region38: #{cpc_forward.2} parent=11 // pred_check_branch
        %740 = sbr.rel (%p738) target = $region40
      $region39: #{cpc_forward.2} parent=11 // pred_region
        _
      $region40: #{cpc_forward.2} parent=11 // pred_fallthru
        _
      // Predicated region
      $region41: #{cpc_forward.2} parent=11 // pred_check
        %p741 = pneg %p259
      $region42: #{cpc_forward.2} parent=11 // pred_check_branch
        %743 = sbr.rel (%p741) target = $region44
      $region43: #{cpc_forward.2} parent=11 // pred_region
        _
      $region44: #{cpc_forward.2} parent=11 // pred_fallthru
        _
      // Predicated region
      $region45: #{cpc_forward.2} parent=11 // pred_check
        %p744 = pneg %p280
      $region46: #{cpc_forward.2} parent=11 // pred_check_branch
        %746 = sbr.rel (%p744) target = $region48
      $region47: #{cpc_forward.2} parent=11 // pred_region
        _
      $region48: #{cpc_forward.2} parent=11 // pred_fallthru
        _
      // Predicated region
      $region49: #{cpc_forward.2} parent=11 // pred_check
        %p747 = pneg %p301
      $region50: #{cpc_forward.2} parent=11 // pred_check_branch
        %749 = sbr.rel (%p747) target = $region52
      $region51: #{cpc_forward.2} parent=11 // pred_region
        _
      $region52: #{cpc_forward.2} parent=11 // pred_fallthru
        _
      // Predicated region
      $region53: #{cpc_forward.2} parent=11 // pred_check
        %p750 = pneg %p322
      $region54: #{cpc_forward.2} parent=11 // pred_check_branch
        %752 = sbr.rel (%p750) target = $region56
      $region55: #{cpc_forward.2} parent=11 // pred_region
        _
      $region56: #{cpc_forward.2} parent=11 // pred_fallthru
        _
      // Predicated region
      $region57: #{cpc_forward.2} parent=11 // pred_check
        %p753 = pneg %p343
      $region58: #{cpc_forward.2} parent=11 // pred_check_branch
        %755 = sbr.rel (%p753) target = $region60
      $region59: #{cpc_forward.2} parent=11 // pred_region
        _
      $region60: #{cpc_forward.2} parent=11 // pred_fallthru
        _
      // Predicated region
      $region61: #{cpc_forward.2} parent=11 // pred_check
        %p756 = pneg %p364
      $region62: #{cpc_forward.2} parent=11 // pred_check_branch
        %758 = sbr.rel (%p756) target = $region64
      $region63: #{cpc_forward.2} parent=11 // pred_region
        _
      $region64: #{cpc_forward.2} parent=11 // pred_fallthru
        _
      // Predicated region
      $region65: #{cpc_forward.2} parent=11 // pred_check
        %p759 = pneg %p385
      $region66: #{cpc_forward.2} parent=11 // pred_check_branch
        %761 = sbr.rel (%p759) target = $region68
      $region67: #{cpc_forward.2} parent=11 // pred_region
        _
      $region68: #{cpc_forward.2} parent=11 // pred_fallthru
        _
      // Predicated region
      $region69: #{cpc_forward.2} parent=11 // pred_check
        %p762 = pneg %p406
      $region70: #{cpc_forward.2} parent=11 // pred_check_branch
        %764 = sbr.rel (%p762) target = $region72
      $region71: #{cpc_forward.2} parent=11 // pred_region
        _
      $region72: #{cpc_forward.2} parent=11 // pred_fallthru
        _
      // Predicated region
      $region73: #{cpc_forward.2} parent=11 // pred_check
        %p765 = pneg %p427
      $region74: #{cpc_forward.2} parent=11 // pred_check_branch
        %767 = sbr.rel (%p765) target = $region76
      $region75: #{cpc_forward.2} parent=11 // pred_region
        _
      $region76: #{cpc_forward.2} parent=11 // pred_fallthru
        _
      // Predicated region
      $region77: #{cpc_forward.2} parent=11 // pred_check
        %p768 = pneg %p448
      $region78: #{cpc_forward.2} parent=11 // pred_check_branch
        %770 = sbr.rel (%p768) target = $region80
      $region79: #{cpc_forward.2} parent=11 // pred_region
        _
      $region80: #{cpc_forward.2} parent=11 // pred_fallthru
        _
      // Predicated region
      $region81: #{cpc_forward.2} parent=11 // pred_check
        %p771 = pneg %p469
      $region82: #{cpc_forward.2} parent=11 // pred_check_branch
        %773 = sbr.rel (%p771) target = $region84
      $region83: #{cpc_forward.2} parent=11 // pred_region
        _
      $region84: #{cpc_forward.2} parent=11 // pred_fallthru
        _
      // Predicated region
      $region85: #{cpc_forward.2} parent=11 // pred_check
        %p774 = pneg %p490
      $region86: #{cpc_forward.2} parent=11 // pred_check_branch
        %776 = sbr.rel (%p774) target = $region88
      $region87: #{cpc_forward.2} parent=11 // pred_region
        _
      $region88: #{cpc_forward.2} parent=11 // pred_fallthru
        _
      // Predicated region
      $region89: #{cpc_forward.2} parent=11 // pred_check
        %p777 = pneg %p511
      $region90: #{cpc_forward.2} parent=11 // pred_check_branch
        %779 = sbr.rel (%p777) target = $region92
      $region91: #{cpc_forward.2} parent=11 // pred_region
        _
      $region92: #{cpc_forward.2} parent=11 // pred_fallthru
        _
      // Predicated region
      $region93: #{cpc_forward.2} parent=11 // pred_check
        %p780 = pneg %p532
      $region94: #{cpc_forward.2} parent=11 // pred_check_branch
        %782 = sbr.rel (%p780) target = $region96
      $region95: #{cpc_forward.2} parent=11 // pred_region
        _
      $region96: #{cpc_forward.2} parent=11 // pred_fallthru
        _
      // Predicated region
      $region97: #{cpc_forward.2} parent=11 // pred_check
        %p783 = pneg %p553
      $region98: #{cpc_forward.2} parent=11 // pred_check_branch
        %785 = sbr.rel (%p783) target = $region100
      $region99: #{cpc_forward.2} parent=11 // pred_region
        _
      $region100: #{cpc_forward.2} parent=11 // pred_fallthru
        _
      // Predicated region
      $region101: #{cpc_forward.2} parent=11 // pred_check
        %p786 = pneg %p574
      $region102: #{cpc_forward.2} parent=11 // pred_check_branch
        %788 = sbr.rel (%p786) target = $region104
      $region103: #{cpc_forward.2} parent=11 // pred_region
        _
      $region104: #{cpc_forward.2} parent=11 // pred_fallthru
        _
      // Predicated region
      $region105: #{cpc_forward.2} parent=11 // pred_check
        %p789 = pneg %p595
      $region106: #{cpc_forward.2} parent=11 // pred_check_branch
        %791 = sbr.rel (%p789) target = $region108
      $region107: #{cpc_forward.2} parent=11 // pred_region
        _
      $region108: #{cpc_forward.2} parent=11 // pred_fallthru
        _
      // Predicated region
      $region109: #{cpc_forward.2} parent=11 // pred_check
        %p792 = pneg %p616
      $region110: #{cpc_forward.2} parent=11 // pred_check_branch
        %794 = sbr.rel (%p792) target = $region112
      $region111: #{cpc_forward.2} parent=11 // pred_region
        _
      $region112: #{cpc_forward.2} parent=11 // pred_fallthru
        _
      // Predicated region
      $region113: #{cpc_forward.2} parent=11 // pred_check
        %p795 = pneg %p637
      $region114: #{cpc_forward.2} parent=11 // pred_check_branch
        %797 = sbr.rel (%p795) target = $region116
      $region115: #{cpc_forward.2} parent=11 // pred_region
        _
      $region116: #{cpc_forward.2} parent=11 // pred_fallthru
        _
      // Predicated region
      $region117: #{cpc_forward.2} parent=11 // pred_check
        %p798 = pneg %p658
      $region118: #{cpc_forward.2} parent=11 // pred_check_branch
        %800 = sbr.rel (%p798) target = $region120
      $region119: #{cpc_forward.2} parent=11 // pred_region
        _
      $region120: #{cpc_forward.2} parent=11 // pred_fallthru
        _
      // Predicated region
      $region121: #{cpc_forward.2} parent=11 // pred_check
        %p801 = pneg %p679
      $region122: #{cpc_forward.2} parent=11 // pred_check_branch
        %803 = sbr.rel (%p801) target = $region124
      $region123: #{cpc_forward.2} parent=11 // pred_region
        _
      $region124: #{cpc_forward.2} parent=11 // pred_fallthru
        _
    $region12: #{cpc_forward.2} parent=5 // pred_fallthru
      _
    %p804 = scmp.lt.s32.totalorder %s65, 2
    // Predicated region
    $region125: #{cpc_forward.2} parent=5 // pred_check
      %p805 = pneg %p804
    $region126: #{cpc_forward.2} parent=5 // pred_check_branch
      %807 = sbr.rel (%p805) target = $region128
    $region127: #{cpc_forward.2} parent=5 // pred_region
      // Predicated region
      $region129: #{cpc_forward.2} parent=127 // pred_check
        %p808 = pneg %p85
      $region130: #{cpc_forward.2} parent=127 // pred_check_branch
        %810 = sbr.rel (%p808) target = $region132
      $region131: #{cpc_forward.2} parent=127 // pred_region
        %p811 = scmp.lt.s32.totalorder %s65, 1
        %s812 = scalar_select %p811, %s65, 1
        %s813 = smul.addr %s812, 16
        %s814 = smul.addr %s813, 8
        %s815 = scalar_lea.vmem %s1, %s814
      $region132: #{cpc_forward.2} parent=127 // pred_fallthru
        _
    $region128: #{cpc_forward.2} parent=5 // pred_fallthru
      _
    %p816 = scmp.le.s32.totalorder 1, %s65
    %p817 = scmp.lt.s32.totalorder %s65, 3
    %p818 = pnand %p816, %p817
    %p819 = pneg %p818
    // Predicated region
    $region133: #{cpc_forward.2} parent=5 // pred_check
      _
    $region134: #{cpc_forward.2} parent=5 // pred_check_branch
      %821 = sbr.rel (%p818) target = $region136
    $region135: #{cpc_forward.2} parent=5 // pred_region
      %s822 = ssub.s32 %s65, 1
      %p823 = scmp.lt.s32.totalorder %s70, 1
      %s824 = scalar_select %p823, %s70, 1
      %s825 = smul.addr %s824, 16
      %s826 = smul.addr %s825, 8
      %s827 = scalar_lea.vmem %s1, %s826
      %p828 = pneg %p91
      %p829 = pneg %p88
      %p830 = pneg %p112
      %p831 = pneg %p109
      %p832 = pneg %p133
      %p833 = pneg %p130
      %p834 = pneg %p154
      %p835 = pneg %p151
      %p836 = pneg %p175
      %p837 = pneg %p172
      %p838 = pneg %p196
      %p839 = pneg %p193
      %p840 = pneg %p217
      %p841 = pneg %p214
      %p842 = pneg %p238
      %p843 = pneg %p235
      %p844 = pneg %p259
      %p845 = pneg %p256
      %p846 = pneg %p280
      %p847 = pneg %p277
      %p848 = pneg %p301
      %p849 = pneg %p298
      %p850 = pneg %p322
      %p851 = pneg %p319
      %p852 = pneg %p343
      %p853 = pneg %p340
      %p854 = pneg %p364
      %p855 = pneg %p361
      %p856 = pneg %p385
      %p857 = pneg %p382
      %p858 = pneg %p406
      %p859 = pneg %p403
      %p860 = pneg %p427
      %p861 = pneg %p424
      %p862 = pneg %p448
      %p863 = pneg %p445
      %p864 = pneg %p469
      %p865 = pneg %p466
      %p866 = pneg %p490
      %p867 = pneg %p487
      %p868 = pneg %p511
      %p869 = pneg %p508
      %p870 = pneg %p532
      %p871 = pneg %p529
      %p872 = pneg %p553
      %p873 = pneg %p550
      %p874 = pneg %p574
      %p875 = pneg %p571
      %p876 = pneg %p595
      %p877 = pneg %p592
      %p878 = pneg %p616
      %p879 = pneg %p613
      %p880 = pneg %p637
      %p881 = pneg %p634
      %p882 = pneg %p658
      %p883 = pneg %p655
      %p884 = pneg %p679
      %p885 = pneg %p676
      %p886 = pneg %p705
      %p887 = pneg %p702
      %p888 = scmp.lt.s32.totalorder %s70, 1
      %s889 = scalar_select %p888, %s70, 1
      %s890 = smul.addr %s889, 2
      %s891 = smul.addr %s890, 8
      %s892 = scalar_lea.vmem %s59, %s891
      %p893 = scmp.lt.s32.totalorder %s70, 1
      %s894 = scalar_select %p893, %s70, 1
      %s895 = smul.addr %s894, 16
      %s896 = smul.addr %s895, 8
      %s897 = scalar_lea.vmem %s1, %s896
      %p898 = scmp.lt.s32.totalorder %s70, 1
      %s899 = scalar_select %p898, %s70, 1
      %s900 = smul.addr %s899, 2
      %s901 = smul.addr %s900, 8
      %s902 = scalar_lea.vmem %s59, %s901
      %v904 = vld [vmem:[%s897] ss:$4 sm:$0xff]
      %s905 = scalar_lea.vmem %s897, 32
      %v906 = vld [vmem:[%s905] ss:$4 sm:$0xff]
      %s907 = scalar_lea.vmem %s897, 64
      %v908 = vld [vmem:[%s907] ss:$4 sm:$0xff]
      %s909 = scalar_lea.vmem %s897, 96
      %v910 = vld [vmem:[%s909] ss:$4 sm:$0x7f]
      %s911 = scalar_lea.vmem %s897, 1
      %v912 = vld [vmem:[%s911] ss:$4 sm:$0xff]
      %s913 = scalar_lea.vmem %s897, 33
      %v914 = vld [vmem:[%s913] ss:$4 sm:$0xff]
      %s915 = scalar_lea.vmem %s897, 65
      %v916 = vld [vmem:[%s915] ss:$4 sm:$0xff]
      %s917 = scalar_lea.vmem %s897, 97
      %v918 = vld [vmem:[%s917] ss:$4 sm:$0x7f]
      %s919 = scalar_lea.vmem %s897, 2
      %v920 = vld [vmem:[%s919] ss:$4 sm:$0xff]
      %s921 = scalar_lea.vmem %s897, 34
      %v922 = vld [vmem:[%s921] ss:$4 sm:$0xff]
      %s923 = scalar_lea.vmem %s897, 66
      %v924 = vld [vmem:[%s923] ss:$4 sm:$0xff]
      %s925 = scalar_lea.vmem %s897, 98
      %v926 = vld [vmem:[%s925] ss:$4 sm:$0x7f]
      %s927 = scalar_lea.vmem %s897, 3
      %v928 = vld [vmem:[%s927] ss:$4 sm:$0xff]
      %s929 = scalar_lea.vmem %s897, 35
      %v930 = vld [vmem:[%s929] ss:$4 sm:$0xff]
      %s931 = scalar_lea.vmem %s897, 67
      %v932 = vld [vmem:[%s931] ss:$4 sm:$0xff]
      %s933 = scalar_lea.vmem %s897, 99
      %v934 = vld [vmem:[%s933] ss:$4 sm:$0x7f]
      %s935 = scalar_lea.vmem %s897, 4
      %v936 = vld [vmem:[%s935] ss:$4 sm:$0xff]
      %s937 = scalar_lea.vmem %s897, 36
      %v938 = vld [vmem:[%s937] ss:$4 sm:$0xff]
      %s939 = scalar_lea.vmem %s897, 68
      %v940 = vld [vmem:[%s939] ss:$4 sm:$0xff]
      %s941 = scalar_lea.vmem %s897, 100
      %v942 = vld [vmem:[%s941] ss:$4 sm:$0x7f]
      %s943 = scalar_lea.vmem %s897, 5
      %v944 = vld [vmem:[%s943] ss:$4 sm:$0xff]
      %s945 = scalar_lea.vmem %s897, 37
      %v946 = vld [vmem:[%s945] ss:$4 sm:$0xff]
      %s947 = scalar_lea.vmem %s897, 69
      %v948 = vld [vmem:[%s947] ss:$4 sm:$0xff]
      %s949 = scalar_lea.vmem %s897, 101
      %v950 = vld [vmem:[%s949] ss:$4 sm:$0x7f]
      %s951 = scalar_lea.vmem %s897, 6
      %v952 = vld [vmem:[%s951] ss:$4 sm:$0xff]
      %s953 = scalar_lea.vmem %s897, 38
      %v954 = vld [vmem:[%s953] ss:$4 sm:$0xff]
      %s955 = scalar_lea.vmem %s897, 70
      %v956 = vld [vmem:[%s955] ss:$4 sm:$0xff]
      %s957 = scalar_lea.vmem %s897, 102
      %v958 = vld [vmem:[%s957] ss:$4 sm:$0x7f]
      %s959 = scalar_lea.vmem %s897, 7
      %v960 = vld [vmem:[%s959] ss:$4 sm:$0xff]
      %s961 = scalar_lea.vmem %s897, 39
      %v962 = vld [vmem:[%s961] ss:$4 sm:$0xff]
      %s963 = scalar_lea.vmem %s897, 71
      %v964 = vld [vmem:[%s963] ss:$4 sm:$0xff]
      %s965 = scalar_lea.vmem %s897, 103
      %v966 = vld [vmem:[%s965] ss:$4 sm:$0x7f]
      %971 = vrot.lane.b32.xlu0 %v912, 3
      %v972 = vpop.permute.xlu0 %971
      %973 = vrot.lane.b32.xlu0 %v914, 3
      %v974 = vpop.permute.xlu0 %973
      %975 = vrot.lane.b32.xlu0 %v916, 3
      %v976 = vpop.permute.xlu0 %975
      %977 = vrot.lane.b32.xlu0 %v918, 3
      %v978 = vpop.permute.xlu0 %977
      %987 = vrot.lane.b32.xlu0 %v920, 6
      %v988 = vpop.permute.xlu0 %987
      %989 = vrot.lane.b32.xlu0 %v922, 6
      %v990 = vpop.permute.xlu0 %989
      %991 = vrot.lane.b32.xlu0 %v924, 6
      %v992 = vpop.permute.xlu0 %991
      %993 = vrot.lane.b32.xlu0 %v926, 6
      %v994 = vpop.permute.xlu0 %993
      %1003 = vrot.lane.b32.xlu0 %v928, 9
      %v1004 = vpop.permute.xlu0 %1003
      %1005 = vrot.lane.b32.xlu0 %v930, 9
      %v1006 = vpop.permute.xlu0 %1005
      %1007 = vrot.lane.b32.xlu0 %v932, 9
      %v1008 = vpop.permute.xlu0 %1007
      %1009 = vrot.lane.b32.xlu0 %v934, 9
      %v1010 = vpop.permute.xlu0 %1009
      %1019 = vrot.lane.b32.xlu0 %v936, 12
      %v1020 = vpop.permute.xlu0 %1019
      %1021 = vrot.lane.b32.xlu0 %v938, 12
      %v1022 = vpop.permute.xlu0 %1021
      %1023 = vrot.lane.b32.xlu0 %v940, 12
      %v1024 = vpop.permute.xlu0 %1023
      %1025 = vrot.lane.b32.xlu0 %v942, 12
      %v1026 = vpop.permute.xlu0 %1025
      %1035 = vrot.lane.b32.xlu0 %v944, 15
      %v1036 = vpop.permute.xlu0 %1035
      %1037 = vrot.lane.b32.xlu0 %v946, 15
      %v1038 = vpop.permute.xlu0 %1037
      %1039 = vrot.lane.b32.xlu0 %v948, 15
      %v1040 = vpop.permute.xlu0 %1039
      %1041 = vrot.lane.b32.xlu0 %v950, 15
      %v1042 = vpop.permute.xlu0 %1041
      %1051 = vrot.lane.b32.xlu0 %v952, 18
      %v1052 = vpop.permute.xlu0 %1051
      %1053 = vrot.lane.b32.xlu0 %v954, 18
      %v1054 = vpop.permute.xlu0 %1053
      %1055 = vrot.lane.b32.xlu0 %v956, 18
      %v1056 = vpop.permute.xlu0 %1055
      %1057 = vrot.lane.b32.xlu0 %v958, 18
      %v1058 = vpop.permute.xlu0 %1057
      %1067 = vrot.lane.b32.xlu0 %v960, 21
      %v1068 = vpop.permute.xlu0 %1067
      %1069 = vrot.lane.b32.xlu0 %v962, 21
      %v1070 = vpop.permute.xlu0 %1069
      %1071 = vrot.lane.b32.xlu0 %v964, 21
      %v1072 = vpop.permute.xlu0 %1071
      %1073 = vrot.lane.b32.xlu0 %v966, 21
      %v1074 = vpop.permute.xlu0 %1073
      %vm1079 = vcmask 23552
      %v1080 = vsel %vm1079, %v904, %v972
      %v1081 = vsel %vm1079, %v906, %v974
      %v1082 = vsel %vm1079, %v908, %v976
      %v1083 = vsel %vm1079, %v910, %v978
      %vm1084 = vcmask 48128
      %v1085 = vsel %vm1084, %v1080, %v988
      %v1086 = vsel %vm1084, %v1081, %v990
      %v1087 = vsel %vm1084, %v1082, %v992
      %v1088 = vsel %vm1084, %v1083, %v994
      %vm1089 = vcmask 72704
      %v1090 = vsel %vm1089, %v1085, %v1004
      %v1091 = vsel %vm1089, %v1086, %v1006
      %v1092 = vsel %vm1089, %v1087, %v1008
      %v1093 = vsel %vm1089, %v1088, %v1010
      %vm1094 = vcmask 97280
      %v1095 = vsel %vm1094, %v1090, %v1020
      %v1096 = vsel %vm1094, %v1091, %v1022
      %v1097 = vsel %vm1094, %v1092, %v1024
      %v1098 = vsel %vm1094, %v1093, %v1026
      %vm1099 = vcmask 121856
      %v1100 = vsel %vm1099, %v1095, %v1036
      %v1101 = vsel %vm1099, %v1096, %v1038
      %v1102 = vsel %vm1099, %v1097, %v1040
      %v1103 = vsel %vm1099, %v1098, %v1042
      %vm1104 = vcmask 146432
      %v1105 = vsel %vm1104, %v1100, %v1052
      %v1106 = vsel %vm1104, %v1101, %v1054
      %v1107 = vsel %vm1104, %v1102, %v1056
      %v1108 = vsel %vm1104, %v1103, %v1058
      %vm1109 = vcmask 171008
      %v1110 = vsel %vm1109, %v1105, %v1068
      %v1111 = vsel %vm1109, %v1106, %v1070
      %v1112 = vsel %vm1109, %v1107, %v1072
      %v1113 = vsel %vm1109, %v1108, %v1074
      %v1114 = vpack.c.bf16 %v1111, %v1110
      %v1115 = vpack.c.bf16 %v1113, %v1112
      %v1116 = vld [vmem:[%s3] sm:$0xf]
      %v1117 = vld [vmem:[%s3 + $0x4] sm:$0xf]
      %v1118 = vld [vmem:[%s3 + $0x8] sm:$0xf]
      %v1119 = vld [vmem:[%s5] sm:$0x1]
      %v1121 = vlaneseq
      %v1122 = vshrl.u32 %v1121, 7
      %v1123 = vsub.s32 0, %v1122
      %v1124 = vrot.slane %v1119, %v1123
      %v1129 = vunpack.c.l.b16 %v1116
      %v1130 = vunpack.c.l.b16 %v1117
      %v1131 = vunpack.c.l.b16 %v1118
      %v1132 = vpack.c.b16 %v1130, %v1129
      %v1133 = vpack.c.b16 %v1131, %v1131
      %vm1135 = vcmask 195584
      %v1137 = vsel %vm1135, %v1114, 0
      %v1140 = vsel %vm1135, %v1115, 0
      %vm1142 = vcmask 1043456
      %v1144 = vsel %vm1142, %v1133, 0
      %1146 = vmatprep.subr.bf16.mxu0 0
      %1147 = vmatpush1.bf16.msra.mxu0 0
      %1148 = vmatprep.subr.bf16.mxu0 0
      %1149 = vmatpush1.bf16.msra.mxu0 0
      %1150 = vmatprep.subr.bf16.mxu0 0
      %1151 = vmatpush1.bf16.msra.mxu0 0
      %1152 = vmatprep.subr.bf16.mxu0 0
      %1153 = vmatpush1.bf16.msra.mxu0 0
      %1154 = vmatprep.subr.bf16.mxu0 0
      %1155 = vmatpush1.bf16.msra.mxu0 0
      %1156 = vmatprep.subr.bf16.mxu0 0
      %1157 = vmatpush1.bf16.msra.mxu0 0
      %1158 = vmatprep.subr.bf16.mxu0 0
      %1159 = vmatpush1.bf16.msra.mxu0 %v1144
      %1160 = vmatprep.subr.bf16.mxu0 0
      %1161 = vmatpush1.bf16.msra.mxu0 %v1132
      %1162 = vmatprep.subr.bf16.mxu0 0
      %1163 = vmatpush2.bf16.msra.mxu0 0
      %1164 = vmatprep.subr.bf16.mxu0 0
      %1165 = vmatpush2.bf16.msra.mxu0 0
      %1166 = vmatprep.subr.bf16.mxu0 0
      %1167 = vmatpush2.bf16.msra.mxu0 0
      %1168 = vmatprep.subr.bf16.mxu0 0
      %1169 = vmatpush2.bf16.msra.mxu0 0
      %1170 = vmatprep.subr.bf16.mxu0 0
      %1171 = vmatpush2.bf16.msra.mxu0 0
      %1172 = vmatprep.subr.bf16.mxu0 0
      %1173 = vmatpush2.bf16.msra.mxu0 0
      %1174 = vmatprep.subr.bf16.mxu0 0
      %1175 = vmatpush2.bf16.msra.mxu0 0
      %1176 = vmatprep.subr.bf16.mxu0 0
      %1177 = vmatpush2.bf16.msra.mxu0 0
      %1178 = vmatprep.mubr.bf16.mxu0 0
      %1179 = vmatmul.mubr.bf16.gmra.mxu0 %v1137
      %v1180 = vpop.f32.mrf.mxu0
      %v1181 = vadd.f32 %v1124, %v1180
      %v1182 = vpop.f32.mrf.mxu0
      %v1183 = vpop.f32.mrf.mxu0
      %v1184 = vadd.f32 %v1124, %v1183
      %v1185 = vpop.f32.mrf.mxu0
      %1186 = vmatprep.mubr.bf16.mxu0 0
      %1187 = vmatmul.mubr.bf16.gmra.mxu0 %v1140
      %v1188 = vpop.f32.mrf.mxu0
      %v1189 = vadd.f32 %v1124, %v1188
      %v1190 = vpop.f32.mrf.mxu0
      %v1191 = vpop.f32.mrf.mxu0
      %v1192 = vadd.f32 %v1124, %v1191
      %v1193 = vpop.f32.mrf.mxu0
      %1194 = vdwg.mxu0
      %v1195 = vmax.f32 %v1181, 0.0
      %v1196 = vmax.f32 %v1184, 0.0
      %v1197 = vmax.f32 %v1189, 0.0
      %v1198 = vmax.f32 %v1192, 0.0
      %vm1199 = vcmask 261120
      %1200 = vst.msk [vmem:[#allocation2] sm:$0xff] %vm1199, %v1195
      %1201 = vst.msk [vmem:[#allocation2 + $0x8] sm:$0xff] %vm1199, %v1196
      %1202 = vst.msk [vmem:[#allocation2 + $0x10] sm:$0xff] %vm1199, %v1197
      %vm1203 = vcmask 260096
      %1204 = vst.msk [vmem:[#allocation2 + $0x18] sm:$0x7f] %vm1203, %v1198
      %v1205 = vld [vmem:[#allocation2] ss:$2 sm:$0xff]
      %s1206 = scalar_lea.vmem [#allocation2], 16
      %v1207 = vld [vmem:[%s1206] ss:$2 sm:$0x3f]
      %s1208 = scalar_lea.vmem [#allocation2], 1
      %v1209 = vld [vmem:[%s1208] ss:$2 sm:$0xff]
      %s1210 = scalar_lea.vmem [#allocation2], 17
      %v1211 = vld [vmem:[%s1210] ss:$2 sm:$0x3f]
      %s1212 = scalar_lea.vmem [#allocation2], 2
      %v1213 = vld [vmem:[%s1212] ss:$2 sm:$0xff]
      %s1214 = scalar_lea.vmem [#allocation2], 18
      %v1215 = vld [vmem:[%s1214] ss:$2 sm:$0x3f]
      %s1216 = scalar_lea.vmem [#allocation2], 3
      %v1217 = vld [vmem:[%s1216] ss:$2 sm:$0xff]
      %s1218 = scalar_lea.vmem [#allocation2], 19
      %v1219 = vld [vmem:[%s1218] ss:$2 sm:$0x3f]
      %1222 = vrot.lane.b32.xlu0 %v1209, 32
      %v1223 = vpop.permute.xlu0 %1222
      %1224 = vrot.lane.b32.xlu0 %v1211, 32
      %v1225 = vpop.permute.xlu0 %1224
      %1230 = vrot.lane.b32.xlu0 %v1213, 64
      %v1231 = vpop.permute.xlu0 %1230
      %1232 = vrot.lane.b32.xlu0 %v1215, 64
      %v1233 = vpop.permute.xlu0 %1232
      %1238 = vrot.lane.b32.xlu0 %v1217, 96
      %v1239 = vpop.permute.xlu0 %1238
      %1240 = vrot.lane.b32.xlu0 %v1219, 96
      %v1241 = vpop.permute.xlu0 %1240
      %v1244 = vsel %vm1199, %v1205, %v1223
      %v1245 = vsel %vm1199, %v1207, %v1225
      %vm1246 = vcmask 523264
      %v1247 = vsel %vm1246, %v1244, %v1231
      %v1248 = vsel %vm1246, %v1245, %v1233
      %vm1249 = vcmask 785408
      %v1250 = vsel %vm1249, %v1247, %v1239
      %v1251 = vsel %vm1249, %v1248, %v1241
      %v1252 = vpack.c.bf16 %v1251, %v1250
      %v1253 = vld [vmem:[%s7] sm:$0xf]
      %v1254 = vld [vmem:[%s7 + $0x4] sm:$0xf]
      %v1255 = vld [vmem:[%s7 + $0x8] sm:$0xf]
      %v1256 = vld [vmem:[%s7 + $0xc] sm:$0xf]
      %v1257 = vld [vmem:[%s7 + $0x10] sm:$0xf]
      %v1258 = vld [vmem:[%s7 + $0x14] sm:$0xf]
      %v1259 = vld [vmem:[%s7 + $0x18] sm:$0xf]
      %v1260 = vld [vmem:[%s7 + $0x1c] sm:$0xf]
      %v1261 = vld [vmem:[%s7 + $0x20] sm:$0xf]
      %v1262 = vld [vmem:[%s7 + $0x24] sm:$0xf]
      %v1263 = vld [vmem:[%s7 + $0x28] sm:$0xf]
      %v1264 = vld [vmem:[%s7 + $0x2c] sm:$0xf]
      %v1265 = vld [vmem:[%s7 + $0x30] sm:$0xf]
      %v1266 = vld [vmem:[%s7 + $0x34] sm:$0xf]
      %v1267 = vld [vmem:[%s7 + $0x38] sm:$0xf]
      %v1268 = vld [vmem:[%s7 + $0x3c] sm:$0xf]
      %v1269 = vld [vmem:[%s9] sm:$0x1]
      %v1271 = vlaneseq
      %v1272 = vshrl.u32 %v1271, 7
      %v1273 = vsub.s32 0, %v1272
      %v1274 = vrot.slane %v1269, %v1273
      %v1292 = vunpack.c.l.b16 %v1253
      %v1293 = vunpack.c.l.b16 %v1254
      %v1294 = vunpack.c.l.b16 %v1255
      %v1295 = vunpack.c.l.b16 %v1256
      %v1296 = vunpack.c.l.b16 %v1257
      %v1297 = vunpack.c.l.b16 %v1258
      %v1298 = vunpack.c.l.b16 %v1259
      %v1299 = vunpack.c.l.b16 %v1260
      %v1300 = vunpack.c.l.b16 %v1261
      %v1301 = vunpack.c.l.b16 %v1262
      %v1302 = vunpack.c.l.b16 %v1263
      %v1303 = vunpack.c.l.b16 %v1264
      %v1304 = vunpack.c.l.b16 %v1265
      %v1305 = vunpack.c.l.b16 %v1266
      %v1306 = vunpack.c.l.b16 %v1267
      %v1307 = vunpack.c.l.b16 %v1268
      %v1308 = vpack.c.b16 %v1293, %v1292
      %v1309 = vpack.c.b16 %v1295, %v1294
      %v1310 = vpack.c.b16 %v1297, %v1296
      %v1311 = vpack.c.b16 %v1299, %v1298
      %v1312 = vpack.c.b16 %v1301, %v1300
      %v1313 = vpack.c.b16 %v1303, %v1302
      %v1314 = vpack.c.b16 %v1305, %v1304
      %v1315 = vpack.c.b16 %v1307, %v1306
      %1324 = vmatprep.subr.bf16.mxu0 0
      %1325 = vmatpush1.bf16.msra.mxu0 %v1315
      %1326 = vmatprep.subr.bf16.mxu0 0
      %1327 = vmatpush1.bf16.msra.mxu0 %v1314
      %1328 = vmatprep.subr.bf16.mxu0 0
      %1329 = vmatpush1.bf16.msra.mxu0 %v1313
      %1330 = vmatprep.subr.bf16.mxu0 0
      %1331 = vmatpush1.bf16.msra.mxu0 %v1312
      %1332 = vmatprep.subr.bf16.mxu0 0
      %1333 = vmatpush1.bf16.msra.mxu0 %v1311
      %1334 = vmatprep.subr.bf16.mxu0 0
      %1335 = vmatpush1.bf16.msra.mxu0 %v1310
      %1336 = vmatprep.subr.bf16.mxu0 0
      %1337 = vmatpush1.bf16.msra.mxu0 %v1309
      %1338 = vmatprep.subr.bf16.mxu0 0
      %1339 = vmatpush1.bf16.msra.mxu0 %v1308
      %1340 = vmatprep.subr.bf16.mxu0 0
      %1341 = vmatpush2.bf16.msra.mxu0 0
      %1342 = vmatprep.subr.bf16.mxu0 0
      %1343 = vmatpush2.bf16.msra.mxu0 0
      %1344 = vmatprep.subr.bf16.mxu0 0
      %1345 = vmatpush2.bf16.msra.mxu0 0
      %1346 = vmatprep.subr.bf16.mxu0 0
      %1347 = vmatpush2.bf16.msra.mxu0 0
      %1348 = vmatprep.subr.bf16.mxu0 0
      %1349 = vmatpush2.bf16.msra.mxu0 0
      %1350 = vmatprep.subr.bf16.mxu0 0
      %1351 = vmatpush2.bf16.msra.mxu0 0
      %1352 = vmatprep.subr.bf16.mxu0 0
      %1353 = vmatpush2.bf16.msra.mxu0 0
      %1354 = vmatprep.subr.bf16.mxu0 0
      %1355 = vmatpush2.bf16.msra.mxu0 0
      %1356 = vmatprep.mubr.bf16.mxu0 0
      %1357 = vmatmul.mubr.bf16.gmra.mxu0 %v1252
      %v1358 = vpop.f32.mrf.mxu0
      %v1359 = vadd.f32 %v1274, %v1358
      %v1360 = vpop.f32.mrf.mxu0
      %v1361 = vpop.f32.mrf.mxu0
      %v1362 = vadd.f32 %v1274, %v1361
      %v1363 = vpop.f32.mrf.mxu0
      %1364 = vdwg.mxu0
      %v1365 = vmax.f32 %v1359, 0.0
      %v1366 = vmax.f32 %v1362, 0.0
      %vm1369 = vcmask 1046528
      %v1370 = vrot.slane %v1365, 1
      %v1371 = vrot.slane %v1366, 1
      %v1372 = vsel %vm1369, %v1370, %v1371
      %1373 = vrot.lane.b32.xlu0 %v1372, 64
      %v1374 = vpop.permute.xlu0 %1373
      %1375 = vrot.lane.b32.xlu0 %v1371, 64
      %v1376 = vpop.permute.xlu0 %1375
      %v1379 = vsel %vm1246, %v1365, %v1374
      %v1380 = vsel %vm1246, %v1366, %v1376
      %v1381 = vpack.c.bf16 %v1380, %v1379
      %v1382 = vld [vmem:[%s11] sm:$0xf]
      %v1383 = vld [vmem:[%s11 + $0x4] sm:$0xf]
      %v1384 = vld [vmem:[%s11 + $0x8] sm:$0xf]
      %v1385 = vld [vmem:[%s11 + $0xc] sm:$0xf]
      %v1386 = vld [vmem:[%s11 + $0x10] sm:$0xf]
      %v1387 = vld [vmem:[%s11 + $0x14] sm:$0xf]
      %v1388 = vld [vmem:[%s11 + $0x18] sm:$0xf]
      %v1389 = vld [vmem:[%s11 + $0x1c] sm:$0xf]
      %v1390 = vld [vmem:[%s11 + $0x20] sm:$0xf]
      %v1391 = vld [vmem:[%s11 + $0x24] sm:$0xf]
      %v1392 = vld [vmem:[%s11 + $0x28] sm:$0xf]
      %v1393 = vld [vmem:[%s11 + $0x2c] sm:$0xf]
      %v1394 = vld [vmem:[%s11 + $0x30] sm:$0xf]
      %v1395 = vld [vmem:[%s11 + $0x34] sm:$0xf]
      %v1396 = vld [vmem:[%s11 + $0x38] sm:$0xf]
      %v1397 = vld [vmem:[%s11 + $0x3c] sm:$0xf]
      %v1398 = vld [vmem:[%s13] sm:$0x1]
      %v1400 = vlaneseq
      %v1401 = vshrl.u32 %v1400, 7
      %v1402 = vsub.s32 0, %v1401
      %v1403 = vrot.slane %v1398, %v1402
      %v1421 = vunpack.c.l.b16 %v1382
      %v1422 = vunpack.c.l.b16 %v1383
      %v1423 = vunpack.c.l.b16 %v1384
      %v1424 = vunpack.c.l.b16 %v1385
      %v1425 = vunpack.c.l.b16 %v1386
      %v1426 = vunpack.c.l.b16 %v1387
      %v1427 = vunpack.c.l.b16 %v1388
      %v1428 = vunpack.c.l.b16 %v1389
      %v1429 = vunpack.c.l.b16 %v1390
      %v1430 = vunpack.c.l.b16 %v1391
      %v1431 = vunpack.c.l.b16 %v1392
      %v1432 = vunpack.c.l.b16 %v1393
      %v1433 = vunpack.c.l.b16 %v1394
      %v1434 = vunpack.c.l.b16 %v1395
      %v1435 = vunpack.c.l.b16 %v1396
      %v1436 = vunpack.c.l.b16 %v1397
      %v1437 = vpack.c.b16 %v1422, %v1421
      %v1438 = vpack.c.b16 %v1424, %v1423
      %v1439 = vpack.c.b16 %v1426, %v1425
      %v1440 = vpack.c.b16 %v1428, %v1427
      %v1441 = vpack.c.b16 %v1430, %v1429
      %v1442 = vpack.c.b16 %v1432, %v1431
      %v1443 = vpack.c.b16 %v1434, %v1433
      %v1444 = vpack.c.b16 %v1436, %v1435
      %1453 = vmatprep.subr.bf16.mxu0 0
      %1454 = vmatpush1.bf16.msra.mxu0 %v1444
      %1455 = vmatprep.subr.bf16.mxu0 0
      %1456 = vmatpush1.bf16.msra.mxu0 %v1443
      %1457 = vmatprep.subr.bf16.mxu0 0
      %1458 = vmatpush1.bf16.msra.mxu0 %v1442
      %1459 = vmatprep.subr.bf16.mxu0 0
      %1460 = vmatpush1.bf16.msra.mxu0 %v1441
      %1461 = vmatprep.subr.bf16.mxu0 0
      %1462 = vmatpush1.bf16.msra.mxu0 %v1440
      %1463 = vmatprep.subr.bf16.mxu0 0
      %1464 = vmatpush1.bf16.msra.mxu0 %v1439
      %1465 = vmatprep.subr.bf16.mxu0 0
      %1466 = vmatpush1.bf16.msra.mxu0 %v1438
      %1467 = vmatprep.subr.bf16.mxu0 0
      %1468 = vmatpush1.bf16.msra.mxu0 %v1437
      %1469 = vmatprep.subr.bf16.mxu0 0
      %1470 = vmatpush2.bf16.msra.mxu0 0
      %1471 = vmatprep.subr.bf16.mxu0 0
      %1472 = vmatpush2.bf16.msra.mxu0 0
      %1473 = vmatprep.subr.bf16.mxu0 0
      %1474 = vmatpush2.bf16.msra.mxu0 0
      %1475 = vmatprep.subr.bf16.mxu0 0
      %1476 = vmatpush2.bf16.msra.mxu0 0
      %1477 = vmatprep.subr.bf16.mxu0 0
      %1478 = vmatpush2.bf16.msra.mxu0 0
      %1479 = vmatprep.subr.bf16.mxu0 0
      %1480 = vmatpush2.bf16.msra.mxu0 0
      %1481 = vmatprep.subr.bf16.mxu0 0
      %1482 = vmatpush2.bf16.msra.mxu0 0
      %1483 = vmatprep.subr.bf16.mxu0 0
      %1484 = vmatpush2.bf16.msra.mxu0 0
      %1485 = vmatprep.mubr.bf16.mxu0 0
      %1486 = vmatmul.mubr.bf16.gmra.mxu0 %v1381
      %v1487 = vpop.f32.mrf.mxu0
      %v1488 = vadd.f32 %v1403, %v1487
      %v1489 = vpop.f32.mrf.mxu0
      %v1490 = vpop.f32.mrf.mxu0
      %v1491 = vadd.f32 %v1403, %v1490
      %v1492 = vpop.f32.mrf.mxu0
      %1493 = vdwg.mxu0
      %v1494 = vmax.f32 %v1488, 0.0
      %v1495 = vmax.f32 %v1491, 0.0
      %v1496 = vpack.c.bf16 %v1495, %v1494
      %v1497 = vld [vmem:[%s15] sm:$0xff]
      %v1498 = vld [vmem:[%s15 + $0x8] sm:$0xff]
      %v1499 = vld [vmem:[%s15 + $0x10] sm:$0xff]
      %v1500 = vld [vmem:[%s15 + $0x18] sm:$0xff]
      %v1501 = vld [vmem:[%s15 + $0x20] sm:$0xff]
      %v1502 = vld [vmem:[%s15 + $0x28] sm:$0xff]
      %v1503 = vld [vmem:[%s15 + $0x30] sm:$0xff]
      %v1504 = vld [vmem:[%s15 + $0x38] sm:$0xff]
      %v1505 = vld [vmem:[%s15 + $0x40] sm:$0xff]
      %v1506 = vld [vmem:[%s15 + $0x48] sm:$0xff]
      %v1507 = vld [vmem:[%s15 + $0x50] sm:$0xff]
      %v1508 = vld [vmem:[%s15 + $0x58] sm:$0xff]
      %v1509 = vld [vmem:[%s15 + $0x60] sm:$0xff]
      %v1510 = vld [vmem:[%s15 + $0x68] sm:$0xff]
      %v1511 = vld [vmem:[%s15 + $0x70] sm:$0xff]
      %v1512 = vld [vmem:[%s15 + $0x78] sm:$0xff]
      %v1513 = vld [vmem:[%s17] sm:$0x3]
      %v1515 = vlaneseq
      %v1516 = vshrl.u32 %v1515, 7
      %v1517 = vsub.s32 0, %v1516
      %v1518 = vrot.slane %v1513, %v1517
      %v1519 = vlaneseq
      %v1520 = vshrl.u32 %v1519, 7
      %v1521 = vsub.s32 1, %v1520
      %v1522 = vrot.slane %v1513, %v1521
      %v1541 = vunpack.c.l.b16 %v1497
      %v1542 = vunpack.c.h.b16 %v1497
      %v1543 = vunpack.c.l.b16 %v1498
      %v1544 = vunpack.c.h.b16 %v1498
      %v1545 = vunpack.c.l.b16 %v1499
      %v1546 = vunpack.c.h.b16 %v1499
      %v1547 = vunpack.c.l.b16 %v1500
      %v1548 = vunpack.c.h.b16 %v1500
      %v1549 = vunpack.c.l.b16 %v1501
      %v1550 = vunpack.c.h.b16 %v1501
      %v1551 = vunpack.c.l.b16 %v1502
      %v1552 = vunpack.c.h.b16 %v1502
      %v1553 = vunpack.c.l.b16 %v1503
      %v1554 = vunpack.c.h.b16 %v1503
      %v1555 = vunpack.c.l.b16 %v1504
      %v1556 = vunpack.c.h.b16 %v1504
      %v1557 = vunpack.c.l.b16 %v1505
      %v1558 = vunpack.c.h.b16 %v1505
      %v1559 = vunpack.c.l.b16 %v1506
      %v1560 = vunpack.c.h.b16 %v1506
      %v1561 = vunpack.c.l.b16 %v1507
      %v1562 = vunpack.c.h.b16 %v1507
      %v1563 = vunpack.c.l.b16 %v1508
      %v1564 = vunpack.c.h.b16 %v1508
      %v1565 = vunpack.c.l.b16 %v1509
      %v1566 = vunpack.c.h.b16 %v1509
      %v1567 = vunpack.c.l.b16 %v1510
      %v1568 = vunpack.c.h.b16 %v1510
      %v1569 = vunpack.c.l.b16 %v1511
      %v1570 = vunpack.c.h.b16 %v1511
      %v1571 = vunpack.c.l.b16 %v1512
      %v1572 = vunpack.c.h.b16 %v1512
      %v1573 = vpack.c.b16 %v1543, %v1541
      %v1574 = vpack.c.b16 %v1544, %v1542
      %v1575 = vpack.c.b16 %v1547, %v1545
      %v1576 = vpack.c.b16 %v1548, %v1546
      %v1577 = vpack.c.b16 %v1551, %v1549
      %v1578 = vpack.c.b16 %v1552, %v1550
      %v1579 = vpack.c.b16 %v1555, %v1553
      %v1580 = vpack.c.b16 %v1556, %v1554
      %v1581 = vpack.c.b16 %v1559, %v1557
      %v1582 = vpack.c.b16 %v1560, %v1558
      %v1583 = vpack.c.b16 %v1563, %v1561
      %v1584 = vpack.c.b16 %v1564, %v1562
      %v1585 = vpack.c.b16 %v1567, %v1565
      %v1586 = vpack.c.b16 %v1568, %v1566
      %v1587 = vpack.c.b16 %v1571, %v1569
      %v1588 = vpack.c.b16 %v1572, %v1570
      %1605 = vmatprep.subr.bf16.mxu0 %v1588
      %1606 = vmatpush1.bf16.msra.mxu0 %v1587
      %1607 = vmatprep.subr.bf16.mxu0 %v1586
      %1608 = vmatpush1.bf16.msra.mxu0 %v1585
      %1609 = vmatprep.subr.bf16.mxu0 %v1584
      %1610 = vmatpush1.bf16.msra.mxu0 %v1583
      %1611 = vmatprep.subr.bf16.mxu0 %v1582
      %1612 = vmatpush1.bf16.msra.mxu0 %v1581
      %1613 = vmatprep.subr.bf16.mxu0 %v1580
      %1614 = vmatpush1.bf16.msra.mxu0 %v1579
      %1615 = vmatprep.subr.bf16.mxu0 %v1578
      %1616 = vmatpush1.bf16.msra.mxu0 %v1577
      %1617 = vmatprep.subr.bf16.mxu0 %v1576
      %1618 = vmatpush1.bf16.msra.mxu0 %v1575
      %1619 = vmatprep.subr.bf16.mxu0 %v1574
      %1620 = vmatpush1.bf16.msra.mxu0 %v1573
      %1621 = vmatprep.subr.bf16.mxu0 0
      %1622 = vmatpush2.bf16.msra.mxu0 0
      %1623 = vmatprep.subr.bf16.mxu0 0
      %1624 = vmatpush2.bf16.msra.mxu0 0
      %1625 = vmatprep.subr.bf16.mxu0 0
      %1626 = vmatpush2.bf16.msra.mxu0 0
      %1627 = vmatprep.subr.bf16.mxu0 0
      %1628 = vmatpush2.bf16.msra.mxu0 0
      %1629 = vmatprep.subr.bf16.mxu0 0
      %1630 = vmatpush2.bf16.msra.mxu0 0
      %1631 = vmatprep.subr.bf16.mxu0 0
      %1632 = vmatpush2.bf16.msra.mxu0 0
      %1633 = vmatprep.subr.bf16.mxu0 0
      %1634 = vmatpush2.bf16.msra.mxu0 0
      %1635 = vmatprep.subr.bf16.mxu0 0
      %1636 = vmatpush2.bf16.msra.mxu0 0
      %1637 = vmatprep.mubr.bf16.mxu0 0
      %1638 = vmatmul.mubr.bf16.gmra.mxu0 %v1496
      %v1639 = vpop.f32.mrf.mxu0
      %v1640 = vadd.f32 %v1518, %v1639
      %v1641 = vpop.f32.mrf.mxu0
      %v1642 = vadd.f32 %v1522, %v1641
      %v1643 = vpop.f32.mrf.mxu0
      %v1644 = vadd.f32 %v1518, %v1643
      %v1645 = vpop.f32.mrf.mxu0
      %v1646 = vadd.f32 %v1522, %v1645
      %1647 = vdwg.mxu0
      %v1648 = vmax.f32 %v1640, 0.0
      %v1649 = vmax.f32 %v1642, 0.0
      %v1650 = vmax.f32 %v1644, 0.0
      %v1651 = vmax.f32 %v1646, 0.0
      %v1652 = vpack.c.bf16 %v1650, %v1648
      %v1653 = vpack.c.bf16 %v1651, %v1649
      %v1654 = vld [vmem:[%s19] sm:$0xf]
      %v1655 = vld [vmem:[%s19 + $0x4] sm:$0xf]
      %v1656 = vld [vmem:[%s19 + $0x8] sm:$0xf]
      %v1657 = vld [vmem:[%s19 + $0xc] sm:$0xf]
      %v1658 = vld [vmem:[%s19 + $0x10] sm:$0xf]
      %v1659 = vld [vmem:[%s19 + $0x14] sm:$0xf]
      %v1660 = vld [vmem:[%s19 + $0x18] sm:$0xf]
      %v1661 = vld [vmem:[%s19 + $0x1c] sm:$0xf]
      %v1662 = vld [vmem:[%s19 + $0x20] sm:$0xf]
      %v1663 = vld [vmem:[%s19 + $0x24] sm:$0xf]
      %v1664 = vld [vmem:[%s19 + $0x28] sm:$0xf]
      %v1665 = vld [vmem:[%s19 + $0x2c] sm:$0xf]
      %v1666 = vld [vmem:[%s19 + $0x30] sm:$0xf]
      %v1667 = vld [vmem:[%s19 + $0x34] sm:$0xf]
      %v1668 = vld [vmem:[%s19 + $0x38] sm:$0xf]
      %v1669 = vld [vmem:[%s19 + $0x3c] sm:$0xf]
      %v1670 = vld [vmem:[%s19 + $0x40] sm:$0xf]
      %v1671 = vld [vmem:[%s19 + $0x44] sm:$0xf]
      %v1672 = vld [vmem:[%s19 + $0x48] sm:$0xf]
      %v1673 = vld [vmem:[%s19 + $0x4c] sm:$0xf]
      %v1674 = vld [vmem:[%s19 + $0x50] sm:$0xf]
      %v1675 = vld [vmem:[%s19 + $0x54] sm:$0xf]
      %v1676 = vld [vmem:[%s19 + $0x58] sm:$0xf]
      %v1677 = vld [vmem:[%s19 + $0x5c] sm:$0xf]
      %v1678 = vld [vmem:[%s19 + $0x60] sm:$0xf]
      %v1679 = vld [vmem:[%s19 + $0x64] sm:$0xf]
      %v1680 = vld [vmem:[%s19 + $0x68] sm:$0xf]
      %v1681 = vld [vmem:[%s19 + $0x6c] sm:$0xf]
      %v1682 = vld [vmem:[%s19 + $0x70] sm:$0xf]
      %v1683 = vld [vmem:[%s19 + $0x74] sm:$0xf]
      %v1684 = vld [vmem:[%s19 + $0x78] sm:$0xf]
      %v1685 = vld [vmem:[%s19 + $0x7c] sm:$0xf]
      %v1686 = vld [vmem:[%s21] sm:$0x1]
      %v1688 = vlaneseq
      %v1689 = vshrl.u32 %v1688, 7
      %v1690 = vsub.s32 0, %v1689
      %v1691 = vrot.slane %v1686, %v1690
      %v1725 = vunpack.c.l.b16 %v1654
      %v1726 = vunpack.c.l.b16 %v1655
      %v1727 = vunpack.c.l.b16 %v1656
      %v1728 = vunpack.c.l.b16 %v1657
      %v1729 = vunpack.c.l.b16 %v1658
      %v1730 = vunpack.c.l.b16 %v1659
      %v1731 = vunpack.c.l.b16 %v1660
      %v1732 = vunpack.c.l.b16 %v1661
      %v1733 = vunpack.c.l.b16 %v1662
      %v1734 = vunpack.c.l.b16 %v1663
      %v1735 = vunpack.c.l.b16 %v1664
      %v1736 = vunpack.c.l.b16 %v1665
      %v1737 = vunpack.c.l.b16 %v1666
      %v1738 = vunpack.c.l.b16 %v1667
      %v1739 = vunpack.c.l.b16 %v1668
      %v1740 = vunpack.c.l.b16 %v1669
      %v1741 = vunpack.c.l.b16 %v1670
      %v1742 = vunpack.c.l.b16 %v1671
      %v1743 = vunpack.c.l.b16 %v1672
      %v1744 = vunpack.c.l.b16 %v1673
      %v1745 = vunpack.c.l.b16 %v1674
      %v1746 = vunpack.c.l.b16 %v1675
      %v1747 = vunpack.c.l.b16 %v1676
      %v1748 = vunpack.c.l.b16 %v1677
      %v1749 = vunpack.c.l.b16 %v1678
      %v1750 = vunpack.c.l.b16 %v1679
      %v1751 = vunpack.c.l.b16 %v1680
      %v1752 = vunpack.c.l.b16 %v1681
      %v1753 = vunpack.c.l.b16 %v1682
      %v1754 = vunpack.c.l.b16 %v1683
      %v1755 = vunpack.c.l.b16 %v1684
      %v1756 = vunpack.c.l.b16 %v1685
      %v1757 = vpack.c.b16 %v1726, %v1725
      %v1758 = vpack.c.b16 %v1728, %v1727
      %v1759 = vpack.c.b16 %v1730, %v1729
      %v1760 = vpack.c.b16 %v1732, %v1731
      %v1761 = vpack.c.b16 %v1734, %v1733
      %v1762 = vpack.c.b16 %v1736, %v1735
      %v1763 = vpack.c.b16 %v1738, %v1737
      %v1764 = vpack.c.b16 %v1740, %v1739
      %v1765 = vpack.c.b16 %v1742, %v1741
      %v1766 = vpack.c.b16 %v1744, %v1743
      %v1767 = vpack.c.b16 %v1746, %v1745
      %v1768 = vpack.c.b16 %v1748, %v1747
      %v1769 = vpack.c.b16 %v1750, %v1749
      %v1770 = vpack.c.b16 %v1752, %v1751
      %v1771 = vpack.c.b16 %v1754, %v1753
      %v1772 = vpack.c.b16 %v1756, %v1755
      %1789 = vmatprep.subr.bf16.mxu0 0
      %1790 = vmatpush1.bf16.msra.mxu0 %v1764
      %1791 = vmatprep.subr.bf16.mxu0 0
      %1792 = vmatpush1.bf16.msra.mxu0 %v1763
      %1793 = vmatprep.subr.bf16.mxu0 0
      %1794 = vmatpush1.bf16.msra.mxu0 %v1762
      %1795 = vmatprep.subr.bf16.mxu0 0
      %1796 = vmatpush1.bf16.msra.mxu0 %v1761
      %1797 = vmatprep.subr.bf16.mxu0 0
      %1798 = vmatpush1.bf16.msra.mxu0 %v1760
      %1799 = vmatprep.subr.bf16.mxu0 0
      %1800 = vmatpush1.bf16.msra.mxu0 %v1759
      %1801 = vmatprep.subr.bf16.mxu0 0
      %1802 = vmatpush1.bf16.msra.mxu0 %v1758
      %1803 = vmatprep.subr.bf16.mxu0 0
      %1804 = vmatpush1.bf16.msra.mxu0 %v1757
      %1805 = vmatprep.subr.bf16.mxu0 0
      %1806 = vmatpush2.bf16.msra.mxu0 %v1772
      %1807 = vmatprep.subr.bf16.mxu0 0
      %1808 = vmatpush2.bf16.msra.mxu0 %v1771
      %1809 = vmatprep.subr.bf16.mxu0 0
      %1810 = vmatpush2.bf16.msra.mxu0 %v1770
      %1811 = vmatprep.subr.bf16.mxu0 0
      %1812 = vmatpush2.bf16.msra.mxu0 %v1769
      %1813 = vmatprep.subr.bf16.mxu0 0
      %1814 = vmatpush2.bf16.msra.mxu0 %v1768
      %1815 = vmatprep.subr.bf16.mxu0 0
      %1816 = vmatpush2.bf16.msra.mxu0 %v1767
      %1817 = vmatprep.subr.bf16.mxu0 0
      %1818 = vmatpush2.bf16.msra.mxu0 %v1766
      %1819 = vmatprep.subr.bf16.mxu0 0
      %1820 = vmatpush2.bf16.msra.mxu0 %v1765
      %1821 = vmatprep.mubr.bf16.mxu0 %v1653
      %1822 = vmatmul.mubr.bf16.gmra.mxu0 %v1652
      %v1823 = vpop.f32.mrf.mxu0
      %v1824 = vadd.f32 %v1691, %v1823
      %v1825 = vpop.f32.mrf.mxu0
      %v1826 = vpop.f32.mrf.mxu0
      %v1827 = vadd.f32 %v1691, %v1826
      %v1828 = vpop.f32.mrf.mxu0
      %1829 = vdwg.mxu0
      %v1830 = vmax.f32 %v1824, 0.0
      %v1831 = vmax.f32 %v1827, 0.0
      %vm1834 = vcmask 1040384
      %v1835 = vrot.slane %v1830, 7
      %v1836 = vrot.slane %v1831, 7
      %v1837 = vsel %vm1834, %v1835, %v1836
      %v1840 = vsel %vm1834, 0.0, %v1835
      %v1842 = vrot.slane %v1840, 1
      %v1843 = vrot.slane %v1837, 1
      %v1844 = vsel %vm1369, %v1842, %v1843
      %1845 = vrot.lane.b32.xlu0 %v1844, 32
      %v1846 = vpop.permute.xlu0 %1845
      %1847 = vrot.lane.b32.xlu0 %v1843, 32
      %v1848 = vpop.permute.xlu0 %1847
      %v1851 = vsel %vm1199, %v1840, %v1846
      %v1852 = vsel %vm1199, %v1837, %v1848
      %v1853 = vpack.c.bf16 %v1852, %v1851
      %v1854 = vld [vmem:[%s23] sm:$0xf]
      %v1855 = vld [vmem:[%s23 + $0x4] sm:$0xf]
      %v1856 = vld [vmem:[%s23 + $0x8] sm:$0xf]
      %v1857 = vld [vmem:[%s23 + $0xc] sm:$0xf]
      %v1858 = vld [vmem:[%s23 + $0x10] sm:$0xf]
      %v1859 = vld [vmem:[%s23 + $0x14] sm:$0xf]
      %v1860 = vld [vmem:[%s23 + $0x18] sm:$0xf]
      %v1861 = vld [vmem:[%s23 + $0x1c] sm:$0xf]
      %v1862 = vld [vmem:[%s25] sm:$0x1]
      %v1864 = vlaneseq
      %v1865 = vshrl.u32 %v1864, 7
      %v1866 = vsub.s32 0, %v1865
      %v1867 = vrot.slane %v1862, %v1866
      %v1877 = vunpack.c.l.b16 %v1854
      %v1878 = vunpack.c.l.b16 %v1855
      %v1879 = vunpack.c.l.b16 %v1856
      %v1880 = vunpack.c.l.b16 %v1857
      %v1881 = vunpack.c.l.b16 %v1858
      %v1882 = vunpack.c.l.b16 %v1859
      %v1883 = vunpack.c.l.b16 %v1860
      %v1884 = vunpack.c.l.b16 %v1861
      %v1885 = vpack.c.b16 %v1878, %v1877
      %v1886 = vpack.c.b16 %v1880, %v1879
      %v1887 = vpack.c.b16 %v1882, %v1881
      %v1888 = vpack.c.b16 %v1884, %v1883
      %v1894 = vsel %vm1246, %v1853, 0
      %1896 = vmatprep.subr.bf16.mxu0 0
      %1897 = vmatpush1.bf16.msra.mxu0 0
      %1898 = vmatprep.subr.bf16.mxu0 0
      %1899 = vmatpush1.bf16.msra.mxu0 0
      %1900 = vmatprep.subr.bf16.mxu0 0
      %1901 = vmatpush1.bf16.msra.mxu0 0
      %1902 = vmatprep.subr.bf16.mxu0 0
      %1903 = vmatpush1.bf16.msra.mxu0 0
      %1904 = vmatprep.subr.bf16.mxu0 0
      %1905 = vmatpush1.bf16.msra.mxu0 %v1888
      %1906 = vmatprep.subr.bf16.mxu0 0
      %1907 = vmatpush1.bf16.msra.mxu0 %v1887
      %1908 = vmatprep.subr.bf16.mxu0 0
      %1909 = vmatpush1.bf16.msra.mxu0 %v1886
      %1910 = vmatprep.subr.bf16.mxu0 0
      %1911 = vmatpush1.bf16.msra.mxu0 %v1885
      %1912 = vmatprep.subr.bf16.mxu0 0
      %1913 = vmatpush2.bf16.msra.mxu0 0
      %1914 = vmatprep.subr.bf16.mxu0 0
      %1915 = vmatpush2.bf16.msra.mxu0 0
      %1916 = vmatprep.subr.bf16.mxu0 0
      %1917 = vmatpush2.bf16.msra.mxu0 0
      %1918 = vmatprep.subr.bf16.mxu0 0
      %1919 = vmatpush2.bf16.msra.mxu0 0
      %1920 = vmatprep.subr.bf16.mxu0 0
      %1921 = vmatpush2.bf16.msra.mxu0 0
      %1922 = vmatprep.subr.bf16.mxu0 0
      %1923 = vmatpush2.bf16.msra.mxu0 0
      %1924 = vmatprep.subr.bf16.mxu0 0
      %1925 = vmatpush2.bf16.msra.mxu0 0
      %1926 = vmatprep.subr.bf16.mxu0 0
      %1927 = vmatpush2.bf16.msra.mxu0 0
      %1928 = vmatprep.mubr.bf16.mxu0 0
      %1929 = vmatmul.mubr.bf16.gmra.mxu0 %v1894
      %v1930 = vpop.f32.mrf.mxu0
      %v1931 = vadd.f32 %v1867, %v1930
      %v1932 = vpop.f32.mrf.mxu0
      %v1933 = vpop.f32.mrf.mxu0
      %v1934 = vadd.f32 %v1867, %v1933
      %v1935 = vpop.f32.mrf.mxu0
      %1936 = vdwg.mxu0
      %v1937 = vsel %vm1199, %v1931, 0.0
      %vm1938 = vcmask 258048
      %v1939 = vsel %vm1938, %v1934, 0.0
      %v1940 = vadd.f32 %v1937, %v1939
      %1941 = vadd.xlane.f32.xlu0 %v1940
      %v1942 = vpop.xlane.xlu0 %1941
      %v1943 = vrot.slane %v1942, 4
      %v1944 = vadd.f32 %v1942, %v1943
      %v1945 = vrot.slane %v1944, 2
      %v1946 = vadd.f32 %v1944, %v1945
      %v1947 = vrot.slane %v1946, 1
      %v1948 = vadd.f32 %v1946, %v1947
      %s1949 = vtos %v1948
      %v1950 = vstv %s1949
      %v1951 = vrcp.pop 416.0
      %v1952 = vmul.f32 %v1950, %v1951
      %v1953 = vsub.f32 %v1931, %v1952
      %v1954 = vsub.f32 %v1934, %v1952
      %v1955 = vmul.f32 %v1953, %v1953
      %v1956 = vmul.f32 %v1954, %v1954
      %v1957 = vsel %vm1199, %v1955, 0.0
      %v1958 = vsel %vm1938, %v1956, 0.0
      %v1959 = vadd.f32 %v1957, %v1958
      %1960 = vadd.xlane.f32.xlu0 %v1959
      %v1961 = vpop.xlane.xlu0 %1960
      %v1962 = vrot.slane %v1961, 4
      %v1963 = vadd.f32 %v1961, %v1962
      %v1964 = vrot.slane %v1963, 2
      %v1965 = vadd.f32 %v1963, %v1964
      %v1966 = vrot.slane %v1965, 1
      %v1967 = vadd.f32 %v1965, %v1966
      %s1968 = vtos %v1967
      %v1969 = vstv %s1968
      %v1970 = vmul.f32 %v1969, %v1951
      %v1971 = vadd.f32 %v1970, 1e-05
      %v1972 = vrsqrt.pop %v1971
      %v1973 = vmul.f32 %v1953, %v1972
      %v1974 = vmul.f32 %v1954, %v1972
      %v1975 = vld [vmem:[%s27] sm:$0x1]
      %v1977 = vlaneseq
      %v1978 = vshrl.u32 %v1977, 7
      %v1979 = vsub.s32 0, %v1978
      %v1980 = vrot.slane %v1975, %v1979
      %v1982 = vmul.f32 %v1973, %v1980
      %v1983 = vmul.f32 %v1974, %v1980
      %v1984 = vld [vmem:[%s29] sm:$0x1]
      %v1986 = vlaneseq
      %v1987 = vshrl.u32 %v1986, 7
      %v1988 = vsub.s32 0, %v1987
      %v1989 = vrot.slane %v1984, %v1988
      %v1991 = vadd.f32 %v1982, %v1989
      %v1992 = vadd.f32 %v1983, %v1989
      %v1993 = vmax.f32 %v1991, 0.0
      %v1994 = vmax.f32 %v1992, 0.0
      %v1995 = vadd.f32 %v1993, %v1830
      %v1996 = vadd.f32 %v1994, %v1831
      %v1997 = vmul.f32 %v1995, 0.70710677
      %v1998 = vmul.f32 %v1996, 0.70710677
      %vm2001 = vcmask 1041408
      %v2002 = vrot.slane %v1997, 6
      %v2003 = vrot.slane %v1998, 6
      %v2004 = vsel %vm2001, %v2002, %v2003
      %v2007 = vsel %vm2001, 0.0, %v2002
      %v2009 = vrot.slane %v2007, 1
      %v2010 = vrot.slane %v2004, 1
      %v2011 = vsel %vm1369, %v2009, %v2010
      %2012 = vrot.lane.b32.xlu0 %v2011, 32
      %v2013 = vpop.permute.xlu0 %2012
      %2014 = vrot.lane.b32.xlu0 %v2010, 32
      %v2015 = vpop.permute.xlu0 %2014
      %vm2018 = vcmask 1045504
      %v2019 = vrot.slane %v2007, 2
      %v2020 = vrot.slane %v2004, 2
      %v2021 = vsel %vm2018, %v2019, %v2020
      %2022 = vrot.lane.b32.xlu0 %v2021, 64
      %v2023 = vpop.permute.xlu0 %2022
      %2024 = vrot.lane.b32.xlu0 %v2020, 64
      %v2025 = vpop.permute.xlu0 %2024
      %v2028 = vsel %vm1199, %v2007, %v2013
      %v2029 = vsel %vm1199, %v2004, %v2015
      %v2030 = vsel %vm1246, %v2028, %v2023
      %v2031 = vsel %vm1246, %v2029, %v2025
      %v2032 = vpack.c.bf16 %v2031, %v2030
      %v2033 = vld [vmem:[%s31] sm:$0xf]
      %v2034 = vld [vmem:[%s31 + $0x4] sm:$0xf]
      %v2035 = vld [vmem:[%s31 + $0x8] sm:$0xf]
      %v2036 = vld [vmem:[%s31 + $0xc] sm:$0xf]
      %v2037 = vld [vmem:[%s31 + $0x10] sm:$0xf]
      %v2038 = vld [vmem:[%s31 + $0x14] sm:$0xf]
      %v2039 = vld [vmem:[%s31 + $0x18] sm:$0xf]
      %v2040 = vld [vmem:[%s31 + $0x1c] sm:$0xf]
      %v2041 = vld [vmem:[%s31 + $0x20] sm:$0xf]
      %v2042 = vld [vmem:[%s31 + $0x24] sm:$0xf]
      %v2043 = vld [vmem:[%s31 + $0x28] sm:$0xf]
      %v2044 = vld [vmem:[%s31 + $0x2c] sm:$0xf]
      %v2045 = vld [vmem:[%s33] sm:$0x1]
      %v2047 = vlaneseq
      %v2048 = vshrl.u32 %v2047, 7
      %v2049 = vsub.s32 0, %v2048
      %v2050 = vrot.slane %v2045, %v2049
      %v2064 = vunpack.c.l.b16 %v2033
      %v2065 = vunpack.c.l.b16 %v2034
      %v2066 = vunpack.c.l.b16 %v2035
      %v2067 = vunpack.c.l.b16 %v2036
      %v2068 = vunpack.c.l.b16 %v2037
      %v2069 = vunpack.c.l.b16 %v2038
      %v2070 = vunpack.c.l.b16 %v2039
      %v2071 = vunpack.c.l.b16 %v2040
      %v2072 = vunpack.c.l.b16 %v2041
      %v2073 = vunpack.c.l.b16 %v2042
      %v2074 = vunpack.c.l.b16 %v2043
      %v2075 = vunpack.c.l.b16 %v2044
      %v2076 = vpack.c.b16 %v2065, %v2064
      %v2077 = vpack.c.b16 %v2067, %v2066
      %v2078 = vpack.c.b16 %v2069, %v2068
      %v2079 = vpack.c.b16 %v2071, %v2070
      %v2080 = vpack.c.b16 %v2073, %v2072
      %v2081 = vpack.c.b16 %v2075, %v2074
      %v2089 = vsel %vm1249, %v2032, 0
      %2091 = vmatprep.subr.bf16.mxu0 0
      %2092 = vmatpush1.bf16.msra.mxu0 0
      %2093 = vmatprep.subr.bf16.mxu0 0
      %2094 = vmatpush1.bf16.msra.mxu0 0
      %2095 = vmatprep.subr.bf16.mxu0 0
      %2096 = vmatpush1.bf16.msra.mxu0 %v2081
      %2097 = vmatprep.subr.bf16.mxu0 0
      %2098 = vmatpush1.bf16.msra.mxu0 %v2080
      %2099 = vmatprep.subr.bf16.mxu0 0
      %2100 = vmatpush1.bf16.msra.mxu0 %v2079
      %2101 = vmatprep.subr.bf16.mxu0 0
      %2102 = vmatpush1.bf16.msra.mxu0 %v2078
      %2103 = vmatprep.subr.bf16.mxu0 0
      %2104 = vmatpush1.bf16.msra.mxu0 %v2077
      %2105 = vmatprep.subr.bf16.mxu0 0
      %2106 = vmatpush1.bf16.msra.mxu0 %v2076
      %2107 = vmatprep.subr.bf16.mxu0 0
      %2108 = vmatpush2.bf16.msra.mxu0 0
      %2109 = vmatprep.subr.bf16.mxu0 0
      %2110 = vmatpush2.bf16.msra.mxu0 0
      %2111 = vmatprep.subr.bf16.mxu0 0
      %2112 = vmatpush2.bf16.msra.mxu0 0
      %2113 = vmatprep.subr.bf16.mxu0 0
      %2114 = vmatpush2.bf16.msra.mxu0 0
      %2115 = vmatprep.subr.bf16.mxu0 0
      %2116 = vmatpush2.bf16.msra.mxu0 0
      %2117 = vmatprep.subr.bf16.mxu0 0
      %2118 = vmatpush2.bf16.msra.mxu0 0
      %2119 = vmatprep.subr.bf16.mxu0 0
      %2120 = vmatpush2.bf16.msra.mxu0 0
      %2121 = vmatprep.subr.bf16.mxu0 0
      %2122 = vmatpush2.bf16.msra.mxu0 0
      %2123 = vmatprep.mubr.bf16.mxu0 0
      %2124 = vmatmul.mubr.bf16.gmra.mxu0 %v2089
      %v2125 = vpop.f32.mrf.mxu0
      %v2126 = vadd.f32 %v2050, %v2125
      %v2127 = vpop.f32.mrf.mxu0
      %v2128 = vpop.f32.mrf.mxu0
      %v2129 = vadd.f32 %v2050, %v2128
      %v2130 = vpop.f32.mrf.mxu0
      %2131 = vdwg.mxu0
      %v2132 = vsel %vm1199, %v2126, 0.0
      %v2133 = vsel %vm1938, %v2129, 0.0
      %v2134 = vadd.f32 %v2132, %v2133
      %2135 = vadd.xlane.f32.xlu0 %v2134
      %v2136 = vpop.xlane.xlu0 %2135
      %v2137 = vrot.slane %v2136, 4
      %v2138 = vadd.f32 %v2136, %v2137
      %v2139 = vrot.slane %v2138, 2
      %v2140 = vadd.f32 %v2138, %v2139
      %v2141 = vrot.slane %v2140, 1
      %v2142 = vadd.f32 %v2140, %v2141
      %s2143 = vtos %v2142
      %v2144 = vstv %s2143
      %v2145 = vmul.f32 %v2144, %v1951
      %v2146 = vsub.f32 %v2126, %v2145
      %v2147 = vsub.f32 %v2129, %v2145
      %v2148 = vmul.f32 %v2146, %v2146
      %v2149 = vmul.f32 %v2147, %v2147
      %v2150 = vsel %vm1199, %v2148, 0.0
      %v2151 = vsel %vm1938, %v2149, 0.0
      %v2152 = vadd.f32 %v2150, %v2151
      %2153 = vadd.xlane.f32.xlu0 %v2152
      %v2154 = vpop.xlane.xlu0 %2153
      %v2155 = vrot.slane %v2154, 4
      %v2156 = vadd.f32 %v2154, %v2155
      %v2157 = vrot.slane %v2156, 2
      %v2158 = vadd.f32 %v2156, %v2157
      %v2159 = vrot.slane %v2158, 1
      %v2160 = vadd.f32 %v2158, %v2159
      %s2161 = vtos %v2160
      %v2162 = vstv %s2161
      %v2163 = vmul.f32 %v2162, %v1951
      %v2164 = vadd.f32 %v2163, 1e-05
      %v2165 = vrsqrt.pop %v2164
      %v2166 = vmul.f32 %v2146, %v2165
      %v2167 = vmul.f32 %v2147, %v2165
      %v2168 = vld [vmem:[%s35] sm:$0x1]
      %v2170 = vlaneseq
      %v2171 = vshrl.u32 %v2170, 7
      %v2172 = vsub.s32 0, %v2171
      %v2173 = vrot.slane %v2168, %v2172
      %v2175 = vmul.f32 %v2166, %v2173
      %v2176 = vmul.f32 %v2167, %v2173
      %v2177 = vld [vmem:[%s37] sm:$0x1]
      %v2179 = vlaneseq
      %v2180 = vshrl.u32 %v2179, 7
      %v2181 = vsub.s32 0, %v2180
      %v2182 = vrot.slane %v2177, %v2181
      %v2184 = vadd.f32 %v2175, %v2182
      %v2185 = vadd.f32 %v2176, %v2182
      %v2186 = vmax.f32 %v2184, 0.0
      %v2187 = vmax.f32 %v2185, 0.0
      %v2188 = vadd.f32 %v2186, %v1997
      %v2189 = vadd.f32 %v2187, %v1998
      %v2190 = vmul.f32 %v2188, 0.70710677
      %v2191 = vmul.f32 %v2189, 0.70710677
      %vm2194 = vcmask 1042432
      %v2195 = vrot.slane %v2190, 5
      %v2196 = vrot.slane %v2191, 5
      %v2197 = vsel %vm2194, %v2195, %v2196
      %v2200 = vsel %vm2194, 0.0, %v2195
      %v2202 = vrot.slane %v2200, 1
      %v2203 = vrot.slane %v2197, 1
      %v2204 = vsel %vm1369, %v2202, %v2203
      %2205 = vrot.lane.b32.xlu0 %v2204, 32
      %v2206 = vpop.permute.xlu0 %2205
      %2207 = vrot.lane.b32.xlu0 %v2203, 32
      %v2208 = vpop.permute.xlu0 %2207
      %v2211 = vrot.slane %v2200, 2
      %v2212 = vrot.slane %v2197, 2
      %v2213 = vsel %vm2018, %v2211, %v2212
      %2214 = vrot.lane.b32.xlu0 %v2213, 64
      %v2215 = vpop.permute.xlu0 %2214
      %2216 = vrot.lane.b32.xlu0 %v2212, 64
      %v2217 = vpop.permute.xlu0 %2216
      %vm2220 = vcmask 1044480
      %v2221 = vrot.slane %v2200, 3
      %v2222 = vrot.slane %v2197, 3
      %v2223 = vsel %vm2220, %v2221, %v2222
      %2224 = vrot.lane.b32.xlu0 %v2223, 96
      %v2225 = vpop.permute.xlu0 %2224
      %2226 = vrot.lane.b32.xlu0 %v2222, 96
      %v2227 = vpop.permute.xlu0 %2226
      %v2230 = vsel %vm1199, %v2200, %v2206
      %v2231 = vsel %vm1199, %v2197, %v2208
      %v2232 = vsel %vm1246, %v2230, %v2215
      %v2233 = vsel %vm1246, %v2231, %v2217
      %v2234 = vsel %vm1249, %v2232, %v2225
      %v2235 = vsel %vm1249, %v2233, %v2227
      %v2236 = vpack.c.bf16 %v2235, %v2234
      %v2237 = vld [vmem:[%s39] sm:$0xf]
      %v2238 = vld [vmem:[%s39 + $0x4] sm:$0xf]
      %v2239 = vld [vmem:[%s39 + $0x8] sm:$0xf]
      %v2240 = vld [vmem:[%s39 + $0xc] sm:$0xf]
      %v2241 = vld [vmem:[%s39 + $0x10] sm:$0xf]
      %v2242 = vld [vmem:[%s39 + $0x14] sm:$0xf]
      %v2243 = vld [vmem:[%s39 + $0x18] sm:$0xf]
      %v2244 = vld [vmem:[%s39 + $0x1c] sm:$0xf]
      %v2245 = vld [vmem:[%s39 + $0x20] sm:$0xf]
      %v2246 = vld [vmem:[%s39 + $0x24] sm:$0xf]
      %v2247 = vld [vmem:[%s39 + $0x28] sm:$0xf]
      %v2248 = vld [vmem:[%s39 + $0x2c] sm:$0xf]
      %v2249 = vld [vmem:[%s39 + $0x30] sm:$0xf]
      %v2250 = vld [vmem:[%s39 + $0x34] sm:$0xf]
      %v2251 = vld [vmem:[%s39 + $0x38] sm:$0xf]
      %v2252 = vld [vmem:[%s39 + $0x3c] sm:$0xf]
      %v2253 = vld [vmem:[%s41] sm:$0x1]
      %v2255 = vlaneseq
      %v2256 = vshrl.u32 %v2255, 7
      %v2257 = vsub.s32 0, %v2256
      %v2258 = vrot.slane %v2253, %v2257
      %v2276 = vunpack.c.l.b16 %v2237
      %v2277 = vunpack.c.l.b16 %v2238
      %v2278 = vunpack.c.l.b16 %v2239
      %v2279 = vunpack.c.l.b16 %v2240
      %v2280 = vunpack.c.l.b16 %v2241
      %v2281 = vunpack.c.l.b16 %v2242
      %v2282 = vunpack.c.l.b16 %v2243
      %v2283 = vunpack.c.l.b16 %v2244
      %v2284 = vunpack.c.l.b16 %v2245
      %v2285 = vunpack.c.l.b16 %v2246
      %v2286 = vunpack.c.l.b16 %v2247
      %v2287 = vunpack.c.l.b16 %v2248
      %v2288 = vunpack.c.l.b16 %v2249
      %v2289 = vunpack.c.l.b16 %v2250
      %v2290 = vunpack.c.l.b16 %v2251
      %v2291 = vunpack.c.l.b16 %v2252
      %v2292 = vpack.c.b16 %v2277, %v2276
      %v2293 = vpack.c.b16 %v2279, %v2278
      %v2294 = vpack.c.b16 %v2281, %v2280
      %v2295 = vpack.c.b16 %v2283, %v2282
      %v2296 = vpack.c.b16 %v2285, %v2284
      %v2297 = vpack.c.b16 %v2287, %v2286
      %v2298 = vpack.c.b16 %v2289, %v2288
      %v2299 = vpack.c.b16 %v2291, %v2290
      %2308 = vmatprep.subr.bf16.mxu0 0
      %2309 = vmatpush1.bf16.msra.mxu0 %v2299
      %2310 = vmatprep.subr.bf16.mxu0 0
      %2311 = vmatpush1.bf16.msra.mxu0 %v2298
      %2312 = vmatprep.subr.bf16.mxu0 0
      %2313 = vmatpush1.bf16.msra.mxu0 %v2297
      %2314 = vmatprep.subr.bf16.mxu0 0
      %2315 = vmatpush1.bf16.msra.mxu0 %v2296
      %2316 = vmatprep.subr.bf16.mxu0 0
      %2317 = vmatpush1.bf16.msra.mxu0 %v2295
      %2318 = vmatprep.subr.bf16.mxu0 0
      %2319 = vmatpush1.bf16.msra.mxu0 %v2294
      %2320 = vmatprep.subr.bf16.mxu0 0
      %2321 = vmatpush1.bf16.msra.mxu0 %v2293
      %2322 = vmatprep.subr.bf16.mxu0 0
      %2323 = vmatpush1.bf16.msra.mxu0 %v2292
      %2324 = vmatprep.subr.bf16.mxu0 0
      %2325 = vmatpush2.bf16.msra.mxu0 0
      %2326 = vmatprep.subr.bf16.mxu0 0
      %2327 = vmatpush2.bf16.msra.mxu0 0
      %2328 = vmatprep.subr.bf16.mxu0 0
      %2329 = vmatpush2.bf16.msra.mxu0 0
      %2330 = vmatprep.subr.bf16.mxu0 0
      %2331 = vmatpush2.bf16.msra.mxu0 0
      %2332 = vmatprep.subr.bf16.mxu0 0
      %2333 = vmatpush2.bf16.msra.mxu0 0
      %2334 = vmatprep.subr.bf16.mxu0 0
      %2335 = vmatpush2.bf16.msra.mxu0 0
      %2336 = vmatprep.subr.bf16.mxu0 0
      %2337 = vmatpush2.bf16.msra.mxu0 0
      %2338 = vmatprep.subr.bf16.mxu0 0
      %2339 = vmatpush2.bf16.msra.mxu0 0
      %2340 = vmatprep.mubr.bf16.mxu0 0
      %2341 = vmatmul.mubr.bf16.gmra.mxu0 %v2236
      %v2342 = vpop.f32.mrf.mxu0
      %v2343 = vadd.f32 %v2258, %v2342
      %v2344 = vpop.f32.mrf.mxu0
      %v2345 = vpop.f32.mrf.mxu0
      %v2346 = vadd.f32 %v2258, %v2345
      %v2347 = vpop.f32.mrf.mxu0
      %2348 = vdwg.mxu0
      %v2349 = vsel %vm1199, %v2343, 0.0
      %v2350 = vsel %vm1938, %v2346, 0.0
      %v2351 = vadd.f32 %v2349, %v2350
      %2352 = vadd.xlane.f32.xlu0 %v2351
      %v2353 = vpop.xlane.xlu0 %2352
      %v2354 = vrot.slane %v2353, 4
      %v2355 = vadd.f32 %v2353, %v2354
      %v2356 = vrot.slane %v2355, 2
      %v2357 = vadd.f32 %v2355, %v2356
      %v2358 = vrot.slane %v2357, 1
      %v2359 = vadd.f32 %v2357, %v2358
      %s2360 = vtos %v2359
      %v2361 = vstv %s2360
      %v2362 = vmul.f32 %v2361, %v1951
      %v2363 = vsub.f32 %v2343, %v2362
      %v2364 = vsub.f32 %v2346, %v2362
      %v2365 = vmul.f32 %v2363, %v2363
      %v2366 = vmul.f32 %v2364, %v2364
      %v2367 = vsel %vm1199, %v2365, 0.0
      %v2368 = vsel %vm1938, %v2366, 0.0
      %v2369 = vadd.f32 %v2367, %v2368
      %2370 = vadd.xlane.f32.xlu0 %v2369
      %v2371 = vpop.xlane.xlu0 %2370
      %v2372 = vrot.slane %v2371, 4
      %v2373 = vadd.f32 %v2371, %v2372
      %v2374 = vrot.slane %v2373, 2
      %v2375 = vadd.f32 %v2373, %v2374
      %v2376 = vrot.slane %v2375, 1
      %v2377 = vadd.f32 %v2375, %v2376
      %s2378 = vtos %v2377
      %v2379 = vstv %s2378
      %v2380 = vmul.f32 %v2379, %v1951
      %v2381 = vadd.f32 %v2380, 1e-05
      %v2382 = vrsqrt.pop %v2381
      %v2383 = vmul.f32 %v2363, %v2382
      %v2384 = vmul.f32 %v2364, %v2382
      %v2385 = vld [vmem:[%s43] sm:$0x1]
      %v2387 = vlaneseq
      %v2388 = vshrl.u32 %v2387, 7
      %v2389 = vsub.s32 0, %v2388
      %v2390 = vrot.slane %v2385, %v2389
      %v2392 = vmul.f32 %v2383, %v2390
      %v2393 = vmul.f32 %v2384, %v2390
      %v2394 = vld [vmem:[%s45] sm:$0x1]
      %v2396 = vlaneseq
      %v2397 = vshrl.u32 %v2396, 7
      %v2398 = vsub.s32 0, %v2397
      %v2399 = vrot.slane %v2394, %v2398
      %v2401 = vadd.f32 %v2392, %v2399
      %v2402 = vadd.f32 %v2393, %v2399
      %v2403 = vmax.f32 %v2401, 0.0
      %v2404 = vmax.f32 %v2402, 0.0
      %v2405 = vadd.f32 %v2403, %v2190
      %v2406 = vadd.f32 %v2404, %v2191
      %v2407 = vmul.f32 %v2405, 0.70710677
      %v2408 = vmul.f32 %v2406, 0.70710677
      %v2411 = vrot.slane %v2407, 4
      %v2412 = vrot.slane %v2408, 4
      %v2413 = vsel %vm1142, %v2411, %v2412
      %v2416 = vsel %vm1142, 0.0, %v2411
      %v2418 = vrot.slane %v2416, 1
      %v2419 = vrot.slane %v2413, 1
      %v2420 = vsel %vm1369, %v2418, %v2419
      %2421 = vrot.lane.b32.xlu0 %v2420, 32
      %v2422 = vpop.permute.xlu0 %2421
      %2423 = vrot.lane.b32.xlu0 %v2419, 32
      %v2424 = vpop.permute.xlu0 %2423
      %v2427 = vrot.slane %v2416, 2
      %v2428 = vrot.slane %v2413, 2
      %v2429 = vsel %vm2018, %v2427, %v2428
      %2430 = vrot.lane.b32.xlu0 %v2429, 64
      %v2431 = vpop.permute.xlu0 %2430
      %2432 = vrot.lane.b32.xlu0 %v2428, 64
      %v2433 = vpop.permute.xlu0 %2432
      %v2436 = vrot.slane %v2416, 3
      %v2437 = vrot.slane %v2413, 3
      %v2438 = vsel %vm2220, %v2436, %v2437
      %2439 = vrot.lane.b32.xlu0 %v2438, 96
      %v2440 = vpop.permute.xlu0 %2439
      %2441 = vrot.lane.b32.xlu0 %v2437, 96
      %v2442 = vpop.permute.xlu0 %2441
      %v2445 = vrot.slane %v2416, 4
      %v2446 = vrot.slane %v2413, 4
      %v2447 = vsel %vm1142, %v2445, %v2446
      %v2448 = vrot.slane %v2412, 4
      %v2449 = vsel %vm1142, %v2446, %v2448
      %v2452 = vsel %vm1199, %v2416, %v2422
      %v2453 = vsel %vm1199, %v2413, %v2424
      %v2454 = vsel %vm1246, %v2452, %v2431
      %v2455 = vsel %vm1246, %v2453, %v2433
      %v2456 = vsel %vm1249, %v2454, %v2440
      %v2457 = vsel %vm1249, %v2455, %v2442
      %v2458 = vpack.c.bf16 %v2457, %v2456
      %v2459 = vpack.c.bf16 %v2449, %v2447
      %v2460 = vld [vmem:[%s47] sm:$0xf]
      %v2461 = vld [vmem:[%s47 + $0x4] sm:$0xf]
      %v2462 = vld [vmem:[%s47 + $0x8] sm:$0xf]
      %v2463 = vld [vmem:[%s47 + $0xc] sm:$0xf]
      %v2464 = vld [vmem:[%s47 + $0x10] sm:$0xf]
      %v2465 = vld [vmem:[%s47 + $0x14] sm:$0xf]
      %v2466 = vld [vmem:[%s47 + $0x18] sm:$0xf]
      %v2467 = vld [vmem:[%s47 + $0x1c] sm:$0xf]
      %v2468 = vld [vmem:[%s47 + $0x20] sm:$0xf]
      %v2469 = vld [vmem:[%s47 + $0x24] sm:$0xf]
      %v2470 = vld [vmem:[%s47 + $0x28] sm:$0xf]
      %v2471 = vld [vmem:[%s47 + $0x2c] sm:$0xf]
      %v2472 = vld [vmem:[%s47 + $0x30] sm:$0xf]
      %v2473 = vld [vmem:[%s47 + $0x34] sm:$0xf]
      %v2474 = vld [vmem:[%s47 + $0x38] sm:$0xf]
      %v2475 = vld [vmem:[%s47 + $0x3c] sm:$0xf]
      %v2476 = vld [vmem:[%s47 + $0x40] sm:$0xf]
      %v2477 = vld [vmem:[%s47 + $0x44] sm:$0xf]
      %v2478 = vld [vmem:[%s47 + $0x48] sm:$0xf]
      %v2479 = vld [vmem:[%s47 + $0x4c] sm:$0xf]
      %v2480 = vld [vmem:[%s49] sm:$0x1]
      %v2482 = vlaneseq
      %v2483 = vshrl.u32 %v2482, 7
      %v2484 = vsub.s32 0, %v2483
      %v2485 = vrot.slane %v2480, %v2484
      %v2507 = vunpack.c.l.b16 %v2460
      %v2508 = vunpack.c.l.b16 %v2461
      %v2509 = vunpack.c.l.b16 %v2462
      %v2510 = vunpack.c.l.b16 %v2463
      %v2511 = vunpack.c.l.b16 %v2464
      %v2512 = vunpack.c.l.b16 %v2465
      %v2513 = vunpack.c.l.b16 %v2466
      %v2514 = vunpack.c.l.b16 %v2467
      %v2515 = vunpack.c.l.b16 %v2468
      %v2516 = vunpack.c.l.b16 %v2469
      %v2517 = vunpack.c.l.b16 %v2470
      %v2518 = vunpack.c.l.b16 %v2471
      %v2519 = vunpack.c.l.b16 %v2472
      %v2520 = vunpack.c.l.b16 %v2473
      %v2521 = vunpack.c.l.b16 %v2474
      %v2522 = vunpack.c.l.b16 %v2475
      %v2523 = vunpack.c.l.b16 %v2476
      %v2524 = vunpack.c.l.b16 %v2477
      %v2525 = vunpack.c.l.b16 %v2478
      %v2526 = vunpack.c.l.b16 %v2479
      %v2527 = vpack.c.b16 %v2508, %v2507
      %v2528 = vpack.c.b16 %v2510, %v2509
      %v2529 = vpack.c.b16 %v2512, %v2511
      %v2530 = vpack.c.b16 %v2514, %v2513
      %v2531 = vpack.c.b16 %v2516, %v2515
      %v2532 = vpack.c.b16 %v2518, %v2517
      %v2533 = vpack.c.b16 %v2520, %v2519
      %v2534 = vpack.c.b16 %v2522, %v2521
      %v2535 = vpack.c.b16 %v2524, %v2523
      %v2536 = vpack.c.b16 %v2526, %v2525
      %v2548 = vsel %vm1199, %v2459, 0
      %2550 = vmatprep.subr.bf16.mxu0 0
      %2551 = vmatpush1.bf16.msra.mxu0 %v2534
      %2552 = vmatprep.subr.bf16.mxu0 0
      %2553 = vmatpush1.bf16.msra.mxu0 %v2533
      %2554 = vmatprep.subr.bf16.mxu0 0
      %2555 = vmatpush1.bf16.msra.mxu0 %v2532
      %2556 = vmatprep.subr.bf16.mxu0 0
      %2557 = vmatpush1.bf16.msra.mxu0 %v2531
      %2558 = vmatprep.subr.bf16.mxu0 0
      %2559 = vmatpush1.bf16.msra.mxu0 %v2530
      %2560 = vmatprep.subr.bf16.mxu0 0
      %2561 = vmatpush1.bf16.msra.mxu0 %v2529
      %2562 = vmatprep.subr.bf16.mxu0 0
      %2563 = vmatpush1.bf16.msra.mxu0 %v2528
      %2564 = vmatprep.subr.bf16.mxu0 0
      %2565 = vmatpush1.bf16.msra.mxu0 %v2527
      %2566 = vmatprep.subr.bf16.mxu0 0
      %2567 = vmatpush2.bf16.msra.mxu0 0
      %2568 = vmatprep.subr.bf16.mxu0 0
      %2569 = vmatpush2.bf16.msra.mxu0 0
      %2570 = vmatprep.subr.bf16.mxu0 0
      %2571 = vmatpush2.bf16.msra.mxu0 0
      %2572 = vmatprep.subr.bf16.mxu0 0
      %2573 = vmatpush2.bf16.msra.mxu0 0
      %2574 = vmatprep.subr.bf16.mxu0 0
      %2575 = vmatpush2.bf16.msra.mxu0 0
      %2576 = vmatprep.subr.bf16.mxu0 0
      %2577 = vmatpush2.bf16.msra.mxu0 0
      %2578 = vmatprep.subr.bf16.mxu0 0
      %2579 = vmatpush2.bf16.msra.mxu0 %v2536
      %2580 = vmatprep.subr.bf16.mxu0 0
      %2581 = vmatpush2.bf16.msra.mxu0 %v2535
      %2582 = vmatprep.mubr.bf16.mxu0 %v2548
      %2583 = vmatmul.mubr.bf16.gmra.mxu0 %v2458
      %v2584 = vpop.f32.mrf.mxu0
      %v2585 = vadd.f32 %v2485, %v2584
      %v2586 = vpop.f32.mrf.mxu0
      %v2587 = vpop.f32.mrf.mxu0
      %v2588 = vadd.f32 %v2485, %v2587
      %v2589 = vpop.f32.mrf.mxu0
      %2590 = vdwg.mxu0
      %v2591 = vsel %vm1199, %v2585, 0.0
      %v2592 = vsel %vm1938, %v2588, 0.0
      %v2593 = vadd.f32 %v2591, %v2592
      %2594 = vadd.xlane.f32.xlu0 %v2593
      %v2595 = vpop.xlane.xlu0 %2594
      %v2596 = vrot.slane %v2595, 4
      %v2597 = vadd.f32 %v2595, %v2596
      %v2598 = vrot.slane %v2597, 2
      %v2599 = vadd.f32 %v2597, %v2598
      %v2600 = vrot.slane %v2599, 1
      %v2601 = vadd.f32 %v2599, %v2600
      %s2602 = vtos %v2601
      %v2603 = vstv %s2602
      %v2604 = vmul.f32 %v2603, %v1951
      %v2605 = vsub.f32 %v2585, %v2604
      %v2606 = vsub.f32 %v2588, %v2604
      %v2607 = vmul.f32 %v2605, %v2605
      %v2608 = vmul.f32 %v2606, %v2606
      %v2609 = vsel %vm1199, %v2607, 0.0
      %v2610 = vsel %vm1938, %v2608, 0.0
      %v2611 = vadd.f32 %v2609, %v2610
      %2612 = vadd.xlane.f32.xlu0 %v2611
      %v2613 = vpop.xlane.xlu0 %2612
      %v2614 = vrot.slane %v2613, 4
      %v2615 = vadd.f32 %v2613, %v2614
      %v2616 = vrot.slane %v2615, 2
      %v2617 = vadd.f32 %v2615, %v2616
      %v2618 = vrot.slane %v2617, 1
      %v2619 = vadd.f32 %v2617, %v2618
      %s2620 = vtos %v2619
      %v2621 = vstv %s2620
      %v2622 = vmul.f32 %v2621, %v1951
      %v2623 = vadd.f32 %v2622, 1e-05
      %v2624 = vrsqrt.pop %v2623
      %v2625 = vmul.f32 %v2605, %v2624
      %v2626 = vmul.f32 %v2606, %v2624
      %v2627 = vld [vmem:[%s51] sm:$0x1]
      %v2629 = vlaneseq
      %v2630 = vshrl.u32 %v2629, 7
      %v2631 = vsub.s32 0, %v2630
      %v2632 = vrot.slane %v2627, %v2631
      %v2634 = vmul.f32 %v2625, %v2632
      %v2635 = vmul.f32 %v2626, %v2632
      %v2636 = vld [vmem:[%s53] sm:$0x1]
      %v2638 = vlaneseq
      %v2639 = vshrl.u32 %v2638, 7
      %v2640 = vsub.s32 0, %v2639
      %v2641 = vrot.slane %v2636, %v2640
      %v2643 = vadd.f32 %v2634, %v2641
      %v2644 = vadd.f32 %v2635, %v2641
      %v2645 = vmax.f32 %v2643, 0.0
      %v2646 = vmax.f32 %v2644, 0.0
      %v2647 = vadd.f32 %v2645, %v2407
      %v2648 = vadd.f32 %v2646, %v2408
      %v2649 = vmul.f32 %v2647, 0.70710677
      %v2650 = vmul.f32 %v2648, 0.70710677
      %v2651 = vpack.c.bf16 %v2650, %v2649
      %v2652 = vld [vmem:[%s55] sm:$0xf]
      %v2653 = vld [vmem:[%s55 + $0x4] sm:$0xf]
      %v2654 = vld [vmem:[%s55 + $0x8] sm:$0xf]
      %v2655 = vld [vmem:[%s55 + $0xc] sm:$0xf]
      %v2656 = vld [vmem:[%s57] sm:$0x1]
      %v2658 = vlaneseq
      %v2659 = vshrl.u32 %v2658, 7
      %v2660 = vsub.s32 0, %v2659
      %v2661 = vrot.slane %v2656, %v2660
      %v2667 = vunpack.c.l.b16 %v2652
      %v2668 = vunpack.c.l.b16 %v2653
      %v2669 = vunpack.c.l.b16 %v2654
      %v2670 = vunpack.c.l.b16 %v2655
      %v2671 = vpack.c.b16 %v2668, %v2667
      %v2672 = vpack.c.b16 %v2670, %v2669
      %v2676 = vsel %vm1199, %v2651, 0
      %2678 = vmatprep.subr.bf16.mxu0 0
      %2679 = vmatpush1.bf16.msra.mxu0 0
      %2680 = vmatprep.subr.bf16.mxu0 0
      %2681 = vmatpush1.bf16.msra.mxu0 0
      %2682 = vmatprep.subr.bf16.mxu0 0
      %2683 = vmatpush1.bf16.msra.mxu0 0
      %2684 = vmatprep.subr.bf16.mxu0 0
      %2685 = vmatpush1.bf16.msra.mxu0 0
      %2686 = vmatprep.subr.bf16.mxu0 0
      %2687 = vmatpush1.bf16.msra.mxu0 0
      %2688 = vmatprep.subr.bf16.mxu0 0
      %2689 = vmatpush1.bf16.msra.mxu0 0
      %2690 = vmatprep.subr.bf16.mxu0 0
      %2691 = vmatpush1.bf16.msra.mxu0 %v2672
      %2692 = vmatprep.subr.bf16.mxu0 0
      %2693 = vmatpush1.bf16.msra.mxu0 %v2671
      %2694 = vmatprep.subr.bf16.mxu0 0
      %2695 = vmatpush2.bf16.msra.mxu0 0
      %2696 = vmatprep.subr.bf16.mxu0 0
      %2697 = vmatpush2.bf16.msra.mxu0 0
      %2698 = vmatprep.subr.bf16.mxu0 0
      %2699 = vmatpush2.bf16.msra.mxu0 0
      %2700 = vmatprep.subr.bf16.mxu0 0
      %2701 = vmatpush2.bf16.msra.mxu0 0
      %2702 = vmatprep.subr.bf16.mxu0 0
      %2703 = vmatpush2.bf16.msra.mxu0 0
      %2704 = vmatprep.subr.bf16.mxu0 0
      %2705 = vmatpush2.bf16.msra.mxu0 0
      %2706 = vmatprep.subr.bf16.mxu0 0
      %2707 = vmatpush2.bf16.msra.mxu0 0
      %2708 = vmatprep.subr.bf16.mxu0 0
      %2709 = vmatpush2.bf16.msra.mxu0 0
      %2710 = vmatprep.mubr.bf16.mxu0 0
      %2711 = vmatmul.mubr.bf16.gmra.mxu0 %v2676
      %v2712 = vpop.f32.mrf.mxu0
      %v2713 = vadd.f32 %v2661, %v2712
      %v2714 = vpop.f32.mrf.mxu0
      %v2715 = vpop.f32.mrf.mxu0
      %v2716 = vadd.f32 %v2661, %v2715
      %v2717 = vpop.f32.mrf.mxu0
      %2718 = vdwg.mxu0
      %2721 = vrot.lane.b32.xlu0 %v2713, 32
      %v2722 = vpop.permute.xlu0 %2721
      %2723 = vrot.lane.b32.xlu0 %v2716, 32
      %v2724 = vpop.permute.xlu0 %2723
      %v2727 = vsel %vm1199, %v1830, %v2722
      %v2728 = vsel %vm1199, %v1831, %v2724
      %2729 = vst [vmem:[%s902] sm:$0xff] %v2727
      %2730 = vst [vmem:[%s902 + $0x8] sm:$0x1f] %v2728
      %p2731 = scmp.lt.s32.totalorder %s70, 1
      %s2732 = scalar_select %p2731, %s70, 1
      %s2733 = smul.addr %s2732, 2
      %s2734 = smul.addr %s2733, 8
      %s2735 = scalar_lea.vmem %s59, %s2734
      // Predicated region
      $region137: #{cpc_forward.2} parent=135 // pred_check
        %p2736 = pneg %p702
      $region138: #{cpc_forward.2} parent=135 // pred_check_branch
        %2738 = sbr.rel (%p2736) target = $region140
      $region139: #{cpc_forward.2} parent=135 // pred_region
        _
      $region140: #{cpc_forward.2} parent=135 // pred_fallthru
        _
    $region136: #{cpc_forward.2} parent=5 // pred_fallthru
      _
    %p2739 = scmp.le.s32.totalorder 2, %s65
    // Predicated region
    $region141: #{cpc_forward.2} parent=5 // pred_check
      %p2740 = pneg %p2739
    $region142: #{cpc_forward.2} parent=5 // pred_check_branch
      %2742 = sbr.rel (%p2740) target = $region144
    $region143: #{cpc_forward.2} parent=5 // pred_region
      %s2743 = ssub.s32 %s65, 2
      // Predicated region
      $region145: #{cpc_forward.2} parent=143 // pred_check
        %p2744 = pneg %p708
      $region146: #{cpc_forward.2} parent=143 // pred_check_branch
        %2746 = sbr.rel (%p2744) target = $region148
      $region147: #{cpc_forward.2} parent=143 // pred_region
        %p2747 = scmp.lt.s32.totalorder %s71, 1
        %s2748 = scalar_select %p2747, %s71, 1
        %s2749 = smul.addr %s2748, 2
        %s2750 = smul.addr %s2749, 8
        %s2751 = scalar_lea.vmem %s59, %s2750
      $region148: #{cpc_forward.2} parent=143 // pred_fallthru
        _
    $region144: #{cpc_forward.2} parent=5 // pred_fallthru
      _
  $region6: #{cpc_forward.2} parent=0 // loop_footer
    %s69 = sadd.s32 1, %s65
  $region7: #{cpc_forward.2} parent=0 // loop_footer_branch
    %64 = sbr.rel target = $region3
  $region8: #{cpc_forward.2} parent=0 // loop_exit
    _

</llo_original>
